<compile_context>
chip_gen: v6e
topology: v6e:2x2x1
jax: 0.10.0
libtpu: 0.0.40
codegen_flags: <defaults>
</compile_context>

<pallas_src>
import functools

import numpy as np
import jax
import jax.numpy as jnp
from jax.experimental import pallas as pl
from jax.experimental.pallas import tpu as pltpu


# --------------------------------------------------------------------------
# Host-side constant builders (numpy, static per input shape)
# --------------------------------------------------------------------------
def _bilinear_matrix(out_size, in_size):
    """PyTorch F.interpolate(mode='bilinear', align_corners=False) as a matrix."""
    R = np.zeros((out_size, in_size), np.float32)
    if in_size == 1:
        R[:, 0] = 1.0
        return R
    scale = in_size / out_size
    for o in range(out_size):
        src = (o + 0.5) * scale - 0.5
        if src < 0.0:
            src = 0.0
        i0 = min(int(np.floor(src)), in_size - 1)
        i1 = min(i0 + 1, in_size - 1)
        lam = src - i0
        R[o, i0] += 1.0 - lam
        R[o, i1] += lam
    return R


def _pool_mats(H, W, k, s):
    """Flattened-spatial right-multiplication matrices implementing MaxPool2d(k, s).

    With x_flat of shape (rows, H*W) (row-major over (H, W)):
        pooled_flat = max_ki [ (max_kj x_flat @ MW[kj]) @ MH[ki] ]   -> (rows, Ho*Wo)
    Uses flat(A X B) = flat(X) @ kron(A.T, B) for row-major flattening.
    """
    Ho = (H - k) // s + 1
    Wo = (W - k) // s + 1
    I_H = np.eye(H, dtype=np.float32)
    I_Wo = np.eye(Wo, dtype=np.float32)
    MW = np.zeros((k, H * W, H * Wo), np.float32)
    MH = np.zeros((k, H * Wo, Ho * Wo), np.float32)
    for kk in range(k):
        Sw = np.zeros((W, Wo), np.float32)            # column selection w == s*j + kk
        for j in range(Wo):
            Sw[s * j + kk, j] = 1.0
        Sh = np.zeros((Ho, H), np.float32)            # row selection    h == s*i + kk
        for i in range(Ho):
            Sh[i, s * i + kk] = 1.0
        MW[kk] = np.kron(I_H, Sw)
        MH[kk] = np.kron(Sh.T, I_Wo)
    return MW, MH, Ho, Wo


def _pool_resize_mats(H, W, k, s, Hf, Wf):
    MW, MH, Ho, Wo = _pool_mats(H, W, k, s)
    Rh = _bilinear_matrix(Hf, Ho)
    Rw = _bilinear_matrix(Wf, Wo)
    MR = np.kron(Rh.T, Rw.T).astype(np.float32)       # flat(Rh X Rw^T) = flat(X) @ MR
    return MW, MH, MR


def _conv3_shift_mats(Hf, Wf):
    """Constants turning (Conv1x1 pad=1 -> ReLU -> Conv3x3 pad=1) into matmuls.

    G[t]  : (Hf*Wf, H2*W2)  gathers the interior ReLU(conv1x1) values for tap t=(di,dj)
    r[t]  : (H2*W2,)        mask of positions where tap t hits the conv1x1 pad ring
                            (whose post-ReLU value is relu(b1[c]))
    """
    H2, W2 = Hf + 2, Wf + 2          # conv1x1(pad=1) output / conv3x3 output size
    Hp, Wp = Hf + 4, Wf + 4          # conv3x3 zero-padded input size
    P1, P2, Pp = Hf * Wf, H2 * W2, Hp * Wp
    E = np.zeros((P1, Pp), np.float32)               # interior (i,j) -> padded (i+2, j+2)
    for i in range(Hf):
        for j in range(Wf):
            E[i * Wf + j, (i + 2) * Wp + (j + 2)] = 1.0
    ring = np.zeros((Pp,), np.float32)               # inner ring of the padded map
    for pi in range(Hp):
        for pj in range(Wp):
            outer = pi in (0, Hp - 1) or pj in (0, Wp - 1)
            inner = (not outer) and (pi in (1, Hp - 2) or pj in (1, Wp - 2))
            if inner:
                ring[pi * Wp + pj] = 1.0
    G = np.zeros((9, P1, P2), np.float32)
    r = np.zeros((9, P2), np.float32)
    for t in range(9):
        di, dj = t // 3, t % 3
        S = np.zeros((Pp, P2), np.float32)           # padded (a+di, b+dj) -> output (a, b)
        for a in range(H2):
            for b in range(W2):
                S[(a + di) * Wp + (b + dj), a * W2 + b] = 1.0
        G[t] = E @ S
        r[t] = ring @ S
    return G, r


def _choose_nb(N, C, row_target=256):
    """Images per program: keep nb*C a multiple of 8 and <= row_target, prefer >=2 grid
    steps (pipelining on all chips, TensorCore sharding on v7x), then the largest nb."""
    candidates = [nb for nb in range(1, N + 1)
                  if N % nb == 0 and (nb * C) % 8 == 0 and nb * C <= row_target]
    if not candidates:
        return N                      # full-extent block (sublane dim == full array dim)
    multi = [nb for nb in candidates if N // nb >= 2]
    return max(multi) if multi else max(candidates)


# --------------------------------------------------------------------------
# Fused Pallas kernel: pool+resize (both branches) -> convs -> scoring -> selection
# --------------------------------------------------------------------------
def _pair_kernel(xa_ref, xb_ref,
                 mwa_ref, mha_ref, mra_ref,
                 mwb_ref, mhb_ref, mrb_ref,
                 g_ref, w1bd_ref, b1_ref, w2bd_ref, b2eff_ref, ws_ref, agg_ref,
                 o_ref, *, nbC, inv_p2):
    f32 = jnp.float32
    bf16 = jnp.bfloat16

    def pool_resize(x_ref, mw_ref, mh_ref, mr_ref):
        # x: (nbC, H*W) bf16 -> (nbC, P1) f32; all spatial work as lane-dim MXU matmuls,
        # batched over every image and channel in the block at once.
        x = x_ref[...]
        acc_w = jnp.dot(x, mw_ref[0], preferred_element_type=f32)
        for kk in range(1, mw_ref.shape[0]):
            acc_w = jnp.maximum(acc_w, jnp.dot(x, mw_ref[kk], preferred_element_type=f32))
        acc_w = acc_w.astype(bf16)                               # exact: pure selection
        acc_h = jnp.dot(acc_w, mh_ref[0], preferred_element_type=f32)
        for kk in range(1, mh_ref.shape[0]):
            acc_h = jnp.maximum(acc_h, jnp.dot(acc_w, mh_ref[kk], preferred_element_type=f32))
        acc_h = acc_h.astype(bf16)                               # exact: pure selection
        return jnp.dot(acc_h, mr_ref[...], preferred_element_type=f32)

    xr_a = pool_resize(xa_ref, mwa_ref, mha_ref, mra_ref)        # pool1 branch (nbC, P1)
    xr_b = pool_resize(xb_ref, mwb_ref, mhb_ref, mrb_ref)        # pool2 branch (nbC, P1)

    w1bd = w1bd_ref[...]        # (nbC, nbC)    kron(I_nb, Conv1x1.weight)        bf16
    b1r = b1_ref[...]           # (nbC, 1)      tiled Conv1x1.bias                f32
    w2bd = w2bd_ref[...]        # (9*nbC, nbC)  per-tap kron(I_nb, Conv3x3 tap)   bf16
    b2r = b2eff_ref[...]        # (nbC, P2pad)  conv3 bias + pad-ring fold        f32
    wsr = ws_ref[...]           # (nbC, 1)      tiled ConvScoring weight          f32
    agg = agg_ref[...]          # (nbC, nbC)    kron(I_nb, ones(C,C)) per-image sum/bcast

    def conv_and_score(xr):     # xr: (nbC, P1) -> features (nbC, P2pad), per-row score
        xr16 = xr.astype(bf16)
        t1 = jnp.dot(w1bd, xr16, preferred_element_type=f32) + b1r     # Conv1x1 (interior)
        a = jnp.maximum(t1, 0.0).astype(bf16)                          # ReLU
        v = jnp.dot(w2bd, a, preferred_element_type=f32).astype(bf16)  # 9 taps' channel mix
        y = b2r
        for t in range(9):                                             # batched tap gathers
            y = y + jnp.dot(v[t * nbC:(t + 1) * nbC, :], g_ref[t],
                            preferred_element_type=f32)                # (nbC, P2pad)
        # ConvScoring + global avg pool: per-row weighted lane sum (XLU), then per-image
        # aggregation broadcast back to that image's C rows via one tiny matmul.
        srow = jnp.sum(y * wsr, axis=1, keepdims=True)                 # (nbC, 1)
        simg = jnp.dot(agg, srow, preferred_element_type=f32)          # (nbC, 1)
        return y, simg

    ya, sa = conv_and_score(xr_a)
    yb, sb = conv_and_score(xr_b)
    # soft_selection: softmax over the 2 scale scores, weighted sum of features.
    d = (sb - sa) * inv_p2
    alpha = pl.reciprocal(1.0 + jnp.exp(d), approx=True)               # EUP exp + recip
    o_ref[...] = (alpha * ya + (1.0 - alpha) * yb).astype(o_ref.dtype)


@functools.lru_cache(maxsize=None)
def _get_pair_fn(N, C, Ha, Wa, Hb, Wb, Hf, Wf):
    """Memoized per-shape builder: host constants + device uploads + jitted forward."""
    H2, W2 = Hf + 2, Wf + 2
    P1, P2 = Hf * Wf, H2 * W2
    P2pad = ((P2 + 127) // 128) * 128            # lane-dense output stores
    nb = _choose_nb(N, C)
    nbC = nb * C

    MWa, MHa, MRa = _pool_resize_mats(Ha, Wa, 3, 2, Hf, Wf)      # pool1 = MaxPool2d(3, 2)
    MWb, MHb, MRb = _pool_resize_mats(Hb, Wb, 4, 3, Hf, Wf)      # pool2 = MaxPool2d(4, 3)
    G, ring_r = _conv3_shift_mats(Hf, Wf)
    Gpad = np.zeros((9, P1, P2pad), np.float32)
    Gpad[..., :P2] = G
    agg = np.kron(np.eye(nb, dtype=np.float32), np.ones((C, C), np.float32))

    # One-time device uploads (bf16 for MXU inputs; 0/1 selectors are exact in bf16).
    MWa_d = jnp.asarray(MWa, jnp.bfloat16)
    MHa_d = jnp.asarray(MHa, jnp.bfloat16)
    MRa_d = jnp.asarray(MRa, jnp.bfloat16)
    MWb_d = jnp.asarray(MWb, jnp.bfloat16)
    MHb_d = jnp.asarray(MHb, jnp.bfloat16)
    MRb_d = jnp.asarray(MRb, jnp.bfloat16)
    Gpad_d = jnp.asarray(Gpad, jnp.bfloat16)
    ring_d = jnp.asarray(ring_r, jnp.float32)
    agg_d = jnp.asarray(agg, jnp.float32)

    kernel = functools.partial(_pair_kernel, nbC=nbC, inv_p2=1.0 / float(P2))

    def fwd(xa, xb, w1, b1, w2, b2, ws):
        xa2 = xa.reshape(N * C, Ha * Wa).astype(jnp.bfloat16)
        xb2 = xb.reshape(N * C, Hb * Wb).astype(jnp.bfloat16)

        # Block-diagonal (per-image) conv weights: one matmul over all nb images at once.
        I_nb = jnp.eye(nb, dtype=jnp.float32)
        w1bd = jnp.kron(I_nb, w1).astype(jnp.bfloat16)                       # (nbC, nbC)
        w2t = jnp.transpose(w2, (2, 3, 0, 1)).reshape(9, C, C)               # [t, o, c]
        w2bd = jnp.concatenate([jnp.kron(I_nb, w2t[t]) for t in range(9)],
                               axis=0).astype(jnp.bfloat16)                  # (9*nbC, nbC)
        relu_b1 = jnp.maximum(b1, 0.0)
        ring_taps = jnp.einsum('toc,c->to', w2t, relu_b1)                    # (9, C)
        b2_eff = b2[:, None] + jnp.einsum('to,tp->op', ring_taps, ring_d)    # (C, P2)
        b2_pad = jnp.pad(b2_eff, ((0, 0), (0, P2pad - P2)))
        b2_rows = jnp.tile(b2_pad, (nb, 1)).astype(jnp.float32)              # (nbC, P2pad)
        b1_rows = jnp.tile(b1.reshape(C, 1), (nb, 1)).astype(jnp.float32)    # (nbC, 1)
        ws_rows = jnp.tile(ws.reshape(C, 1), (nb, 1)).astype(jnp.float32)    # (nbC, 1)

        out_flat = pl.pallas_call(
            kernel,
            out_shape=jax.ShapeDtypeStruct((N * C, P2pad), jnp.float32),
            grid_spec=pltpu.PrefetchScalarGridSpec(
                num_scalar_prefetch=0,
                grid=(N // nb,),
                in_specs=[
                    pl.BlockSpec((nbC, Ha * Wa), lambda n: (n, 0)),
                    pl.BlockSpec((nbC, Hb * Wb), lambda n: (n, 0)),
                    pl.BlockSpec(MWa_d.shape, lambda n: (0, 0, 0)),
                    pl.BlockSpec(MHa_d.shape, lambda n: (0, 0, 0)),
                    pl.BlockSpec(MRa_d.shape, lambda n: (0, 0)),
                    pl.BlockSpec(MWb_d.shape, lambda n: (0, 0, 0)),
                    pl.BlockSpec(MHb_d.shape, lambda n: (0, 0, 0)),
                    pl.BlockSpec(MRb_d.shape, lambda n: (0, 0)),
                    pl.BlockSpec(Gpad_d.shape, lambda n: (0, 0, 0)),
                    pl.BlockSpec((nbC, nbC), lambda n: (0, 0)),
                    pl.BlockSpec((nbC, 1), lambda n: (0, 0)),
                    pl.BlockSpec((9 * nbC, nbC), lambda n: (0, 0)),
                    pl.BlockSpec((nbC, P2pad), lambda n: (0, 0)),
                    pl.BlockSpec((nbC, 1), lambda n: (0, 0)),
                    pl.BlockSpec((nbC, nbC), lambda n: (0, 0)),
                ],
                out_specs=pl.BlockSpec((nbC, P2pad), lambda n: (n, 0)),
            ),
            compiler_params=pltpu.CompilerParams(
                dimension_semantics=("parallel",),
                vmem_limit_bytes=32 * 1024 * 1024),
        )(xa2, xb2, MWa_d, MHa_d, MRa_d, MWb_d, MHb_d, MRb_d, Gpad_d,
          w1bd, b1_rows, w2bd, b2_rows, ws_rows, agg_d)
        return out_flat[:, :P2].reshape(N, C, H2, W2)

    return jax.jit(fwd)


def _pair_forward(xa, xb, params, final_size):
    N, C, Ha, Wa = xa.shape
    _, _, Hb, Wb = xb.shape
    Hf, Wf = final_size
    fwd = _get_pair_fn(N, C, Ha, Wa, Hb, Wb, Hf, Wf)
    w1, b1, w2, b2, ws = params
    return fwd(xa, xb, w1, b1, w2, b2, ws)


# --------------------------------------------------------------------------
# Single-level path: MaxPool2d(4, 3) only (scoring output is discarded upstream)
# --------------------------------------------------------------------------
def _pool_only_kernel(x_ref, mw_ref, mh_ref, o_ref):
    f32 = jnp.float32
    x = x_ref[...]
    acc_w = jnp.dot(x, mw_ref[0], preferred_element_type=f32)
    for kj in range(1, mw_ref.shape[0]):
        acc_w = jnp.maximum(acc_w, jnp.dot(x, mw_ref[kj], preferred_element_type=f32))
    acc_h = jnp.dot(acc_w, mh_ref[0], preferred_element_type=f32)
    for ki in range(1, mh_ref.shape[0]):
        acc_h = jnp.maximum(acc_h, jnp.dot(acc_w, mh_ref[ki], preferred_element_type=f32))
    o_ref[...] = acc_h.astype(o_ref.dtype)


@functools.lru_cache(maxsize=None)
def _get_pool_fn(N, C, H, W, k, s):
    MW, MH, Ho, Wo = _pool_mats(H, W, k, s)
    MW_d = jnp.asarray(MW)
    MH_d = jnp.asarray(MH)
    nb = _choose_nb(N, C)
    nbC = nb * C

    def fwd(x):
        out = pl.pallas_call(
            _pool_only_kernel,
            out_shape=jax.ShapeDtypeStruct((N * C, Ho * Wo), jnp.float32),
            grid_spec=pltpu.PrefetchScalarGridSpec(
                num_scalar_prefetch=0,
                grid=(N // nb,),
                in_specs=[
                    pl.BlockSpec((nbC, H * W), lambda n: (n, 0)),
                    pl.BlockSpec(MW_d.shape, lambda n: (0, 0, 0)),
                    pl.BlockSpec(MH_d.shape, lambda n: (0, 0, 0)),
                ],
                out_specs=pl.BlockSpec((nbC, Ho * Wo), lambda n: (n, 0)),
            ),
            compiler_params=pltpu.CompilerParams(
                dimension_semantics=("parallel",),
                vmem_limit_bytes=32 * 1024 * 1024),
        )(x.reshape(N * C, H * W), MW_d, MH_d)
        return out.reshape(N, C, Ho, Wo)

    return jax.jit(fwd)


def _maxpool_forward(x, k, s):
    N, C, H, W = x.shape
    return _get_pool_fn(N, C, H, W, k, s)(x)


# --------------------------------------------------------------------------
# Module wrapper: C_scoring2.forward (global_scale_pool=False, skip=1)
# --------------------------------------------------------------------------
def init_params(key, C):
    k1, k2, k3, k4, k5 = jax.random.split(key, 5)
    w1 = jax.random.normal(k1, (C, C), jnp.float32) * 0.3            # Conv2d(C,C,1).weight
    b1 = jax.random.normal(k2, (C,), jnp.float32) * 0.1              # Conv2d(C,C,1).bias
    w2 = jax.random.normal(k3, (C, C, 3, 3), jnp.float32) * 0.15     # Conv2d(C,C,3).weight
    b2 = jax.random.normal(k4, (C,), jnp.float32) * 0.1              # Conv2d(C,C,3).bias
    ws = jax.random.normal(k5, (C,), jnp.float32) * 0.5              # ConvScoring 1x1 weight
    return (w1, b1, w2, b2, ws)


def c_scoring2_forward(x_pyramid, params, skip=1):
    """x_pyramid: list of (N, C, H_l, W_l) float32 arrays (NCHW)."""
    if len(x_pyramid) == 1:
        return [_maxpool_forward(x_pyramid[0], 4, 3)]
    mid = x_pyramid[len(x_pyramid) // 2]
    Hf = (mid.shape[2] - 4) // 3 + 1        # pool2 = MaxPool2d(4, 3) output of middle level
    Wf = (mid.shape[3] - 4) // 3 + 1
    out = []
    for i in range(0, len(x_pyramid) - 1, skip):
        out.append(_pair_forward(x_pyramid[i], x_pyramid[i + 1], params, (Hf, Wf)))
    return out


if __name__ == "__main__":
    key = jax.random.PRNGKey(0)
    N, C = 2, 4
    sizes = [18, 16, 14]
    keys = jax.random.split(key, len(sizes) + 1)
    x_pyramid = [
        jax.random.normal(keys[i], (N, C, s, s), jnp.float32)
        for i, s in enumerate(sizes)
    ]
    params = init_params(keys[-1], C)

    outs = c_scoring2_forward(x_pyramid, params)
    for o in outs:
        jax.block_until_ready(o)
    # Second call exercises the memoized builders / cached jit executables.
    outs2 = c_scoring2_forward(x_pyramid, params)
    for o in outs2:
        jax.block_until_ready(o)
    # outs is a list of (N, C, Hf+2, Wf+2) arrays, here 2 x (2, 4, 7, 7)
    print("KERNEL_OK")
</pallas_src>

<mosaic_0001>
module attributes {stable_mosaic.version = 11 : i64} {
  func.func @_pair_kernel(%arg0: i32, %arg1: memref<8x324xbf16, #tpu.memory_space<vmem>>, %arg2: memref<8x256xbf16, #tpu.memory_space<vmem>>, %arg3: memref<3x324x144xbf16, #tpu.memory_space<vmem>>, %arg4: memref<3x144x64xbf16, #tpu.memory_space<vmem>>, %arg5: memref<64x25xbf16, #tpu.memory_space<vmem>>, %arg6: memref<4x256x80xbf16, #tpu.memory_space<vmem>>, %arg7: memref<4x80x25xbf16, #tpu.memory_space<vmem>>, %arg8: memref<25x25xbf16, #tpu.memory_space<vmem>>, %arg9: memref<9x25x128xbf16, #tpu.memory_space<vmem>>, %arg10: memref<8x8xbf16, #tpu.memory_space<vmem>>, %arg11: memref<8x1xf32, #tpu.memory_space<vmem>>, %arg12: memref<72x8xbf16, #tpu.memory_space<vmem>>, %arg13: memref<8x128xf32, #tpu.memory_space<vmem>>, %arg14: memref<8x1xf32, #tpu.memory_space<vmem>>, %arg15: memref<8x8xf32, #tpu.memory_space<vmem>>, %arg16: memref<8x128xf32, #tpu.memory_space<vmem>>) attributes {dimension_semantics = [#tpu.dimension_semantics<parallel>], iteration_bounds = array<i64: 1>, scalar_prefetch = 0 : i64, scratch_operands = 0 : i64, tpu.core_type = #tpu.core_type<tc>, window_params = [{transform_indices = @transform_0, window_bounds = array<i64: 8, 324>}, {transform_indices = @transform_1, window_bounds = array<i64: 8, 256>}, {pipeline_mode = #tpu.pipeline_mode<synchronous>, transform_indices = @transform_2, window_bounds = array<i64: 3, 324, 144>}, {pipeline_mode = #tpu.pipeline_mode<synchronous>, transform_indices = @transform_3, window_bounds = array<i64: 3, 144, 64>}, {pipeline_mode = #tpu.pipeline_mode<synchronous>, transform_indices = @transform_4, window_bounds = array<i64: 64, 25>}, {pipeline_mode = #tpu.pipeline_mode<synchronous>, transform_indices = @transform_5, window_bounds = array<i64: 4, 256, 80>}, {pipeline_mode = #tpu.pipeline_mode<synchronous>, transform_indices = @transform_6, window_bounds = array<i64: 4, 80, 25>}, {pipeline_mode = #tpu.pipeline_mode<synchronous>, transform_indices = @transform_7, window_bounds = array<i64: 25, 25>}, {pipeline_mode = #tpu.pipeline_mode<synchronous>, transform_indices = @transform_8, window_bounds = array<i64: 9, 25, 128>}, {pipeline_mode = #tpu.pipeline_mode<synchronous>, transform_indices = @transform_9, window_bounds = array<i64: 8, 8>}, {pipeline_mode = #tpu.pipeline_mode<synchronous>, transform_indices = @transform_10, window_bounds = array<i64: 8, 1>}, {pipeline_mode = #tpu.pipeline_mode<synchronous>, transform_indices = @transform_11, window_bounds = array<i64: 72, 8>}, {pipeline_mode = #tpu.pipeline_mode<synchronous>, transform_indices = @transform_12, window_bounds = array<i64: 8, 128>}, {pipeline_mode = #tpu.pipeline_mode<synchronous>, transform_indices = @transform_13, window_bounds = array<i64: 8, 1>}, {pipeline_mode = #tpu.pipeline_mode<synchronous>, transform_indices = @transform_14, window_bounds = array<i64: 8, 8>}, {transform_indices = @transform_15, window_bounds = array<i64: 8, 128>}]} {
    %c0 = arith.constant 0 : index
    %c0_0 = arith.constant 0 : index
    %0 = vector.load %arg1[%c0, %c0_0] : memref<8x324xbf16, #tpu.memory_space<vmem>>, vector<8x324xbf16>
    %c0_1 = arith.constant 0 : index
    %c0_2 = arith.constant 0 : index
    %c0_3 = arith.constant 0 : index
    %1 = vector.load %arg3[%c0_1, %c0_2, %c0_3] : memref<3x324x144xbf16, #tpu.memory_space<vmem>>, vector<1x324x144xbf16>
    %2 = vector.shape_cast %1 : vector<1x324x144xbf16> to vector<324x144xbf16>
    %cst = arith.constant dense<0.000000e+00> : vector<8x144xf32>
    %3 = tpu.matmul %0, %2, %cst {dimension_numbers = #tpu.dot_dimension_numbers<[1], [0], [0], [1], [0, 0, 1, 1], [], []>} : vector<8x324xbf16>, vector<324x144xbf16>, vector<8x144xf32> -> vector<8x144xf32>
    %c1 = arith.constant 1 : index
    %c0_4 = arith.constant 0 : index
    %c0_5 = arith.constant 0 : index
    %4 = vector.load %arg3[%c1, %c0_4, %c0_5] : memref<3x324x144xbf16, #tpu.memory_space<vmem>>, vector<1x324x144xbf16>
    %5 = vector.shape_cast %4 : vector<1x324x144xbf16> to vector<324x144xbf16>
    %cst_6 = arith.constant dense<0.000000e+00> : vector<8x144xf32>
    %6 = tpu.matmul %0, %5, %cst_6 {dimension_numbers = #tpu.dot_dimension_numbers<[1], [0], [0], [1], [0, 0, 1, 1], [], []>} : vector<8x324xbf16>, vector<324x144xbf16>, vector<8x144xf32> -> vector<8x144xf32>
    %7 = arith.maximumf %3, %6 : vector<8x144xf32>
    %c2 = arith.constant 2 : index
    %c0_7 = arith.constant 0 : index
    %c0_8 = arith.constant 0 : index
    %8 = vector.load %arg3[%c2, %c0_7, %c0_8] : memref<3x324x144xbf16, #tpu.memory_space<vmem>>, vector<1x324x144xbf16>
    %9 = vector.shape_cast %8 : vector<1x324x144xbf16> to vector<324x144xbf16>
    %cst_9 = arith.constant dense<0.000000e+00> : vector<8x144xf32>
    %10 = tpu.matmul %0, %9, %cst_9 {dimension_numbers = #tpu.dot_dimension_numbers<[1], [0], [0], [1], [0, 0, 1, 1], [], []>} : vector<8x324xbf16>, vector<324x144xbf16>, vector<8x144xf32> -> vector<8x144xf32>
    %11 = arith.maximumf %7, %10 : vector<8x144xf32>
    %12 = arith.truncf %11 : vector<8x144xf32> to vector<8x144xbf16>
    %c0_10 = arith.constant 0 : index
    %c0_11 = arith.constant 0 : index
    %c0_12 = arith.constant 0 : index
    %13 = vector.load %arg4[%c0_10, %c0_11, %c0_12] : memref<3x144x64xbf16, #tpu.memory_space<vmem>>, vector<1x144x64xbf16>
    %14 = vector.shape_cast %13 : vector<1x144x64xbf16> to vector<144x64xbf16>
    %cst_13 = arith.constant dense<0.000000e+00> : vector<8x64xf32>
    %15 = tpu.matmul %12, %14, %cst_13 {dimension_numbers = #tpu.dot_dimension_numbers<[1], [0], [0], [1], [0, 0, 1, 1], [], []>} : vector<8x144xbf16>, vector<144x64xbf16>, vector<8x64xf32> -> vector<8x64xf32>
    %c1_14 = arith.constant 1 : index
    %c0_15 = arith.constant 0 : index
    %c0_16 = arith.constant 0 : index
    %16 = vector.load %arg4[%c1_14, %c0_15, %c0_16] : memref<3x144x64xbf16, #tpu.memory_space<vmem>>, vector<1x144x64xbf16>
    %17 = vector.shape_cast %16 : vector<1x144x64xbf16> to vector<144x64xbf16>
    %cst_17 = arith.constant dense<0.000000e+00> : vector<8x64xf32>
    %18 = tpu.matmul %12, %17, %cst_17 {dimension_numbers = #tpu.dot_dimension_numbers<[1], [0], [0], [1], [0, 0, 1, 1], [], []>} : vector<8x144xbf16>, vector<144x64xbf16>, vector<8x64xf32> -> vector<8x64xf32>
    %19 = arith.maximumf %15, %18 : vector<8x64xf32>
    %c2_18 = arith.constant 2 : index
    %c0_19 = arith.constant 0 : index
    %c0_20 = arith.constant 0 : index
    %20 = vector.load %arg4[%c2_18, %c0_19, %c0_20] : memref<3x144x64xbf16, #tpu.memory_space<vmem>>, vector<1x144x64xbf16>
    %21 = vector.shape_cast %20 : vector<1x144x64xbf16> to vector<144x64xbf16>
    %cst_21 = arith.constant dense<0.000000e+00> : vector<8x64xf32>
    %22 = tpu.matmul %12, %21, %cst_21 {dimension_numbers = #tpu.dot_dimension_numbers<[1], [0], [0], [1], [0, 0, 1, 1], [], []>} : vector<8x144xbf16>, vector<144x64xbf16>, vector<8x64xf32> -> vector<8x64xf32>
    %23 = arith.maximumf %19, %22 : vector<8x64xf32>
    %24 = arith.truncf %23 : vector<8x64xf32> to vector<8x64xbf16>
    %c0_22 = arith.constant 0 : index
    %c0_23 = arith.constant 0 : index
    %25 = vector.load %arg5[%c0_22, %c0_23] : memref<64x25xbf16, #tpu.memory_space<vmem>>, vector<64x25xbf16>
    %cst_24 = arith.constant dense<0.000000e+00> : vector<8x25xf32>
    %26 = tpu.matmul %24, %25, %cst_24 {dimension_numbers = #tpu.dot_dimension_numbers<[1], [0], [0], [1], [0, 0, 1, 1], [], []>} : vector<8x64xbf16>, vector<64x25xbf16>, vector<8x25xf32> -> vector<8x25xf32>
    %c0_25 = arith.constant 0 : index
    %c0_26 = arith.constant 0 : index
    %27 = vector.load %arg2[%c0_25, %c0_26] : memref<8x256xbf16, #tpu.memory_space<vmem>>, vector<8x256xbf16>
    %c0_27 = arith.constant 0 : index
    %c0_28 = arith.constant 0 : index
    %c0_29 = arith.constant 0 : index
    %28 = vector.load %arg6[%c0_27, %c0_28, %c0_29] : memref<4x256x80xbf16, #tpu.memory_space<vmem>>, vector<1x256x80xbf16>
    %29 = vector.shape_cast %28 : vector<1x256x80xbf16> to vector<256x80xbf16>
    %cst_30 = arith.constant dense<0.000000e+00> : vector<8x80xf32>
    %30 = tpu.matmul %27, %29, %cst_30 {dimension_numbers = #tpu.dot_dimension_numbers<[1], [0], [0], [1], [0, 0, 1, 1], [], []>} : vector<8x256xbf16>, vector<256x80xbf16>, vector<8x80xf32> -> vector<8x80xf32>
    %c1_31 = arith.constant 1 : index
    %c0_32 = arith.constant 0 : index
    %c0_33 = arith.constant 0 : index
    %31 = vector.load %arg6[%c1_31, %c0_32, %c0_33] : memref<4x256x80xbf16, #tpu.memory_space<vmem>>, vector<1x256x80xbf16>
    %32 = vector.shape_cast %31 : vector<1x256x80xbf16> to vector<256x80xbf16>
    %cst_34 = arith.constant dense<0.000000e+00> : vector<8x80xf32>
    %33 = tpu.matmul %27, %32, %cst_34 {dimension_numbers = #tpu.dot_dimension_numbers<[1], [0], [0], [1], [0, 0, 1, 1], [], []>} : vector<8x256xbf16>, vector<256x80xbf16>, vector<8x80xf32> -> vector<8x80xf32>
    %34 = arith.maximumf %30, %33 : vector<8x80xf32>
    %c2_35 = arith.constant 2 : index
    %c0_36 = arith.constant 0 : index
    %c0_37 = arith.constant 0 : index
    %35 = vector.load %arg6[%c2_35, %c0_36, %c0_37] : memref<4x256x80xbf16, #tpu.memory_space<vmem>>, vector<1x256x80xbf16>
    %36 = vector.shape_cast %35 : vector<1x256x80xbf16> to vector<256x80xbf16>
    %cst_38 = arith.constant dense<0.000000e+00> : vector<8x80xf32>
    %37 = tpu.matmul %27, %36, %cst_38 {dimension_numbers = #tpu.dot_dimension_numbers<[1], [0], [0], [1], [0, 0, 1, 1], [], []>} : vector<8x256xbf16>, vector<256x80xbf16>, vector<8x80xf32> -> vector<8x80xf32>
    %38 = arith.maximumf %34, %37 : vector<8x80xf32>
    %c3 = arith.constant 3 : index
    %c0_39 = arith.constant 0 : index
    %c0_40 = arith.constant 0 : index
    %39 = vector.load %arg6[%c3, %c0_39, %c0_40] : memref<4x256x80xbf16, #tpu.memory_space<vmem>>, vector<1x256x80xbf16>
    %40 = vector.shape_cast %39 : vector<1x256x80xbf16> to vector<256x80xbf16>
    %cst_41 = arith.constant dense<0.000000e+00> : vector<8x80xf32>
    %41 = tpu.matmul %27, %40, %cst_41 {dimension_numbers = #tpu.dot_dimension_numbers<[1], [0], [0], [1], [0, 0, 1, 1], [], []>} : vector<8x256xbf16>, vector<256x80xbf16>, vector<8x80xf32> -> vector<8x80xf32>
    %42 = arith.maximumf %38, %41 : vector<8x80xf32>
    %43 = arith.truncf %42 : vector<8x80xf32> to vector<8x80xbf16>
    %c0_42 = arith.constant 0 : index
    %c0_43 = arith.constant 0 : index
    %c0_44 = arith.constant 0 : index
    %44 = vector.load %arg7[%c0_42, %c0_43, %c0_44] : memref<4x80x25xbf16, #tpu.memory_space<vmem>>, vector<1x80x25xbf16>
    %45 = vector.shape_cast %44 : vector<1x80x25xbf16> to vector<80x25xbf16>
    %cst_45 = arith.constant dense<0.000000e+00> : vector<8x25xf32>
    %46 = tpu.matmul %43, %45, %cst_45 {dimension_numbers = #tpu.dot_dimension_numbers<[1], [0], [0], [1], [0, 0, 1, 1], [], []>} : vector<8x80xbf16>, vector<80x25xbf16>, vector<8x25xf32> -> vector<8x25xf32>
    %c1_46 = arith.constant 1 : index
    %c0_47 = arith.constant 0 : index
    %c0_48 = arith.constant 0 : index
    %47 = vector.load %arg7[%c1_46, %c0_47, %c0_48] : memref<4x80x25xbf16, #tpu.memory_space<vmem>>, vector<1x80x25xbf16>
    %48 = vector.shape_cast %47 : vector<1x80x25xbf16> to vector<80x25xbf16>
    %cst_49 = arith.constant dense<0.000000e+00> : vector<8x25xf32>
    %49 = tpu.matmul %43, %48, %cst_49 {dimension_numbers = #tpu.dot_dimension_numbers<[1], [0], [0], [1], [0, 0, 1, 1], [], []>} : vector<8x80xbf16>, vector<80x25xbf16>, vector<8x25xf32> -> vector<8x25xf32>
    %50 = arith.maximumf %46, %49 : vector<8x25xf32>
    %c2_50 = arith.constant 2 : index
    %c0_51 = arith.constant 0 : index
    %c0_52 = arith.constant 0 : index
    %51 = vector.load %arg7[%c2_50, %c0_51, %c0_52] : memref<4x80x25xbf16, #tpu.memory_space<vmem>>, vector<1x80x25xbf16>
    %52 = vector.shape_cast %51 : vector<1x80x25xbf16> to vector<80x25xbf16>
    %cst_53 = arith.constant dense<0.000000e+00> : vector<8x25xf32>
    %53 = tpu.matmul %43, %52, %cst_53 {dimension_numbers = #tpu.dot_dimension_numbers<[1], [0], [0], [1], [0, 0, 1, 1], [], []>} : vector<8x80xbf16>, vector<80x25xbf16>, vector<8x25xf32> -> vector<8x25xf32>
    %54 = arith.maximumf %50, %53 : vector<8x25xf32>
    %c3_54 = arith.constant 3 : index
    %c0_55 = arith.constant 0 : index
    %c0_56 = arith.constant 0 : index
    %55 = vector.load %arg7[%c3_54, %c0_55, %c0_56] : memref<4x80x25xbf16, #tpu.memory_space<vmem>>, vector<1x80x25xbf16>
    %56 = vector.shape_cast %55 : vector<1x80x25xbf16> to vector<80x25xbf16>
    %cst_57 = arith.constant dense<0.000000e+00> : vector<8x25xf32>
    %57 = tpu.matmul %43, %56, %cst_57 {dimension_numbers = #tpu.dot_dimension_numbers<[1], [0], [0], [1], [0, 0, 1, 1], [], []>} : vector<8x80xbf16>, vector<80x25xbf16>, vector<8x25xf32> -> vector<8x25xf32>
    %58 = arith.maximumf %54, %57 : vector<8x25xf32>
    %59 = arith.truncf %58 : vector<8x25xf32> to vector<8x25xbf16>
    %c0_58 = arith.constant 0 : index
    %c0_59 = arith.constant 0 : index
    %60 = vector.load %arg8[%c0_58, %c0_59] : memref<25x25xbf16, #tpu.memory_space<vmem>>, vector<25x25xbf16>
    %cst_60 = arith.constant dense<0.000000e+00> : vector<8x25xf32>
    %61 = tpu.matmul %59, %60, %cst_60 {dimension_numbers = #tpu.dot_dimension_numbers<[1], [0], [0], [1], [0, 0, 1, 1], [], []>} : vector<8x25xbf16>, vector<25x25xbf16>, vector<8x25xf32> -> vector<8x25xf32>
    %c0_61 = arith.constant 0 : index
    %c0_62 = arith.constant 0 : index
    %62 = vector.load %arg10[%c0_61, %c0_62] : memref<8x8xbf16, #tpu.memory_space<vmem>>, vector<8x8xbf16>
    %c0_63 = arith.constant 0 : index
    %c0_64 = arith.constant 0 : index
    %63 = vector.load %arg11[%c0_63, %c0_64] : memref<8x1xf32, #tpu.memory_space<vmem>>, vector<8x1xf32>
    %c0_65 = arith.constant 0 : index
    %c0_66 = arith.constant 0 : index
    %64 = vector.load %arg12[%c0_65, %c0_66] : memref<72x8xbf16, #tpu.memory_space<vmem>>, vector<72x8xbf16>
    %c0_67 = arith.constant 0 : index
    %c0_68 = arith.constant 0 : index
    %65 = vector.load %arg13[%c0_67, %c0_68] : memref<8x128xf32, #tpu.memory_space<vmem>>, vector<8x128xf32>
    %c0_69 = arith.constant 0 : index
    %c0_70 = arith.constant 0 : index
    %66 = vector.load %arg14[%c0_69, %c0_70] : memref<8x1xf32, #tpu.memory_space<vmem>>, vector<8x1xf32>
    %c0_71 = arith.constant 0 : index
    %c0_72 = arith.constant 0 : index
    %67 = vector.load %arg15[%c0_71, %c0_72] : memref<8x8xf32, #tpu.memory_space<vmem>>, vector<8x8xf32>
    %68 = arith.truncf %26 : vector<8x25xf32> to vector<8x25xbf16>
    %cst_73 = arith.constant dense<0.000000e+00> : vector<8x25xf32>
    %69 = tpu.matmul %62, %68, %cst_73 {dimension_numbers = #tpu.dot_dimension_numbers<[1], [0], [0], [1], [0, 0, 1, 1], [], []>} : vector<8x8xbf16>, vector<8x25xbf16>, vector<8x25xf32> -> vector<8x25xf32>
    %70 = vector.broadcast %63 : vector<8x1xf32> to vector<8x25xf32>
    %71 = arith.addf %69, %70 : vector<8x25xf32>
    %cst_74 = arith.constant 0.000000e+00 : f32
    %72 = vector.broadcast %cst_74 : f32 to vector<8x25xf32>
    %73 = arith.maximumf %71, %72 : vector<8x25xf32>
    %74 = arith.truncf %73 : vector<8x25xf32> to vector<8x25xbf16>
    %cst_75 = arith.constant dense<0.000000e+00> : vector<72x25xf32>
    %75 = tpu.matmul %64, %74, %cst_75 {dimension_numbers = #tpu.dot_dimension_numbers<[1], [0], [0], [1], [0, 0, 1, 1], [], []>} : vector<72x8xbf16>, vector<8x25xbf16>, vector<72x25xf32> -> vector<72x25xf32>
    %76 = arith.truncf %75 : vector<72x25xf32> to vector<72x25xbf16>
    %77 = vector.extract_strided_slice %76 {offsets = [0, 0], sizes = [8, 25], strides = [1, 1]} : vector<72x25xbf16> to vector<8x25xbf16>
    %c0_76 = arith.constant 0 : index
    %c0_77 = arith.constant 0 : index
    %c0_78 = arith.constant 0 : index
    %78 = vector.load %arg9[%c0_76, %c0_77, %c0_78] : memref<9x25x128xbf16, #tpu.memory_space<vmem>>, vector<1x25x128xbf16>
    %79 = vector.shape_cast %78 : vector<1x25x128xbf16> to vector<25x128xbf16>
    %cst_79 = arith.constant dense<0.000000e+00> : vector<8x128xf32>
    %80 = tpu.matmul %77, %79, %cst_79 {dimension_numbers = #tpu.dot_dimension_numbers<[1], [0], [0], [1], [0, 0, 1, 1], [], []>} : vector<8x25xbf16>, vector<25x128xbf16>, vector<8x128xf32> -> vector<8x128xf32>
    %81 = arith.addf %65, %80 : vector<8x128xf32>
    %82 = vector.extract_strided_slice %76 {offsets = [8, 0], sizes = [8, 25], strides = [1, 1]} : vector<72x25xbf16> to vector<8x25xbf16>
    %c1_80 = arith.constant 1 : index
    %c0_81 = arith.constant 0 : index
    %c0_82 = arith.constant 0 : index
    %83 = vector.load %arg9[%c1_80, %c0_81, %c0_82] : memref<9x25x128xbf16, #tpu.memory_space<vmem>>, vector<1x25x128xbf16>
    %84 = vector.shape_cast %83 : vector<1x25x128xbf16> to vector<25x128xbf16>
    %cst_83 = arith.constant dense<0.000000e+00> : vector<8x128xf32>
    %85 = tpu.matmul %82, %84, %cst_83 {dimension_numbers = #tpu.dot_dimension_numbers<[1], [0], [0], [1], [0, 0, 1, 1], [], []>} : vector<8x25xbf16>, vector<25x128xbf16>, vector<8x128xf32> -> vector<8x128xf32>
    %86 = arith.addf %81, %85 : vector<8x128xf32>
    %87 = vector.extract_strided_slice %76 {offsets = [16, 0], sizes = [8, 25], strides = [1, 1]} : vector<72x25xbf16> to vector<8x25xbf16>
    %c2_84 = arith.constant 2 : index
    %c0_85 = arith.constant 0 : index
    %c0_86 = arith.constant 0 : index
    %88 = vector.load %arg9[%c2_84, %c0_85, %c0_86] : memref<9x25x128xbf16, #tpu.memory_space<vmem>>, vector<1x25x128xbf16>
    %89 = vector.shape_cast %88 : vector<1x25x128xbf16> to vector<25x128xbf16>
    %cst_87 = arith.constant dense<0.000000e+00> : vector<8x128xf32>
    %90 = tpu.matmul %87, %89, %cst_87 {dimension_numbers = #tpu.dot_dimension_numbers<[1], [0], [0], [1], [0, 0, 1, 1], [], []>} : vector<8x25xbf16>, vector<25x128xbf16>, vector<8x128xf32> -> vector<8x128xf32>
    %91 = arith.addf %86, %90 : vector<8x128xf32>
    %92 = vector.extract_strided_slice %76 {offsets = [24, 0], sizes = [8, 25], strides = [1, 1]} : vector<72x25xbf16> to vector<8x25xbf16>
    %c3_88 = arith.constant 3 : index
    %c0_89 = arith.constant 0 : index
    %c0_90 = arith.constant 0 : index
    %93 = vector.load %arg9[%c3_88, %c0_89, %c0_90] : memref<9x25x128xbf16, #tpu.memory_space<vmem>>, vector<1x25x128xbf16>
    %94 = vector.shape_cast %93 : vector<1x25x128xbf16> to vector<25x128xbf16>
    %cst_91 = arith.constant dense<0.000000e+00> : vector<8x128xf32>
    %95 = tpu.matmul %92, %94, %cst_91 {dimension_numbers = #tpu.dot_dimension_numbers<[1], [0], [0], [1], [0, 0, 1, 1], [], []>} : vector<8x25xbf16>, vector<25x128xbf16>, vector<8x128xf32> -> vector<8x128xf32>
    %96 = arith.addf %91, %95 : vector<8x128xf32>
    %97 = vector.extract_strided_slice %76 {offsets = [32, 0], sizes = [8, 25], strides = [1, 1]} : vector<72x25xbf16> to vector<8x25xbf16>
    %c4 = arith.constant 4 : index
    %c0_92 = arith.constant 0 : index
    %c0_93 = arith.constant 0 : index
    %98 = vector.load %arg9[%c4, %c0_92, %c0_93] : memref<9x25x128xbf16, #tpu.memory_space<vmem>>, vector<1x25x128xbf16>
    %99 = vector.shape_cast %98 : vector<1x25x128xbf16> to vector<25x128xbf16>
    %cst_94 = arith.constant dense<0.000000e+00> : vector<8x128xf32>
    %100 = tpu.matmul %97, %99, %cst_94 {dimension_numbers = #tpu.dot_dimension_numbers<[1], [0], [0], [1], [0, 0, 1, 1], [], []>} : vector<8x25xbf16>, vector<25x128xbf16>, vector<8x128xf32> -> vector<8x128xf32>
    %101 = arith.addf %96, %100 : vector<8x128xf32>
    %102 = vector.extract_strided_slice %76 {offsets = [40, 0], sizes = [8, 25], strides = [1, 1]} : vector<72x25xbf16> to vector<8x25xbf16>
    %c5 = arith.constant 5 : index
    %c0_95 = arith.constant 0 : index
    %c0_96 = arith.constant 0 : index
    %103 = vector.load %arg9[%c5, %c0_95, %c0_96] : memref<9x25x128xbf16, #tpu.memory_space<vmem>>, vector<1x25x128xbf16>
    %104 = vector.shape_cast %103 : vector<1x25x128xbf16> to vector<25x128xbf16>
    %cst_97 = arith.constant dense<0.000000e+00> : vector<8x128xf32>
    %105 = tpu.matmul %102, %104, %cst_97 {dimension_numbers = #tpu.dot_dimension_numbers<[1], [0], [0], [1], [0, 0, 1, 1], [], []>} : vector<8x25xbf16>, vector<25x128xbf16>, vector<8x128xf32> -> vector<8x128xf32>
    %106 = arith.addf %101, %105 : vector<8x128xf32>
    %107 = vector.extract_strided_slice %76 {offsets = [48, 0], sizes = [8, 25], strides = [1, 1]} : vector<72x25xbf16> to vector<8x25xbf16>
    %c6 = arith.constant 6 : index
    %c0_98 = arith.constant 0 : index
    %c0_99 = arith.constant 0 : index
    %108 = vector.load %arg9[%c6, %c0_98, %c0_99] : memref<9x25x128xbf16, #tpu.memory_space<vmem>>, vector<1x25x128xbf16>
    %109 = vector.shape_cast %108 : vector<1x25x128xbf16> to vector<25x128xbf16>
    %cst_100 = arith.constant dense<0.000000e+00> : vector<8x128xf32>
    %110 = tpu.matmul %107, %109, %cst_100 {dimension_numbers = #tpu.dot_dimension_numbers<[1], [0], [0], [1], [0, 0, 1, 1], [], []>} : vector<8x25xbf16>, vector<25x128xbf16>, vector<8x128xf32> -> vector<8x128xf32>
    %111 = arith.addf %106, %110 : vector<8x128xf32>
    %112 = vector.extract_strided_slice %76 {offsets = [56, 0], sizes = [8, 25], strides = [1, 1]} : vector<72x25xbf16> to vector<8x25xbf16>
    %c7 = arith.constant 7 : index
    %c0_101 = arith.constant 0 : index
    %c0_102 = arith.constant 0 : index
    %113 = vector.load %arg9[%c7, %c0_101, %c0_102] : memref<9x25x128xbf16, #tpu.memory_space<vmem>>, vector<1x25x128xbf16>
    %114 = vector.shape_cast %113 : vector<1x25x128xbf16> to vector<25x128xbf16>
    %cst_103 = arith.constant dense<0.000000e+00> : vector<8x128xf32>
    %115 = tpu.matmul %112, %114, %cst_103 {dimension_numbers = #tpu.dot_dimension_numbers<[1], [0], [0], [1], [0, 0, 1, 1], [], []>} : vector<8x25xbf16>, vector<25x128xbf16>, vector<8x128xf32> -> vector<8x128xf32>
    %116 = arith.addf %111, %115 : vector<8x128xf32>
    %117 = vector.extract_strided_slice %76 {offsets = [64, 0], sizes = [8, 25], strides = [1, 1]} : vector<72x25xbf16> to vector<8x25xbf16>
    %c8 = arith.constant 8 : index
    %c0_104 = arith.constant 0 : index
    %c0_105 = arith.constant 0 : index
    %118 = vector.load %arg9[%c8, %c0_104, %c0_105] : memref<9x25x128xbf16, #tpu.memory_space<vmem>>, vector<1x25x128xbf16>
    %119 = vector.shape_cast %118 : vector<1x25x128xbf16> to vector<25x128xbf16>
    %cst_106 = arith.constant dense<0.000000e+00> : vector<8x128xf32>
    %120 = tpu.matmul %117, %119, %cst_106 {dimension_numbers = #tpu.dot_dimension_numbers<[1], [0], [0], [1], [0, 0, 1, 1], [], []>} : vector<8x25xbf16>, vector<25x128xbf16>, vector<8x128xf32> -> vector<8x128xf32>
    %121 = arith.addf %116, %120 : vector<8x128xf32>
    %122 = vector.broadcast %66 : vector<8x1xf32> to vector<8x128xf32>
    %123 = arith.mulf %121, %122 : vector<8x128xf32>
    %cst_107 = arith.constant dense<0.000000e+00> : vector<8xf32>
    %124 = vector.multi_reduction <add>, %123, %cst_107 [1] : vector<8x128xf32> to vector<8xf32>
    %125 = vector.shape_cast %124 : vector<8xf32> to vector<8x1xf32>
    %cst_108 = arith.constant dense<0.000000e+00> : vector<8x1xf32>
    %126 = tpu.matmul %67, %125, %cst_108 {dimension_numbers = #tpu.dot_dimension_numbers<[1], [0], [0], [1], [0, 0, 1, 1], [], []>} : vector<8x8xf32>, vector<8x1xf32>, vector<8x1xf32> -> vector<8x1xf32>
    %127 = arith.truncf %61 : vector<8x25xf32> to vector<8x25xbf16>
    %cst_109 = arith.constant dense<0.000000e+00> : vector<8x25xf32>
    %128 = tpu.matmul %62, %127, %cst_109 {dimension_numbers = #tpu.dot_dimension_numbers<[1], [0], [0], [1], [0, 0, 1, 1], [], []>} : vector<8x8xbf16>, vector<8x25xbf16>, vector<8x25xf32> -> vector<8x25xf32>
    %129 = vector.broadcast %63 : vector<8x1xf32> to vector<8x25xf32>
    %130 = arith.addf %128, %129 : vector<8x25xf32>
    %cst_110 = arith.constant 0.000000e+00 : f32
    %131 = vector.broadcast %cst_110 : f32 to vector<8x25xf32>
    %132 = arith.maximumf %130, %131 : vector<8x25xf32>
    %133 = arith.truncf %132 : vector<8x25xf32> to vector<8x25xbf16>
    %cst_111 = arith.constant dense<0.000000e+00> : vector<72x25xf32>
    %134 = tpu.matmul %64, %133, %cst_111 {dimension_numbers = #tpu.dot_dimension_numbers<[1], [0], [0], [1], [0, 0, 1, 1], [], []>} : vector<72x8xbf16>, vector<8x25xbf16>, vector<72x25xf32> -> vector<72x25xf32>
    %135 = arith.truncf %134 : vector<72x25xf32> to vector<72x25xbf16>
    %136 = vector.extract_strided_slice %135 {offsets = [0, 0], sizes = [8, 25], strides = [1, 1]} : vector<72x25xbf16> to vector<8x25xbf16>
    %c0_112 = arith.constant 0 : index
    %c0_113 = arith.constant 0 : index
    %c0_114 = arith.constant 0 : index
    %137 = vector.load %arg9[%c0_112, %c0_113, %c0_114] : memref<9x25x128xbf16, #tpu.memory_space<vmem>>, vector<1x25x128xbf16>
    %138 = vector.shape_cast %137 : vector<1x25x128xbf16> to vector<25x128xbf16>
    %cst_115 = arith.constant dense<0.000000e+00> : vector<8x128xf32>
    %139 = tpu.matmul %136, %138, %cst_115 {dimension_numbers = #tpu.dot_dimension_numbers<[1], [0], [0], [1], [0, 0, 1, 1], [], []>} : vector<8x25xbf16>, vector<25x128xbf16>, vector<8x128xf32> -> vector<8x128xf32>
    %140 = arith.addf %65, %139 : vector<8x128xf32>
    %141 = vector.extract_strided_slice %135 {offsets = [8, 0], sizes = [8, 25], strides = [1, 1]} : vector<72x25xbf16> to vector<8x25xbf16>
    %c1_116 = arith.constant 1 : index
    %c0_117 = arith.constant 0 : index
    %c0_118 = arith.constant 0 : index
    %142 = vector.load %arg9[%c1_116, %c0_117, %c0_118] : memref<9x25x128xbf16, #tpu.memory_space<vmem>>, vector<1x25x128xbf16>
    %143 = vector.shape_cast %142 : vector<1x25x128xbf16> to vector<25x128xbf16>
    %cst_119 = arith.constant dense<0.000000e+00> : vector<8x128xf32>
    %144 = tpu.matmul %141, %143, %cst_119 {dimension_numbers = #tpu.dot_dimension_numbers<[1], [0], [0], [1], [0, 0, 1, 1], [], []>} : vector<8x25xbf16>, vector<25x128xbf16>, vector<8x128xf32> -> vector<8x128xf32>
    %145 = arith.addf %140, %144 : vector<8x128xf32>
    %146 = vector.extract_strided_slice %135 {offsets = [16, 0], sizes = [8, 25], strides = [1, 1]} : vector<72x25xbf16> to vector<8x25xbf16>
    %c2_120 = arith.constant 2 : index
    %c0_121 = arith.constant 0 : index
    %c0_122 = arith.constant 0 : index
    %147 = vector.load %arg9[%c2_120, %c0_121, %c0_122] : memref<9x25x128xbf16, #tpu.memory_space<vmem>>, vector<1x25x128xbf16>
    %148 = vector.shape_cast %147 : vector<1x25x128xbf16> to vector<25x128xbf16>
    %cst_123 = arith.constant dense<0.000000e+00> : vector<8x128xf32>
    %149 = tpu.matmul %146, %148, %cst_123 {dimension_numbers = #tpu.dot_dimension_numbers<[1], [0], [0], [1], [0, 0, 1, 1], [], []>} : vector<8x25xbf16>, vector<25x128xbf16>, vector<8x128xf32> -> vector<8x128xf32>
    %150 = arith.addf %145, %149 : vector<8x128xf32>
    %151 = vector.extract_strided_slice %135 {offsets = [24, 0], sizes = [8, 25], strides = [1, 1]} : vector<72x25xbf16> to vector<8x25xbf16>
    %c3_124 = arith.constant 3 : index
    %c0_125 = arith.constant 0 : index
    %c0_126 = arith.constant 0 : index
    %152 = vector.load %arg9[%c3_124, %c0_125, %c0_126] : memref<9x25x128xbf16, #tpu.memory_space<vmem>>, vector<1x25x128xbf16>
    %153 = vector.shape_cast %152 : vector<1x25x128xbf16> to vector<25x128xbf16>
    %cst_127 = arith.constant dense<0.000000e+00> : vector<8x128xf32>
    %154 = tpu.matmul %151, %153, %cst_127 {dimension_numbers = #tpu.dot_dimension_numbers<[1], [0], [0], [1], [0, 0, 1, 1], [], []>} : vector<8x25xbf16>, vector<25x128xbf16>, vector<8x128xf32> -> vector<8x128xf32>
    %155 = arith.addf %150, %154 : vector<8x128xf32>
    %156 = vector.extract_strided_slice %135 {offsets = [32, 0], sizes = [8, 25], strides = [1, 1]} : vector<72x25xbf16> to vector<8x25xbf16>
    %c4_128 = arith.constant 4 : index
    %c0_129 = arith.constant 0 : index
    %c0_130 = arith.constant 0 : index
    %157 = vector.load %arg9[%c4_128, %c0_129, %c0_130] : memref<9x25x128xbf16, #tpu.memory_space<vmem>>, vector<1x25x128xbf16>
    %158 = vector.shape_cast %157 : vector<1x25x128xbf16> to vector<25x128xbf16>
    %cst_131 = arith.constant dense<0.000000e+00> : vector<8x128xf32>
    %159 = tpu.matmul %156, %158, %cst_131 {dimension_numbers = #tpu.dot_dimension_numbers<[1], [0], [0], [1], [0, 0, 1, 1], [], []>} : vector<8x25xbf16>, vector<25x128xbf16>, vector<8x128xf32> -> vector<8x128xf32>
    %160 = arith.addf %155, %159 : vector<8x128xf32>
    %161 = vector.extract_strided_slice %135 {offsets = [40, 0], sizes = [8, 25], strides = [1, 1]} : vector<72x25xbf16> to vector<8x25xbf16>
    %c5_132 = arith.constant 5 : index
    %c0_133 = arith.constant 0 : index
    %c0_134 = arith.constant 0 : index
    %162 = vector.load %arg9[%c5_132, %c0_133, %c0_134] : memref<9x25x128xbf16, #tpu.memory_space<vmem>>, vector<1x25x128xbf16>
    %163 = vector.shape_cast %162 : vector<1x25x128xbf16> to vector<25x128xbf16>
    %cst_135 = arith.constant dense<0.000000e+00> : vector<8x128xf32>
    %164 = tpu.matmul %161, %163, %cst_135 {dimension_numbers = #tpu.dot_dimension_numbers<[1], [0], [0], [1], [0, 0, 1, 1], [], []>} : vector<8x25xbf16>, vector<25x128xbf16>, vector<8x128xf32> -> vector<8x128xf32>
    %165 = arith.addf %160, %164 : vector<8x128xf32>
    %166 = vector.extract_strided_slice %135 {offsets = [48, 0], sizes = [8, 25], strides = [1, 1]} : vector<72x25xbf16> to vector<8x25xbf16>
    %c6_136 = arith.constant 6 : index
    %c0_137 = arith.constant 0 : index
    %c0_138 = arith.constant 0 : index
    %167 = vector.load %arg9[%c6_136, %c0_137, %c0_138] : memref<9x25x128xbf16, #tpu.memory_space<vmem>>, vector<1x25x128xbf16>
    %168 = vector.shape_cast %167 : vector<1x25x128xbf16> to vector<25x128xbf16>
    %cst_139 = arith.constant dense<0.000000e+00> : vector<8x128xf32>
    %169 = tpu.matmul %166, %168, %cst_139 {dimension_numbers = #tpu.dot_dimension_numbers<[1], [0], [0], [1], [0, 0, 1, 1], [], []>} : vector<8x25xbf16>, vector<25x128xbf16>, vector<8x128xf32> -> vector<8x128xf32>
    %170 = arith.addf %165, %169 : vector<8x128xf32>
    %171 = vector.extract_strided_slice %135 {offsets = [56, 0], sizes = [8, 25], strides = [1, 1]} : vector<72x25xbf16> to vector<8x25xbf16>
    %c7_140 = arith.constant 7 : index
    %c0_141 = arith.constant 0 : index
    %c0_142 = arith.constant 0 : index
    %172 = vector.load %arg9[%c7_140, %c0_141, %c0_142] : memref<9x25x128xbf16, #tpu.memory_space<vmem>>, vector<1x25x128xbf16>
    %173 = vector.shape_cast %172 : vector<1x25x128xbf16> to vector<25x128xbf16>
    %cst_143 = arith.constant dense<0.000000e+00> : vector<8x128xf32>
    %174 = tpu.matmul %171, %173, %cst_143 {dimension_numbers = #tpu.dot_dimension_numbers<[1], [0], [0], [1], [0, 0, 1, 1], [], []>} : vector<8x25xbf16>, vector<25x128xbf16>, vector<8x128xf32> -> vector<8x128xf32>
    %175 = arith.addf %170, %174 : vector<8x128xf32>
    %176 = vector.extract_strided_slice %135 {offsets = [64, 0], sizes = [8, 25], strides = [1, 1]} : vector<72x25xbf16> to vector<8x25xbf16>
    %c8_144 = arith.constant 8 : index
    %c0_145 = arith.constant 0 : index
    %c0_146 = arith.constant 0 : index
    %177 = vector.load %arg9[%c8_144, %c0_145, %c0_146] : memref<9x25x128xbf16, #tpu.memory_space<vmem>>, vector<1x25x128xbf16>
    %178 = vector.shape_cast %177 : vector<1x25x128xbf16> to vector<25x128xbf16>
    %cst_147 = arith.constant dense<0.000000e+00> : vector<8x128xf32>
    %179 = tpu.matmul %176, %178, %cst_147 {dimension_numbers = #tpu.dot_dimension_numbers<[1], [0], [0], [1], [0, 0, 1, 1], [], []>} : vector<8x25xbf16>, vector<25x128xbf16>, vector<8x128xf32> -> vector<8x128xf32>
    %180 = arith.addf %175, %179 : vector<8x128xf32>
    %181 = vector.broadcast %66 : vector<8x1xf32> to vector<8x128xf32>
    %182 = arith.mulf %180, %181 : vector<8x128xf32>
    %cst_148 = arith.constant dense<0.000000e+00> : vector<8xf32>
    %183 = vector.multi_reduction <add>, %182, %cst_148 [1] : vector<8x128xf32> to vector<8xf32>
    %184 = vector.shape_cast %183 : vector<8xf32> to vector<8x1xf32>
    %cst_149 = arith.constant dense<0.000000e+00> : vector<8x1xf32>
    %185 = tpu.matmul %67, %184, %cst_149 {dimension_numbers = #tpu.dot_dimension_numbers<[1], [0], [0], [1], [0, 0, 1, 1], [], []>} : vector<8x8xf32>, vector<8x1xf32>, vector<8x1xf32> -> vector<8x1xf32>
    %186 = arith.subf %185, %126 : vector<8x1xf32>
    %cst_150 = arith.constant 0.0204081628 : f32
    %187 = vector.broadcast %cst_150 : f32 to vector<8x1xf32>
    %188 = arith.mulf %186, %187 : vector<8x1xf32>
    %189 = math.exp %188 : vector<8x1xf32>
    %cst_151 = arith.constant 1.000000e+00 : f32
    %190 = vector.broadcast %cst_151 : f32 to vector<8x1xf32>
    %191 = arith.addf %190, %189 : vector<8x1xf32>
    %192 = tpu.reciprocal %191 {approx = true} : vector<8x1xf32> -> vector<8x1xf32>
    %193 = vector.broadcast %192 : vector<8x1xf32> to vector<8x128xf32>
    %194 = arith.mulf %193, %121 : vector<8x128xf32>
    %cst_152 = arith.constant 1.000000e+00 : f32
    %195 = vector.broadcast %cst_152 : f32 to vector<8x1xf32>
    %196 = arith.subf %195, %192 : vector<8x1xf32>
    %197 = vector.broadcast %196 : vector<8x1xf32> to vector<8x128xf32>
    %198 = arith.mulf %197, %180 : vector<8x128xf32>
    %199 = arith.addf %194, %198 : vector<8x128xf32>
    %c0_153 = arith.constant 0 : index
    %c0_154 = arith.constant 0 : index
    %200 = vector.load %arg16[%c0_153, %c0_154] : memref<8x128xf32, #tpu.memory_space<vmem>>, vector<8x128xf32>
    tpu.vector_store %arg16[%c0_153, %c0_154], %199 {strides = array<i32>} : memref<8x128xf32, #tpu.memory_space<vmem>>, vector<8x128xf32>,
    return
  }
  func.func @transform_0(%arg0: i32) -> (i32, i32) {
    %c0_i32 = arith.constant 0 : i32
    %c0_i32_0 = arith.constant 0 : i32
    return %arg0, %c0_i32 : i32, i32
  }
  func.func @transform_1(%arg0: i32) -> (i32, i32) {
    %c0_i32 = arith.constant 0 : i32
    %c0_i32_0 = arith.constant 0 : i32
    return %arg0, %c0_i32 : i32, i32
  }
  func.func @transform_2(%arg0: i32) -> (i32, i32, i32) {
    %c0_i32 = arith.constant 0 : i32
    %c0_i32_0 = arith.constant 0 : i32
    %c0_i32_1 = arith.constant 0 : i32
    %c0_i32_2 = arith.constant 0 : i32
    return %c0_i32, %c0_i32_0, %c0_i32_1 : i32, i32, i32
  }
  func.func @transform_3(%arg0: i32) -> (i32, i32, i32) {
    %c0_i32 = arith.constant 0 : i32
    %c0_i32_0 = arith.constant 0 : i32
    %c0_i32_1 = arith.constant 0 : i32
    %c0_i32_2 = arith.constant 0 : i32
    return %c0_i32, %c0_i32_0, %c0_i32_1 : i32, i32, i32
  }
  func.func @transform_4(%arg0: i32) -> (i32, i32) {
    %c0_i32 = arith.constant 0 : i32
    %c0_i32_0 = arith.constant 0 : i32
    %c0_i32_1 = arith.constant 0 : i32
    return %c0_i32, %c0_i32_0 : i32, i32
  }
  func.func @transform_5(%arg0: i32) -> (i32, i32, i32) {
    %c0_i32 = arith.constant 0 : i32
    %c0_i32_0 = arith.constant 0 : i32
    %c0_i32_1 = arith.constant 0 : i32
    %c0_i32_2 = arith.constant 0 : i32
    return %c0_i32, %c0_i32_0, %c0_i32_1 : i32, i32, i32
  }
  func.func @transform_6(%arg0: i32) -> (i32, i32, i32) {
    %c0_i32 = arith.constant 0 : i32
    %c0_i32_0 = arith.constant 0 : i32
    %c0_i32_1 = arith.constant 0 : i32
    %c0_i32_2 = arith.constant 0 : i32
    return %c0_i32, %c0_i32_0, %c0_i32_1 : i32, i32, i32
  }
  func.func @transform_7(%arg0: i32) -> (i32, i32) {
    %c0_i32 = arith.constant 0 : i32
    %c0_i32_0 = arith.constant 0 : i32
    %c0_i32_1 = arith.constant 0 : i32
    return %c0_i32, %c0_i32_0 : i32, i32
  }
  func.func @transform_8(%arg0: i32) -> (i32, i32, i32) {
    %c0_i32 = arith.constant 0 : i32
    %c0_i32_0 = arith.constant 0 : i32
    %c0_i32_1 = arith.constant 0 : i32
    %c0_i32_2 = arith.constant 0 : i32
    return %c0_i32, %c0_i32_0, %c0_i32_1 : i32, i32, i32
  }
  func.func @transform_9(%arg0: i32) -> (i32, i32) {
    %c0_i32 = arith.constant 0 : i32
    %c0_i32_0 = arith.constant 0 : i32
    %c0_i32_1 = arith.constant 0 : i32
    return %c0_i32, %c0_i32_0 : i32, i32
  }
  func.func @transform_10(%arg0: i32) -> (i32, i32) {
    %c0_i32 = arith.constant 0 : i32
    %c0_i32_0 = arith.constant 0 : i32
    %c0_i32_1 = arith.constant 0 : i32
    return %c0_i32, %c0_i32_0 : i32, i32
  }
  func.func @transform_11(%arg0: i32) -> (i32, i32) {
    %c0_i32 = arith.constant 0 : i32
    %c0_i32_0 = arith.constant 0 : i32
    %c0_i32_1 = arith.constant 0 : i32
    return %c0_i32, %c0_i32_0 : i32, i32
  }
  func.func @transform_12(%arg0: i32) -> (i32, i32) {
    %c0_i32 = arith.constant 0 : i32
    %c0_i32_0 = arith.constant 0 : i32
    %c0_i32_1 = arith.constant 0 : i32
    return %c0_i32, %c0_i32_0 : i32, i32
  }
  func.func @transform_13(%arg0: i32) -> (i32, i32) {
    %c0_i32 = arith.constant 0 : i32
    %c0_i32_0 = arith.constant 0 : i32
    %c0_i32_1 = arith.constant 0 : i32
    return %c0_i32, %c0_i32_0 : i32, i32
  }
  func.func @transform_14(%arg0: i32) -> (i32, i32) {
    %c0_i32 = arith.constant 0 : i32
    %c0_i32_0 = arith.constant 0 : i32
    %c0_i32_1 = arith.constant 0 : i32
    return %c0_i32, %c0_i32_0 : i32, i32
  }
  func.func @transform_15(%arg0: i32) -> (i32, i32) {
    %c0_i32 = arith.constant 0 : i32
    %c0_i32_0 = arith.constant 0 : i32
    return %arg0, %c0_i32 : i32, i32
  }
}

</mosaic_0001>

<llo_original>
// kernel: fwd.1
$region0: #{fwd.1}
  #allocation0 [shape = 'u32[]', space=smem, size = 0x4, offset = 0x4, fixed_abs, tag = 'smem constant byte address 0x4 - core index']
  #allocation1 [shape = 'u32[144,128]{1,0:T(1,128)}', space=vmem, size = 0x12000, scoped, tag = 'internal scratch']
  %s0 = inlined_call_operand.vmem [shape: bf16[8,324], index: 0, kind: input, shape index: {}]
  %s1 = inlined_call_operand.vmem [shape: bf16[8,256], index: 1, kind: input, shape index: {}]
  %s2 = inlined_call_operand.vmem [shape: bf16[3,324,144], index: 2, kind: input, shape index: {}]
  %s3 = inlined_call_operand.vmem [shape: bf16[3,144,64], index: 3, kind: input, shape index: {}]
  %s4 = inlined_call_operand.hbm [shape: bf16[64,25], index: 4, kind: input, shape index: {}]
  %s5 = inlined_call_operand.hbm [shape: bf16[4,256,80], index: 5, kind: input, shape index: {}]
  %s6 = inlined_call_operand.vmem [shape: bf16[4,80,25], index: 6, kind: input, shape index: {}]
  %s7 = inlined_call_operand.hbm [shape: bf16[25,25], index: 7, kind: input, shape index: {}]
  %s8 = inlined_call_operand.hbm [shape: bf16[9,25,128], index: 8, kind: input, shape index: {}]
  %s9 = inlined_call_operand.vmem [shape: bf16[8,8], index: 9, kind: input, shape index: {}]
  %s10 = inlined_call_operand.vmem [shape: f32[8,1], index: 10, kind: input, shape index: {}]
  %s11 = inlined_call_operand.vmem [shape: bf16[72,8], index: 11, kind: input, shape index: {}]
  %s12 = inlined_call_operand.vmem [shape: f32[8,128], index: 12, kind: input, shape index: {}]
  %s13 = inlined_call_operand.vmem [shape: f32[8,1], index: 13, kind: input, shape index: {}]
  %s14 = inlined_call_operand.vmem [shape: f32[8,8], index: 14, kind: input, shape index: {}]
  %s15 = inlined_call_operand.vmem [shape: f32[8,128], index: 15, kind: output, shape index: {}]
  %s16 = sld [smem:[#allocation0]]
  $region86: #{fwd.1} parent=0
    _
  %s18 = ssub.s32 1, %s16
  %s19 = scalar_select 0, %s18, %s16
  $region1: #{fwd.1} parent=0
    #allocation2 [shape = 'u8[16384]{0}', space=vmem, size = 0x4000, scoped, tag = 'input window, operand 4, single buffered']
    #allocation3 [shape = 's32[1]{0}', space=sflag, size = 0x4, scoped, tag = 'scoped memory for fwd.1']
    #allocation4 [shape = 'u8[262144]{0}', space=vmem, size = 0x40000, scoped, tag = 'input window, operand 5, single buffered']
    #allocation5 [shape = 's32[1]{0}', space=sflag, size = 0x4, scoped, tag = 'scoped memory for fwd.1']
    #allocation6 [shape = 'u8[8192]{0}', space=vmem, size = 0x2000, scoped, tag = 'input window, operand 7, single buffered']
    #allocation7 [shape = 'u8[73728]{0}', space=vmem, size = 0x12000, scoped, tag = 'input window, operand 8, single buffered']
    #allocation8 [shape = 's32[1]{0}', space=sflag, size = 0x4, scoped, tag = 'scoped memory for fwd.1']
    %20 = vsyncpa [#allocation3], 0
    %21 = vsyncpa [#allocation5], 0
    %22 = vsyncpa [#allocation8], 0
    // Predicated region
    $region2: #{fwd.1} parent=1 // pred_check
      _
    $region3: #{fwd.1} parent=1 // pred_check_branch
      %24 = sbr.rel (0) target = $region5
    $region4: #{fwd.1} parent=1 // pred_region
      _
    $region5: #{fwd.1} parent=1 // pred_fallthru
      _
    // Predicated region
    $region6: #{fwd.1} parent=1 // pred_check
      _
    $region7: #{fwd.1} parent=1 // pred_check_branch
      %26 = sbr.rel (0) target = $region9
    $region8: #{fwd.1} parent=1 // pred_region
      _
    $region9: #{fwd.1} parent=1 // pred_fallthru
      _
    // Predicated region
    $region10: #{fwd.1} parent=1 // pred_check
      _
    $region11: #{fwd.1} parent=1 // pred_check_branch
      %28 = sbr.rel (0) target = $region13
    $region12: #{fwd.1} parent=1 // pred_region
      _
    $region13: #{fwd.1} parent=1 // pred_fallthru
      _
    // Predicated region
    $region14: #{fwd.1} parent=1 // pred_check
      _
    $region15: #{fwd.1} parent=1 // pred_check_branch
      %30 = sbr.rel (0) target = $region17
    $region16: #{fwd.1} parent=1 // pred_region
      _
    $region17: #{fwd.1} parent=1 // pred_fallthru
      _
    // Predicated region
    $region18: #{fwd.1} parent=1 // pred_check
      _
    $region19: #{fwd.1} parent=1 // pred_check_branch
      %32 = sbr.rel (0) target = $region21
    $region20: #{fwd.1} parent=1 // pred_region
      %s34 = ssub.s32 512, 512
      %35 = vsyncadd [#allocation3], %s34
      %s36 = sshll.u32 [#allocation2], 4
      %s37 = int_to_ptr.vmem [resolvable:$true] %s36
      %42 = dma.hbm_to_vmem [thread:$0]  %s4, 512, %s37, [#allocation3], 64, 64, 4
    $region21: #{fwd.1} parent=1 // pred_fallthru
      _
    // Predicated region
    $region22: #{fwd.1} parent=1 // pred_check
      _
    $region23: #{fwd.1} parent=1 // pred_check_branch
      %44 = sbr.rel (0) target = $region25
    $region24: #{fwd.1} parent=1 // pred_region
      %s46 = ssub.s32 8192, 8192
      %47 = vsyncadd [#allocation5], %s46
      %s48 = sshll.u32 [#allocation4], 4
      %s49 = int_to_ptr.vmem [resolvable:$true] %s48
      %54 = dma.hbm_to_vmem [thread:$0]  %s5, 8192, %s49, [#allocation5], 64, 64, 4
    $region25: #{fwd.1} parent=1 // pred_fallthru
      _
    // Predicated region
    $region26: #{fwd.1} parent=1 // pred_check
      _
    $region27: #{fwd.1} parent=1 // pred_check_branch
      %56 = sbr.rel (0) target = $region29
    $region28: #{fwd.1} parent=1 // pred_region
      _
    $region29: #{fwd.1} parent=1 // pred_fallthru
      _
    // Predicated region
    $region30: #{fwd.1} parent=1 // pred_check
      _
    $region31: #{fwd.1} parent=1 // pred_check_branch
      %58 = sbr.rel (0) target = $region33
    $region32: #{fwd.1} parent=1 // pred_region
      %s60 = ssub.s32 256, 256
      %61 = vsyncadd [#allocation5], %s60
      %s62 = sshll.u32 [#allocation6], 4
      %s63 = int_to_ptr.vmem [resolvable:$true] %s62
      %68 = dma.hbm_to_vmem [thread:$0]  %s7, 256, %s63, [#allocation5], 64, 64, 4
    $region33: #{fwd.1} parent=1 // pred_fallthru
      _
    // Predicated region
    $region34: #{fwd.1} parent=1 // pred_check
      _
    $region35: #{fwd.1} parent=1 // pred_check_branch
      %70 = sbr.rel (0) target = $region37
    $region36: #{fwd.1} parent=1 // pred_region
      %s72 = ssub.s32 2304, 2304
      %73 = vsyncadd [#allocation8], %s72
      %s74 = sshll.u32 [#allocation7], 4
      %s75 = int_to_ptr.vmem [resolvable:$true] %s74
      %80 = dma.hbm_to_vmem [thread:$0]  %s8, 2304, %s75, [#allocation8], 64, 64, 4
    $region37: #{fwd.1} parent=1 // pred_fallthru
      _
    // Predicated region
    $region38: #{fwd.1} parent=1 // pred_check
      _
    $region39: #{fwd.1} parent=1 // pred_check_branch
      %82 = sbr.rel (0) target = $region41
    $region40: #{fwd.1} parent=1 // pred_region
      _
    $region41: #{fwd.1} parent=1 // pred_fallthru
      _
    // Predicated region
    $region42: #{fwd.1} parent=1 // pred_check
      _
    $region43: #{fwd.1} parent=1 // pred_check_branch
      %84 = sbr.rel (0) target = $region45
    $region44: #{fwd.1} parent=1 // pred_region
      _
    $region45: #{fwd.1} parent=1 // pred_fallthru
      _
    // Predicated region
    $region46: #{fwd.1} parent=1 // pred_check
      _
    $region47: #{fwd.1} parent=1 // pred_check_branch
      %86 = sbr.rel (0) target = $region49
    $region48: #{fwd.1} parent=1 // pred_region
      _
    $region49: #{fwd.1} parent=1 // pred_fallthru
      _
    // Predicated region
    $region50: #{fwd.1} parent=1 // pred_check
      _
    $region51: #{fwd.1} parent=1 // pred_check_branch
      %88 = sbr.rel (0) target = $region53
    $region52: #{fwd.1} parent=1 // pred_region
      _
    $region53: #{fwd.1} parent=1 // pred_fallthru
      _
    // Predicated region
    $region54: #{fwd.1} parent=1 // pred_check
      _
    $region55: #{fwd.1} parent=1 // pred_check_branch
      %90 = sbr.rel (0) target = $region57
    $region56: #{fwd.1} parent=1 // pred_region
      _
    $region57: #{fwd.1} parent=1 // pred_fallthru
      _
    // Predicated region
    $region58: #{fwd.1} parent=1 // pred_check
      _
    $region59: #{fwd.1} parent=1 // pred_check_branch
      %92 = sbr.rel (0) target = $region61
    $region60: #{fwd.1} parent=1 // pred_region
      _
    $region61: #{fwd.1} parent=1 // pred_fallthru
      _
    // Predicated region
    $region62: #{fwd.1} parent=1 // pred_check
      _
    $region63: #{fwd.1} parent=1 // pred_check_branch
      %94 = sbr.rel (0) target = $region65
    $region64: #{fwd.1} parent=1 // pred_region
      %95 = dma.done [#allocation3], 512
    $region65: #{fwd.1} parent=1 // pred_fallthru
      _
    // Predicated region
    $region66: #{fwd.1} parent=1 // pred_check
      _
    $region67: #{fwd.1} parent=1 // pred_check_branch
      %97 = sbr.rel (0) target = $region69
    $region68: #{fwd.1} parent=1 // pred_region
      %98 = dma.done [#allocation5], 8192
    $region69: #{fwd.1} parent=1 // pred_fallthru
      _
    // Predicated region
    $region70: #{fwd.1} parent=1 // pred_check
      _
    $region71: #{fwd.1} parent=1 // pred_check_branch
      %100 = sbr.rel (0) target = $region73
    $region72: #{fwd.1} parent=1 // pred_region
      %101 = dma.done [#allocation5], 256
    $region73: #{fwd.1} parent=1 // pred_fallthru
      _
    // Predicated region
    $region74: #{fwd.1} parent=1 // pred_check
      _
    $region75: #{fwd.1} parent=1 // pred_check_branch
      %103 = sbr.rel (0) target = $region77
    $region76: #{fwd.1} parent=1 // pred_region
      %104 = dma.done [#allocation8], 2304
    $region77: #{fwd.1} parent=1 // pred_fallthru
      _
    %v106 = vld [vmem:[%s0] sm:$0xff]
    %v107 = vld [vmem:[%s0 + $0x8] sm:$0xf]
    %v108 = vld [vmem:[%s2] sm:$0xff]
    %v109 = vld [vmem:[%s2 + $0x8] sm:$0xff]
    %v110 = vld [vmem:[%s2 + $0x10] sm:$0xff]
    %v111 = vld [vmem:[%s2 + $0x18] sm:$0xff]
    %v112 = vld [vmem:[%s2 + $0x20] sm:$0xff]
    %v113 = vld [vmem:[%s2 + $0x28] sm:$0xff]
    %v114 = vld [vmem:[%s2 + $0x30] sm:$0xff]
    %v115 = vld [vmem:[%s2 + $0x38] sm:$0xff]
    %v116 = vld [vmem:[%s2 + $0x40] sm:$0xff]
    %v117 = vld [vmem:[%s2 + $0x48] sm:$0xff]
    %v118 = vld [vmem:[%s2 + $0x50] sm:$0xff]
    %v119 = vld [vmem:[%s2 + $0x58] sm:$0xff]
    %v120 = vld [vmem:[%s2 + $0x60] sm:$0xff]
    %v121 = vld [vmem:[%s2 + $0x68] sm:$0xff]
    %v122 = vld [vmem:[%s2 + $0x70] sm:$0xff]
    %v123 = vld [vmem:[%s2 + $0x78] sm:$0xff]
    %v124 = vld [vmem:[%s2 + $0x80] sm:$0xff]
    %v125 = vld [vmem:[%s2 + $0x88] sm:$0xff]
    %v126 = vld [vmem:[%s2 + $0x90] sm:$0xff]
    %v127 = vld [vmem:[%s2 + $0x98] sm:$0xff]
    %v128 = vld [vmem:[%s2 + $0xa0] sm:$0xff]
    %v129 = vld [vmem:[%s2 + $0xa8] sm:$0xff]
    %v130 = vld [vmem:[%s2 + $0xb0] sm:$0xff]
    %v131 = vld [vmem:[%s2 + $0xb8] sm:$0xff]
    %v132 = vld [vmem:[%s2 + $0xc0] sm:$0xff]
    %v133 = vld [vmem:[%s2 + $0xc8] sm:$0xff]
    %v134 = vld [vmem:[%s2 + $0xd0] sm:$0xff]
    %v135 = vld [vmem:[%s2 + $0xd8] sm:$0xff]
    %v136 = vld [vmem:[%s2 + $0xe0] sm:$0xff]
    %v137 = vld [vmem:[%s2 + $0xe8] sm:$0xff]
    %v138 = vld [vmem:[%s2 + $0xf0] sm:$0xff]
    %v139 = vld [vmem:[%s2 + $0xf8] sm:$0xff]
    %v140 = vld [vmem:[%s2 + $0x100] sm:$0xff]
    %v141 = vld [vmem:[%s2 + $0x108] sm:$0xff]
    %v142 = vld [vmem:[%s2 + $0x110] sm:$0xff]
    %v143 = vld [vmem:[%s2 + $0x118] sm:$0xff]
    %v144 = vld [vmem:[%s2 + $0x120] sm:$0xff]
    %v145 = vld [vmem:[%s2 + $0x128] sm:$0xff]
    %v146 = vld [vmem:[%s2 + $0x130] sm:$0xff]
    %v147 = vld [vmem:[%s2 + $0x138] sm:$0xff]
    %v148 = vld [vmem:[%s2 + $0x140] sm:$0x33]
    %v151 = vunpack.c.l.b16 %v106
    %v152 = vunpack.c.h.b16 %v106
    %v153 = vunpack.c.l.b16 %v107
    %v154 = vpack.c.b16 %v151, %v151
    %v155 = vpack.c.b16 %v152, %v152
    %v156 = vpack.c.b16 %v153, %v153
    %v200 = vunpack.c.l.b16 %v108
    %v201 = vunpack.c.h.b16 %v108
    %v202 = vunpack.c.l.b16 %v109
    %v203 = vunpack.c.h.b16 %v109
    %v204 = vunpack.c.l.b16 %v110
    %v205 = vunpack.c.h.b16 %v110
    %v206 = vunpack.c.l.b16 %v111
    %v207 = vunpack.c.h.b16 %v111
    %v208 = vunpack.c.l.b16 %v112
    %v209 = vunpack.c.h.b16 %v112
    %v210 = vunpack.c.l.b16 %v113
    %v211 = vunpack.c.h.b16 %v113
    %v212 = vunpack.c.l.b16 %v114
    %v213 = vunpack.c.h.b16 %v114
    %v214 = vunpack.c.l.b16 %v115
    %v215 = vunpack.c.h.b16 %v115
    %v216 = vunpack.c.l.b16 %v116
    %v217 = vunpack.c.h.b16 %v116
    %v218 = vunpack.c.l.b16 %v117
    %v219 = vunpack.c.h.b16 %v117
    %v220 = vunpack.c.l.b16 %v118
    %v221 = vunpack.c.h.b16 %v118
    %v222 = vunpack.c.l.b16 %v119
    %v223 = vunpack.c.h.b16 %v119
    %v224 = vunpack.c.l.b16 %v120
    %v225 = vunpack.c.h.b16 %v120
    %v226 = vunpack.c.l.b16 %v121
    %v227 = vunpack.c.h.b16 %v121
    %v228 = vunpack.c.l.b16 %v122
    %v229 = vunpack.c.h.b16 %v122
    %v230 = vunpack.c.l.b16 %v123
    %v231 = vunpack.c.h.b16 %v123
    %v232 = vunpack.c.l.b16 %v124
    %v233 = vunpack.c.h.b16 %v124
    %v234 = vunpack.c.l.b16 %v125
    %v235 = vunpack.c.h.b16 %v125
    %v236 = vunpack.c.l.b16 %v126
    %v237 = vunpack.c.h.b16 %v126
    %v238 = vunpack.c.l.b16 %v127
    %v239 = vunpack.c.h.b16 %v127
    %v240 = vunpack.c.l.b16 %v128
    %v241 = vunpack.c.h.b16 %v128
    %v242 = vunpack.c.l.b16 %v129
    %v243 = vunpack.c.h.b16 %v129
    %v244 = vunpack.c.l.b16 %v130
    %v245 = vunpack.c.h.b16 %v130
    %v246 = vunpack.c.l.b16 %v131
    %v247 = vunpack.c.h.b16 %v131
    %v248 = vunpack.c.l.b16 %v132
    %v249 = vunpack.c.h.b16 %v132
    %v250 = vunpack.c.l.b16 %v133
    %v251 = vunpack.c.h.b16 %v133
    %v252 = vunpack.c.l.b16 %v134
    %v253 = vunpack.c.h.b16 %v134
    %v254 = vunpack.c.l.b16 %v135
    %v255 = vunpack.c.h.b16 %v135
    %v256 = vunpack.c.l.b16 %v136
    %v257 = vunpack.c.h.b16 %v136
    %v258 = vunpack.c.l.b16 %v137
    %v259 = vunpack.c.h.b16 %v137
    %v260 = vunpack.c.l.b16 %v138
    %v261 = vunpack.c.h.b16 %v138
    %v262 = vunpack.c.l.b16 %v139
    %v263 = vunpack.c.h.b16 %v139
    %v264 = vunpack.c.l.b16 %v140
    %v265 = vunpack.c.h.b16 %v140
    %v266 = vunpack.c.l.b16 %v141
    %v267 = vunpack.c.h.b16 %v141
    %v268 = vunpack.c.l.b16 %v142
    %v269 = vunpack.c.h.b16 %v142
    %v270 = vunpack.c.l.b16 %v143
    %v271 = vunpack.c.h.b16 %v143
    %v272 = vunpack.c.l.b16 %v144
    %v273 = vunpack.c.h.b16 %v144
    %v274 = vunpack.c.l.b16 %v145
    %v275 = vunpack.c.h.b16 %v145
    %v276 = vunpack.c.l.b16 %v146
    %v277 = vunpack.c.h.b16 %v146
    %v278 = vunpack.c.l.b16 %v147
    %v279 = vunpack.c.h.b16 %v147
    %v280 = vunpack.c.l.b16 %v148
    %v281 = vunpack.c.h.b16 %v148
    %v282 = vpack.c.b16 %v202, %v200
    %v283 = vpack.c.b16 %v203, %v201
    %v284 = vpack.c.b16 %v206, %v204
    %v285 = vpack.c.b16 %v207, %v205
    %v286 = vpack.c.b16 %v210, %v208
    %v287 = vpack.c.b16 %v211, %v209
    %v288 = vpack.c.b16 %v214, %v212
    %v289 = vpack.c.b16 %v215, %v213
    %v290 = vpack.c.b16 %v218, %v216
    %v291 = vpack.c.b16 %v219, %v217
    %v292 = vpack.c.b16 %v222, %v220
    %v293 = vpack.c.b16 %v223, %v221
    %v294 = vpack.c.b16 %v226, %v224
    %v295 = vpack.c.b16 %v227, %v225
    %v296 = vpack.c.b16 %v230, %v228
    %v297 = vpack.c.b16 %v231, %v229
    %v298 = vpack.c.b16 %v234, %v232
    %v299 = vpack.c.b16 %v235, %v233
    %v300 = vpack.c.b16 %v238, %v236
    %v301 = vpack.c.b16 %v239, %v237
    %v302 = vpack.c.b16 %v242, %v240
    %v303 = vpack.c.b16 %v243, %v241
    %v304 = vpack.c.b16 %v246, %v244
    %v305 = vpack.c.b16 %v247, %v245
    %v306 = vpack.c.b16 %v250, %v248
    %v307 = vpack.c.b16 %v251, %v249
    %v308 = vpack.c.b16 %v254, %v252
    %v309 = vpack.c.b16 %v255, %v253
    %v310 = vpack.c.b16 %v258, %v256
    %v311 = vpack.c.b16 %v259, %v257
    %v312 = vpack.c.b16 %v262, %v260
    %v313 = vpack.c.b16 %v263, %v261
    %v314 = vpack.c.b16 %v266, %v264
    %v315 = vpack.c.b16 %v267, %v265
    %v316 = vpack.c.b16 %v270, %v268
    %v317 = vpack.c.b16 %v271, %v269
    %v318 = vpack.c.b16 %v274, %v272
    %v319 = vpack.c.b16 %v275, %v273
    %v320 = vpack.c.b16 %v278, %v276
    %v321 = vpack.c.b16 %v279, %v277
    %v322 = vpack.c.b16 %v280, %v280
    %v323 = vpack.c.b16 %v281, %v281
    %vm364 = vcmask 556032
    %v366 = vsel %vm364, %v156, 0
    %vm368 = vcmask 1041408
    %v370 = vsel %vm368, %v322, 0
    %v373 = vsel %vm368, %v323, 0
    %375 = vmatprep.subr.bf16.mxu0 %v297
    %376 = vmatpush1.bf16.msra.mxu0 %v296
    %377 = vmatprep.subr.bf16.mxu0 %v295
    %378 = vmatpush1.bf16.msra.mxu0 %v294
    %379 = vmatprep.subr.bf16.mxu0 %v293
    %380 = vmatpush1.bf16.msra.mxu0 %v292
    %381 = vmatprep.subr.bf16.mxu0 %v291
    %382 = vmatpush1.bf16.msra.mxu0 %v290
    %383 = vmatprep.subr.bf16.mxu0 %v289
    %384 = vmatpush1.bf16.msra.mxu0 %v288
    %385 = vmatprep.subr.bf16.mxu0 %v287
    %386 = vmatpush1.bf16.msra.mxu0 %v286
    %387 = vmatprep.subr.bf16.mxu0 %v285
    %388 = vmatpush1.bf16.msra.mxu0 %v284
    %389 = vmatprep.subr.bf16.mxu0 %v283
    %390 = vmatpush1.bf16.msra.mxu0 %v282
    %391 = vmatprep.subr.bf16.mxu0 %v313
    %392 = vmatpush2.bf16.msra.mxu0 %v312
    %393 = vmatprep.subr.bf16.mxu0 %v311
    %394 = vmatpush2.bf16.msra.mxu0 %v310
    %395 = vmatprep.subr.bf16.mxu0 %v309
    %396 = vmatpush2.bf16.msra.mxu0 %v308
    %397 = vmatprep.subr.bf16.mxu0 %v307
    %398 = vmatpush2.bf16.msra.mxu0 %v306
    %399 = vmatprep.subr.bf16.mxu0 %v305
    %400 = vmatpush2.bf16.msra.mxu0 %v304
    %401 = vmatprep.subr.bf16.mxu0 %v303
    %402 = vmatpush2.bf16.msra.mxu0 %v302
    %403 = vmatprep.subr.bf16.mxu0 %v301
    %404 = vmatpush2.bf16.msra.mxu0 %v300
    %405 = vmatprep.subr.bf16.mxu0 %v299
    %406 = vmatpush2.bf16.msra.mxu0 %v298
    %407 = vmatprep.mubr.bf16.mxu0 %v155
    %408 = vmatmul.mubr.bf16.gmra.mxu0 %v154
    %v409 = vpop.f32.mrf.mxu0
    %v410 = vadd.f32 0.0, %v409
    %v411 = vpop.f32.mrf.mxu0
    %v412 = vadd.f32 0.0, %v411
    %v413 = vpop.f32.mrf.mxu0
    %v414 = vpop.f32.mrf.mxu0
    %415 = vdwg.mxu0
    %416 = vmatprep.subr.bf16.mxu0 0
    %417 = vmatpush1.bf16.msra.mxu0 0
    %418 = vmatprep.subr.bf16.mxu0 0
    %419 = vmatpush1.bf16.msra.mxu0 0
    %420 = vmatprep.subr.bf16.mxu0 0
    %421 = vmatpush1.bf16.msra.mxu0 0
    %422 = vmatprep.subr.bf16.mxu0 %v373
    %423 = vmatpush1.bf16.msra.mxu0 %v370
    %424 = vmatprep.subr.bf16.mxu0 %v321
    %425 = vmatpush1.bf16.msra.mxu0 %v320
    %426 = vmatprep.subr.bf16.mxu0 %v319
    %427 = vmatpush1.bf16.msra.mxu0 %v318
    %428 = vmatprep.subr.bf16.mxu0 %v317
    %429 = vmatpush1.bf16.msra.mxu0 %v316
    %430 = vmatprep.subr.bf16.mxu0 %v315
    %431 = vmatpush1.bf16.msra.mxu0 %v314
    %432 = vmatprep.subr.bf16.mxu0 0
    %433 = vmatpush2.bf16.msra.mxu0 0
    %434 = vmatprep.subr.bf16.mxu0 0
    %435 = vmatpush2.bf16.msra.mxu0 0
    %436 = vmatprep.subr.bf16.mxu0 0
    %437 = vmatpush2.bf16.msra.mxu0 0
    %438 = vmatprep.subr.bf16.mxu0 0
    %439 = vmatpush2.bf16.msra.mxu0 0
    %440 = vmatprep.subr.bf16.mxu0 0
    %441 = vmatpush2.bf16.msra.mxu0 0
    %442 = vmatprep.subr.bf16.mxu0 0
    %443 = vmatpush2.bf16.msra.mxu0 0
    %444 = vmatprep.subr.bf16.mxu0 0
    %445 = vmatpush2.bf16.msra.mxu0 0
    %446 = vmatprep.subr.bf16.mxu0 0
    %447 = vmatpush2.bf16.msra.mxu0 0
    %448 = vmatprep.mubr.bf16.mxu0 0
    %449 = vmatmul.mubr.bf16.gmra.mxu0 %v366
    %v450 = vpop.f32.mrf.mxu0
    %v451 = vadd.f32 %v410, %v450
    %v452 = vpop.f32.mrf.mxu0
    %v453 = vadd.f32 %v412, %v452
    %v454 = vpop.f32.mrf.mxu0
    %v455 = vpop.f32.mrf.mxu0
    %456 = vdwg.mxu0
    %s457 = scalar_lea.vmem %s2, 328
    %v458 = vld [vmem:[%s457] sm:$0xff]
    %v459 = vld [vmem:[%s457 + $0x8] sm:$0xff]
    %v460 = vld [vmem:[%s457 + $0x10] sm:$0xff]
    %v461 = vld [vmem:[%s457 + $0x18] sm:$0xff]
    %v462 = vld [vmem:[%s457 + $0x20] sm:$0xff]
    %v463 = vld [vmem:[%s457 + $0x28] sm:$0xff]
    %v464 = vld [vmem:[%s457 + $0x30] sm:$0xff]
    %v465 = vld [vmem:[%s457 + $0x38] sm:$0xff]
    %v466 = vld [vmem:[%s457 + $0x40] sm:$0xff]
    %v467 = vld [vmem:[%s457 + $0x48] sm:$0xff]
    %v468 = vld [vmem:[%s457 + $0x50] sm:$0xff]
    %v469 = vld [vmem:[%s457 + $0x58] sm:$0xff]
    %v470 = vld [vmem:[%s457 + $0x60] sm:$0xff]
    %v471 = vld [vmem:[%s457 + $0x68] sm:$0xff]
    %v472 = vld [vmem:[%s457 + $0x70] sm:$0xff]
    %v473 = vld [vmem:[%s457 + $0x78] sm:$0xff]
    %v474 = vld [vmem:[%s457 + $0x80] sm:$0xff]
    %v475 = vld [vmem:[%s457 + $0x88] sm:$0xff]
    %v476 = vld [vmem:[%s457 + $0x90] sm:$0xff]
    %v477 = vld [vmem:[%s457 + $0x98] sm:$0xff]
    %v478 = vld [vmem:[%s457 + $0xa0] sm:$0xff]
    %v479 = vld [vmem:[%s457 + $0xa8] sm:$0xff]
    %v480 = vld [vmem:[%s457 + $0xb0] sm:$0xff]
    %v481 = vld [vmem:[%s457 + $0xb8] sm:$0xff]
    %v482 = vld [vmem:[%s457 + $0xc0] sm:$0xff]
    %v483 = vld [vmem:[%s457 + $0xc8] sm:$0xff]
    %v484 = vld [vmem:[%s457 + $0xd0] sm:$0xff]
    %v485 = vld [vmem:[%s457 + $0xd8] sm:$0xff]
    %v486 = vld [vmem:[%s457 + $0xe0] sm:$0xff]
    %v487 = vld [vmem:[%s457 + $0xe8] sm:$0xff]
    %v488 = vld [vmem:[%s457 + $0xf0] sm:$0xff]
    %v489 = vld [vmem:[%s457 + $0xf8] sm:$0xff]
    %v490 = vld [vmem:[%s457 + $0x100] sm:$0xff]
    %v491 = vld [vmem:[%s457 + $0x108] sm:$0xff]
    %v492 = vld [vmem:[%s457 + $0x110] sm:$0xff]
    %v493 = vld [vmem:[%s457 + $0x118] sm:$0xff]
    %v494 = vld [vmem:[%s457 + $0x120] sm:$0xff]
    %v495 = vld [vmem:[%s457 + $0x128] sm:$0xff]
    %v496 = vld [vmem:[%s457 + $0x130] sm:$0xff]
    %v497 = vld [vmem:[%s457 + $0x138] sm:$0xff]
    %v498 = vld [vmem:[%s457 + $0x140] sm:$0x33]
    %v540 = vunpack.c.l.b16 %v458
    %v541 = vunpack.c.h.b16 %v458
    %v542 = vunpack.c.l.b16 %v459
    %v543 = vunpack.c.h.b16 %v459
    %v544 = vunpack.c.l.b16 %v460
    %v545 = vunpack.c.h.b16 %v460
    %v546 = vunpack.c.l.b16 %v461
    %v547 = vunpack.c.h.b16 %v461
    %v548 = vunpack.c.l.b16 %v462
    %v549 = vunpack.c.h.b16 %v462
    %v550 = vunpack.c.l.b16 %v463
    %v551 = vunpack.c.h.b16 %v463
    %v552 = vunpack.c.l.b16 %v464
    %v553 = vunpack.c.h.b16 %v464
    %v554 = vunpack.c.l.b16 %v465
    %v555 = vunpack.c.h.b16 %v465
    %v556 = vunpack.c.l.b16 %v466
    %v557 = vunpack.c.h.b16 %v466
    %v558 = vunpack.c.l.b16 %v467
    %v559 = vunpack.c.h.b16 %v467
    %v560 = vunpack.c.l.b16 %v468
    %v561 = vunpack.c.h.b16 %v468
    %v562 = vunpack.c.l.b16 %v469
    %v563 = vunpack.c.h.b16 %v469
    %v564 = vunpack.c.l.b16 %v470
    %v565 = vunpack.c.h.b16 %v470
    %v566 = vunpack.c.l.b16 %v471
    %v567 = vunpack.c.h.b16 %v471
    %v568 = vunpack.c.l.b16 %v472
    %v569 = vunpack.c.h.b16 %v472
    %v570 = vunpack.c.l.b16 %v473
    %v571 = vunpack.c.h.b16 %v473
    %v572 = vunpack.c.l.b16 %v474
    %v573 = vunpack.c.h.b16 %v474
    %v574 = vunpack.c.l.b16 %v475
    %v575 = vunpack.c.h.b16 %v475
    %v576 = vunpack.c.l.b16 %v476
    %v577 = vunpack.c.h.b16 %v476
    %v578 = vunpack.c.l.b16 %v477
    %v579 = vunpack.c.h.b16 %v477
    %v580 = vunpack.c.l.b16 %v478
    %v581 = vunpack.c.h.b16 %v478
    %v582 = vunpack.c.l.b16 %v479
    %v583 = vunpack.c.h.b16 %v479
    %v584 = vunpack.c.l.b16 %v480
    %v585 = vunpack.c.h.b16 %v480
    %v586 = vunpack.c.l.b16 %v481
    %v587 = vunpack.c.h.b16 %v481
    %v588 = vunpack.c.l.b16 %v482
    %v589 = vunpack.c.h.b16 %v482
    %v590 = vunpack.c.l.b16 %v483
    %v591 = vunpack.c.h.b16 %v483
    %v592 = vunpack.c.l.b16 %v484
    %v593 = vunpack.c.h.b16 %v484
    %v594 = vunpack.c.l.b16 %v485
    %v595 = vunpack.c.h.b16 %v485
    %v596 = vunpack.c.l.b16 %v486
    %v597 = vunpack.c.h.b16 %v486
    %v598 = vunpack.c.l.b16 %v487
    %v599 = vunpack.c.h.b16 %v487
    %v600 = vunpack.c.l.b16 %v488
    %v601 = vunpack.c.h.b16 %v488
    %v602 = vunpack.c.l.b16 %v489
    %v603 = vunpack.c.h.b16 %v489
    %v604 = vunpack.c.l.b16 %v490
    %v605 = vunpack.c.h.b16 %v490
    %v606 = vunpack.c.l.b16 %v491
    %v607 = vunpack.c.h.b16 %v491
    %v608 = vunpack.c.l.b16 %v492
    %v609 = vunpack.c.h.b16 %v492
    %v610 = vunpack.c.l.b16 %v493
    %v611 = vunpack.c.h.b16 %v493
    %v612 = vunpack.c.l.b16 %v494
    %v613 = vunpack.c.h.b16 %v494
    %v614 = vunpack.c.l.b16 %v495
    %v615 = vunpack.c.h.b16 %v495
    %v616 = vunpack.c.l.b16 %v496
    %v617 = vunpack.c.h.b16 %v496
    %v618 = vunpack.c.l.b16 %v497
    %v619 = vunpack.c.h.b16 %v497
    %v620 = vunpack.c.l.b16 %v498
    %v621 = vunpack.c.h.b16 %v498
    %v622 = vpack.c.b16 %v542, %v540
    %v623 = vpack.c.b16 %v543, %v541
    %v624 = vpack.c.b16 %v546, %v544
    %v625 = vpack.c.b16 %v547, %v545
    %v626 = vpack.c.b16 %v550, %v548
    %v627 = vpack.c.b16 %v551, %v549
    %v628 = vpack.c.b16 %v554, %v552
    %v629 = vpack.c.b16 %v555, %v553
    %v630 = vpack.c.b16 %v558, %v556
    %v631 = vpack.c.b16 %v559, %v557
    %v632 = vpack.c.b16 %v562, %v560
    %v633 = vpack.c.b16 %v563, %v561
    %v634 = vpack.c.b16 %v566, %v564
    %v635 = vpack.c.b16 %v567, %v565
    %v636 = vpack.c.b16 %v570, %v568
    %v637 = vpack.c.b16 %v571, %v569
    %v638 = vpack.c.b16 %v574, %v572
    %v639 = vpack.c.b16 %v575, %v573
    %v640 = vpack.c.b16 %v578, %v576
    %v641 = vpack.c.b16 %v579, %v577
    %v642 = vpack.c.b16 %v582, %v580
    %v643 = vpack.c.b16 %v583, %v581
    %v644 = vpack.c.b16 %v586, %v584
    %v645 = vpack.c.b16 %v587, %v585
    %v646 = vpack.c.b16 %v590, %v588
    %v647 = vpack.c.b16 %v591, %v589
    %v648 = vpack.c.b16 %v594, %v592
    %v649 = vpack.c.b16 %v595, %v593
    %v650 = vpack.c.b16 %v598, %v596
    %v651 = vpack.c.b16 %v599, %v597
    %v652 = vpack.c.b16 %v602, %v600
    %v653 = vpack.c.b16 %v603, %v601
    %v654 = vpack.c.b16 %v606, %v604
    %v655 = vpack.c.b16 %v607, %v605
    %v656 = vpack.c.b16 %v610, %v608
    %v657 = vpack.c.b16 %v611, %v609
    %v658 = vpack.c.b16 %v614, %v612
    %v659 = vpack.c.b16 %v615, %v613
    %v660 = vpack.c.b16 %v618, %v616
    %v661 = vpack.c.b16 %v619, %v617
    %v662 = vpack.c.b16 %v620, %v620
    %v663 = vpack.c.b16 %v621, %v621
    %v705 = vsel %vm368, %v662, 0
    %v708 = vsel %vm368, %v663, 0
    %710 = vmatprep.subr.bf16.mxu0 %v637
    %711 = vmatpush1.bf16.msra.mxu0 %v636
    %712 = vmatprep.subr.bf16.mxu0 %v635
    %713 = vmatpush1.bf16.msra.mxu0 %v634
    %714 = vmatprep.subr.bf16.mxu0 %v633
    %715 = vmatpush1.bf16.msra.mxu0 %v632
    %716 = vmatprep.subr.bf16.mxu0 %v631
    %717 = vmatpush1.bf16.msra.mxu0 %v630
    %718 = vmatprep.subr.bf16.mxu0 %v629
    %719 = vmatpush1.bf16.msra.mxu0 %v628
    %720 = vmatprep.subr.bf16.mxu0 %v627
    %721 = vmatpush1.bf16.msra.mxu0 %v626
    %722 = vmatprep.subr.bf16.mxu0 %v625
    %723 = vmatpush1.bf16.msra.mxu0 %v624
    %724 = vmatprep.subr.bf16.mxu0 %v623
    %725 = vmatpush1.bf16.msra.mxu0 %v622
    %726 = vmatprep.subr.bf16.mxu0 %v653
    %727 = vmatpush2.bf16.msra.mxu0 %v652
    %728 = vmatprep.subr.bf16.mxu0 %v651
    %729 = vmatpush2.bf16.msra.mxu0 %v650
    %730 = vmatprep.subr.bf16.mxu0 %v649
    %731 = vmatpush2.bf16.msra.mxu0 %v648
    %732 = vmatprep.subr.bf16.mxu0 %v647
    %733 = vmatpush2.bf16.msra.mxu0 %v646
    %734 = vmatprep.subr.bf16.mxu0 %v645
    %735 = vmatpush2.bf16.msra.mxu0 %v644
    %736 = vmatprep.subr.bf16.mxu0 %v643
    %737 = vmatpush2.bf16.msra.mxu0 %v642
    %738 = vmatprep.subr.bf16.mxu0 %v641
    %739 = vmatpush2.bf16.msra.mxu0 %v640
    %740 = vmatprep.subr.bf16.mxu0 %v639
    %741 = vmatpush2.bf16.msra.mxu0 %v638
    %742 = vmatprep.mubr.bf16.mxu0 %v155
    %743 = vmatmul.mubr.bf16.gmra.mxu0 %v154
    %v744 = vpop.f32.mrf.mxu0
    %v745 = vadd.f32 0.0, %v744
    %v746 = vpop.f32.mrf.mxu0
    %v747 = vadd.f32 0.0, %v746
    %v748 = vpop.f32.mrf.mxu0
    %v749 = vpop.f32.mrf.mxu0
    %750 = vdwg.mxu0
    %751 = vmatprep.subr.bf16.mxu0 0
    %752 = vmatpush1.bf16.msra.mxu0 0
    %753 = vmatprep.subr.bf16.mxu0 0
    %754 = vmatpush1.bf16.msra.mxu0 0
    %755 = vmatprep.subr.bf16.mxu0 0
    %756 = vmatpush1.bf16.msra.mxu0 0
    %757 = vmatprep.subr.bf16.mxu0 %v708
    %758 = vmatpush1.bf16.msra.mxu0 %v705
    %759 = vmatprep.subr.bf16.mxu0 %v661
    %760 = vmatpush1.bf16.msra.mxu0 %v660
    %761 = vmatprep.subr.bf16.mxu0 %v659
    %762 = vmatpush1.bf16.msra.mxu0 %v658
    %763 = vmatprep.subr.bf16.mxu0 %v657
    %764 = vmatpush1.bf16.msra.mxu0 %v656
    %765 = vmatprep.subr.bf16.mxu0 %v655
    %766 = vmatpush1.bf16.msra.mxu0 %v654
    %767 = vmatprep.subr.bf16.mxu0 0
    %768 = vmatpush2.bf16.msra.mxu0 0
    %769 = vmatprep.subr.bf16.mxu0 0
    %770 = vmatpush2.bf16.msra.mxu0 0
    %771 = vmatprep.subr.bf16.mxu0 0
    %772 = vmatpush2.bf16.msra.mxu0 0
    %773 = vmatprep.subr.bf16.mxu0 0
    %774 = vmatpush2.bf16.msra.mxu0 0
    %775 = vmatprep.subr.bf16.mxu0 0
    %776 = vmatpush2.bf16.msra.mxu0 0
    %777 = vmatprep.subr.bf16.mxu0 0
    %778 = vmatpush2.bf16.msra.mxu0 0
    %779 = vmatprep.subr.bf16.mxu0 0
    %780 = vmatpush2.bf16.msra.mxu0 0
    %781 = vmatprep.subr.bf16.mxu0 0
    %782 = vmatpush2.bf16.msra.mxu0 0
    %783 = vmatprep.mubr.bf16.mxu0 0
    %784 = vmatmul.mubr.bf16.gmra.mxu0 %v366
    %v785 = vpop.f32.mrf.mxu0
    %v786 = vadd.f32 %v745, %v785
    %v787 = vpop.f32.mrf.mxu0
    %v788 = vadd.f32 %v747, %v787
    %v789 = vpop.f32.mrf.mxu0
    %v790 = vpop.f32.mrf.mxu0
    %791 = vdwg.mxu0
    %v792 = vmax.f32 %v451, %v786
    %v793 = vmax.f32 %v453, %v788
    %s794 = scalar_lea.vmem %s2, 656
    %v795 = vld [vmem:[%s794] sm:$0xff]
    %v796 = vld [vmem:[%s794 + $0x8] sm:$0xff]
    %v797 = vld [vmem:[%s794 + $0x10] sm:$0xff]
    %v798 = vld [vmem:[%s794 + $0x18] sm:$0xff]
    %v799 = vld [vmem:[%s794 + $0x20] sm:$0xff]
    %v800 = vld [vmem:[%s794 + $0x28] sm:$0xff]
    %v801 = vld [vmem:[%s794 + $0x30] sm:$0xff]
    %v802 = vld [vmem:[%s794 + $0x38] sm:$0xff]
    %v803 = vld [vmem:[%s794 + $0x40] sm:$0xff]
    %v804 = vld [vmem:[%s794 + $0x48] sm:$0xff]
    %v805 = vld [vmem:[%s794 + $0x50] sm:$0xff]
    %v806 = vld [vmem:[%s794 + $0x58] sm:$0xff]
    %v807 = vld [vmem:[%s794 + $0x60] sm:$0xff]
    %v808 = vld [vmem:[%s794 + $0x68] sm:$0xff]
    %v809 = vld [vmem:[%s794 + $0x70] sm:$0xff]
    %v810 = vld [vmem:[%s794 + $0x78] sm:$0xff]
    %v811 = vld [vmem:[%s794 + $0x80] sm:$0xff]
    %v812 = vld [vmem:[%s794 + $0x88] sm:$0xff]
    %v813 = vld [vmem:[%s794 + $0x90] sm:$0xff]
    %v814 = vld [vmem:[%s794 + $0x98] sm:$0xff]
    %v815 = vld [vmem:[%s794 + $0xa0] sm:$0xff]
    %v816 = vld [vmem:[%s794 + $0xa8] sm:$0xff]
    %v817 = vld [vmem:[%s794 + $0xb0] sm:$0xff]
    %v818 = vld [vmem:[%s794 + $0xb8] sm:$0xff]
    %v819 = vld [vmem:[%s794 + $0xc0] sm:$0xff]
    %v820 = vld [vmem:[%s794 + $0xc8] sm:$0xff]
    %v821 = vld [vmem:[%s794 + $0xd0] sm:$0xff]
    %v822 = vld [vmem:[%s794 + $0xd8] sm:$0xff]
    %v823 = vld [vmem:[%s794 + $0xe0] sm:$0xff]
    %v824 = vld [vmem:[%s794 + $0xe8] sm:$0xff]
    %v825 = vld [vmem:[%s794 + $0xf0] sm:$0xff]
    %v826 = vld [vmem:[%s794 + $0xf8] sm:$0xff]
    %v827 = vld [vmem:[%s794 + $0x100] sm:$0xff]
    %v828 = vld [vmem:[%s794 + $0x108] sm:$0xff]
    %v829 = vld [vmem:[%s794 + $0x110] sm:$0xff]
    %v830 = vld [vmem:[%s794 + $0x118] sm:$0xff]
    %v831 = vld [vmem:[%s794 + $0x120] sm:$0xff]
    %v832 = vld [vmem:[%s794 + $0x128] sm:$0xff]
    %v833 = vld [vmem:[%s794 + $0x130] sm:$0xff]
    %v834 = vld [vmem:[%s794 + $0x138] sm:$0xff]
    %v835 = vld [vmem:[%s794 + $0x140] sm:$0x33]
    %v877 = vunpack.c.l.b16 %v795
    %v878 = vunpack.c.h.b16 %v795
    %v879 = vunpack.c.l.b16 %v796
    %v880 = vunpack.c.h.b16 %v796
    %v881 = vunpack.c.l.b16 %v797
    %v882 = vunpack.c.h.b16 %v797
    %v883 = vunpack.c.l.b16 %v798
    %v884 = vunpack.c.h.b16 %v798
    %v885 = vunpack.c.l.b16 %v799
    %v886 = vunpack.c.h.b16 %v799
    %v887 = vunpack.c.l.b16 %v800
    %v888 = vunpack.c.h.b16 %v800
    %v889 = vunpack.c.l.b16 %v801
    %v890 = vunpack.c.h.b16 %v801
    %v891 = vunpack.c.l.b16 %v802
    %v892 = vunpack.c.h.b16 %v802
    %v893 = vunpack.c.l.b16 %v803
    %v894 = vunpack.c.h.b16 %v803
    %v895 = vunpack.c.l.b16 %v804
    %v896 = vunpack.c.h.b16 %v804
    %v897 = vunpack.c.l.b16 %v805
    %v898 = vunpack.c.h.b16 %v805
    %v899 = vunpack.c.l.b16 %v806
    %v900 = vunpack.c.h.b16 %v806
    %v901 = vunpack.c.l.b16 %v807
    %v902 = vunpack.c.h.b16 %v807
    %v903 = vunpack.c.l.b16 %v808
    %v904 = vunpack.c.h.b16 %v808
    %v905 = vunpack.c.l.b16 %v809
    %v906 = vunpack.c.h.b16 %v809
    %v907 = vunpack.c.l.b16 %v810
    %v908 = vunpack.c.h.b16 %v810
    %v909 = vunpack.c.l.b16 %v811
    %v910 = vunpack.c.h.b16 %v811
    %v911 = vunpack.c.l.b16 %v812
    %v912 = vunpack.c.h.b16 %v812
    %v913 = vunpack.c.l.b16 %v813
    %v914 = vunpack.c.h.b16 %v813
    %v915 = vunpack.c.l.b16 %v814
    %v916 = vunpack.c.h.b16 %v814
    %v917 = vunpack.c.l.b16 %v815
    %v918 = vunpack.c.h.b16 %v815
    %v919 = vunpack.c.l.b16 %v816
    %v920 = vunpack.c.h.b16 %v816
    %v921 = vunpack.c.l.b16 %v817
    %v922 = vunpack.c.h.b16 %v817
    %v923 = vunpack.c.l.b16 %v818
    %v924 = vunpack.c.h.b16 %v818
    %v925 = vunpack.c.l.b16 %v819
    %v926 = vunpack.c.h.b16 %v819
    %v927 = vunpack.c.l.b16 %v820
    %v928 = vunpack.c.h.b16 %v820
    %v929 = vunpack.c.l.b16 %v821
    %v930 = vunpack.c.h.b16 %v821
    %v931 = vunpack.c.l.b16 %v822
    %v932 = vunpack.c.h.b16 %v822
    %v933 = vunpack.c.l.b16 %v823
    %v934 = vunpack.c.h.b16 %v823
    %v935 = vunpack.c.l.b16 %v824
    %v936 = vunpack.c.h.b16 %v824
    %v937 = vunpack.c.l.b16 %v825
    %v938 = vunpack.c.h.b16 %v825
    %v939 = vunpack.c.l.b16 %v826
    %v940 = vunpack.c.h.b16 %v826
    %v941 = vunpack.c.l.b16 %v827
    %v942 = vunpack.c.h.b16 %v827
    %v943 = vunpack.c.l.b16 %v828
    %v944 = vunpack.c.h.b16 %v828
    %v945 = vunpack.c.l.b16 %v829
    %v946 = vunpack.c.h.b16 %v829
    %v947 = vunpack.c.l.b16 %v830
    %v948 = vunpack.c.h.b16 %v830
    %v949 = vunpack.c.l.b16 %v831
    %v950 = vunpack.c.h.b16 %v831
    %v951 = vunpack.c.l.b16 %v832
    %v952 = vunpack.c.h.b16 %v832
    %v953 = vunpack.c.l.b16 %v833
    %v954 = vunpack.c.h.b16 %v833
    %v955 = vunpack.c.l.b16 %v834
    %v956 = vunpack.c.h.b16 %v834
    %v957 = vunpack.c.l.b16 %v835
    %v958 = vunpack.c.h.b16 %v835
    %v959 = vpack.c.b16 %v879, %v877
    %v960 = vpack.c.b16 %v880, %v878
    %v961 = vpack.c.b16 %v883, %v881
    %v962 = vpack.c.b16 %v884, %v882
    %v963 = vpack.c.b16 %v887, %v885
    %v964 = vpack.c.b16 %v888, %v886
    %v965 = vpack.c.b16 %v891, %v889
    %v966 = vpack.c.b16 %v892, %v890
    %v967 = vpack.c.b16 %v895, %v893
    %v968 = vpack.c.b16 %v896, %v894
    %v969 = vpack.c.b16 %v899, %v897
    %v970 = vpack.c.b16 %v900, %v898
    %v971 = vpack.c.b16 %v903, %v901
    %v972 = vpack.c.b16 %v904, %v902
    %v973 = vpack.c.b16 %v907, %v905
    %v974 = vpack.c.b16 %v908, %v906
    %v975 = vpack.c.b16 %v911, %v909
    %v976 = vpack.c.b16 %v912, %v910
    %v977 = vpack.c.b16 %v915, %v913
    %v978 = vpack.c.b16 %v916, %v914
    %v979 = vpack.c.b16 %v919, %v917
    %v980 = vpack.c.b16 %v920, %v918
    %v981 = vpack.c.b16 %v923, %v921
    %v982 = vpack.c.b16 %v924, %v922
    %v983 = vpack.c.b16 %v927, %v925
    %v984 = vpack.c.b16 %v928, %v926
    %v985 = vpack.c.b16 %v931, %v929
    %v986 = vpack.c.b16 %v932, %v930
    %v987 = vpack.c.b16 %v935, %v933
    %v988 = vpack.c.b16 %v936, %v934
    %v989 = vpack.c.b16 %v939, %v937
    %v990 = vpack.c.b16 %v940, %v938
    %v991 = vpack.c.b16 %v943, %v941
    %v992 = vpack.c.b16 %v944, %v942
    %v993 = vpack.c.b16 %v947, %v945
    %v994 = vpack.c.b16 %v948, %v946
    %v995 = vpack.c.b16 %v951, %v949
    %v996 = vpack.c.b16 %v952, %v950
    %v997 = vpack.c.b16 %v955, %v953
    %v998 = vpack.c.b16 %v956, %v954
    %v999 = vpack.c.b16 %v957, %v957
    %v1000 = vpack.c.b16 %v958, %v958
    %v1042 = vsel %vm368, %v999, 0
    %v1045 = vsel %vm368, %v1000, 0
    %1047 = vmatprep.subr.bf16.mxu0 %v974
    %1048 = vmatpush1.bf16.msra.mxu0 %v973
    %1049 = vmatprep.subr.bf16.mxu0 %v972
    %1050 = vmatpush1.bf16.msra.mxu0 %v971
    %1051 = vmatprep.subr.bf16.mxu0 %v970
    %1052 = vmatpush1.bf16.msra.mxu0 %v969
    %1053 = vmatprep.subr.bf16.mxu0 %v968
    %1054 = vmatpush1.bf16.msra.mxu0 %v967
    %1055 = vmatprep.subr.bf16.mxu0 %v966
    %1056 = vmatpush1.bf16.msra.mxu0 %v965
    %1057 = vmatprep.subr.bf16.mxu0 %v964
    %1058 = vmatpush1.bf16.msra.mxu0 %v963
    %1059 = vmatprep.subr.bf16.mxu0 %v962
    %1060 = vmatpush1.bf16.msra.mxu0 %v961
    %1061 = vmatprep.subr.bf16.mxu0 %v960
    %1062 = vmatpush1.bf16.msra.mxu0 %v959
    %1063 = vmatprep.subr.bf16.mxu0 %v990
    %1064 = vmatpush2.bf16.msra.mxu0 %v989
    %1065 = vmatprep.subr.bf16.mxu0 %v988
    %1066 = vmatpush2.bf16.msra.mxu0 %v987
    %1067 = vmatprep.subr.bf16.mxu0 %v986
    %1068 = vmatpush2.bf16.msra.mxu0 %v985
    %1069 = vmatprep.subr.bf16.mxu0 %v984
    %1070 = vmatpush2.bf16.msra.mxu0 %v983
    %1071 = vmatprep.subr.bf16.mxu0 %v982
    %1072 = vmatpush2.bf16.msra.mxu0 %v981
    %1073 = vmatprep.subr.bf16.mxu0 %v980
    %1074 = vmatpush2.bf16.msra.mxu0 %v979
    %1075 = vmatprep.subr.bf16.mxu0 %v978
    %1076 = vmatpush2.bf16.msra.mxu0 %v977
    %1077 = vmatprep.subr.bf16.mxu0 %v976
    %1078 = vmatpush2.bf16.msra.mxu0 %v975
    %1079 = vmatprep.mubr.bf16.mxu0 %v155
    %1080 = vmatmul.mubr.bf16.gmra.mxu0 %v154
    %v1081 = vpop.f32.mrf.mxu0
    %v1082 = vadd.f32 0.0, %v1081
    %v1083 = vpop.f32.mrf.mxu0
    %v1084 = vadd.f32 0.0, %v1083
    %v1085 = vpop.f32.mrf.mxu0
    %v1086 = vpop.f32.mrf.mxu0
    %1087 = vdwg.mxu0
    %1088 = vmatprep.subr.bf16.mxu0 0
    %1089 = vmatpush1.bf16.msra.mxu0 0
    %1090 = vmatprep.subr.bf16.mxu0 0
    %1091 = vmatpush1.bf16.msra.mxu0 0
    %1092 = vmatprep.subr.bf16.mxu0 0
    %1093 = vmatpush1.bf16.msra.mxu0 0
    %1094 = vmatprep.subr.bf16.mxu0 %v1045
    %1095 = vmatpush1.bf16.msra.mxu0 %v1042
    %1096 = vmatprep.subr.bf16.mxu0 %v998
    %1097 = vmatpush1.bf16.msra.mxu0 %v997
    %1098 = vmatprep.subr.bf16.mxu0 %v996
    %1099 = vmatpush1.bf16.msra.mxu0 %v995
    %1100 = vmatprep.subr.bf16.mxu0 %v994
    %1101 = vmatpush1.bf16.msra.mxu0 %v993
    %1102 = vmatprep.subr.bf16.mxu0 %v992
    %1103 = vmatpush1.bf16.msra.mxu0 %v991
    %1104 = vmatprep.subr.bf16.mxu0 0
    %1105 = vmatpush2.bf16.msra.mxu0 0
    %1106 = vmatprep.subr.bf16.mxu0 0
    %1107 = vmatpush2.bf16.msra.mxu0 0
    %1108 = vmatprep.subr.bf16.mxu0 0
    %1109 = vmatpush2.bf16.msra.mxu0 0
    %1110 = vmatprep.subr.bf16.mxu0 0
    %1111 = vmatpush2.bf16.msra.mxu0 0
    %1112 = vmatprep.subr.bf16.mxu0 0
    %1113 = vmatpush2.bf16.msra.mxu0 0
    %1114 = vmatprep.subr.bf16.mxu0 0
    %1115 = vmatpush2.bf16.msra.mxu0 0
    %1116 = vmatprep.subr.bf16.mxu0 0
    %1117 = vmatpush2.bf16.msra.mxu0 0
    %1118 = vmatprep.subr.bf16.mxu0 0
    %1119 = vmatpush2.bf16.msra.mxu0 0
    %1120 = vmatprep.mubr.bf16.mxu0 0
    %1121 = vmatmul.mubr.bf16.gmra.mxu0 %v366
    %v1122 = vpop.f32.mrf.mxu0
    %v1123 = vadd.f32 %v1082, %v1122
    %v1124 = vpop.f32.mrf.mxu0
    %v1125 = vadd.f32 %v1084, %v1124
    %v1126 = vpop.f32.mrf.mxu0
    %v1127 = vpop.f32.mrf.mxu0
    %1128 = vdwg.mxu0
    %v1129 = vmax.f32 %v792, %v1123
    %v1130 = vmax.f32 %v793, %v1125
    %v1131 = vpack.c.bf16 %v1129, %v1129
    %v1132 = vpack.c.bf16 %v1130, %v1130
    %v1133 = vld [vmem:[%s3] sm:$0xf]
    %v1134 = vld [vmem:[%s3 + $0x4] sm:$0xf]
    %v1135 = vld [vmem:[%s3 + $0x8] sm:$0xf]
    %v1136 = vld [vmem:[%s3 + $0xc] sm:$0xf]
    %v1137 = vld [vmem:[%s3 + $0x10] sm:$0xf]
    %v1138 = vld [vmem:[%s3 + $0x14] sm:$0xf]
    %v1139 = vld [vmem:[%s3 + $0x18] sm:$0xf]
    %v1140 = vld [vmem:[%s3 + $0x1c] sm:$0xf]
    %v1141 = vld [vmem:[%s3 + $0x20] sm:$0xf]
    %v1142 = vld [vmem:[%s3 + $0x24] sm:$0xf]
    %v1143 = vld [vmem:[%s3 + $0x28] sm:$0xf]
    %v1144 = vld [vmem:[%s3 + $0x2c] sm:$0xf]
    %v1145 = vld [vmem:[%s3 + $0x30] sm:$0xf]
    %v1146 = vld [vmem:[%s3 + $0x34] sm:$0xf]
    %v1147 = vld [vmem:[%s3 + $0x38] sm:$0xf]
    %v1148 = vld [vmem:[%s3 + $0x3c] sm:$0xf]
    %v1149 = vld [vmem:[%s3 + $0x40] sm:$0xf]
    %v1150 = vld [vmem:[%s3 + $0x44] sm:$0xf]
    %v1169 = vunpack.c.l.b16 %v1133
    %v1170 = vunpack.c.l.b16 %v1134
    %v1171 = vunpack.c.l.b16 %v1135
    %v1172 = vunpack.c.l.b16 %v1136
    %v1173 = vunpack.c.l.b16 %v1137
    %v1174 = vunpack.c.l.b16 %v1138
    %v1175 = vunpack.c.l.b16 %v1139
    %v1176 = vunpack.c.l.b16 %v1140
    %v1177 = vunpack.c.l.b16 %v1141
    %v1178 = vunpack.c.l.b16 %v1142
    %v1179 = vunpack.c.l.b16 %v1143
    %v1180 = vunpack.c.l.b16 %v1144
    %v1181 = vunpack.c.l.b16 %v1145
    %v1182 = vunpack.c.l.b16 %v1146
    %v1183 = vunpack.c.l.b16 %v1147
    %v1184 = vunpack.c.l.b16 %v1148
    %v1185 = vunpack.c.l.b16 %v1149
    %v1186 = vunpack.c.l.b16 %v1150
    %v1187 = vpack.c.b16 %v1170, %v1169
    %v1188 = vpack.c.b16 %v1172, %v1171
    %v1189 = vpack.c.b16 %v1174, %v1173
    %v1190 = vpack.c.b16 %v1176, %v1175
    %v1191 = vpack.c.b16 %v1178, %v1177
    %v1192 = vpack.c.b16 %v1180, %v1179
    %v1193 = vpack.c.b16 %v1182, %v1181
    %v1194 = vpack.c.b16 %v1184, %v1183
    %v1195 = vpack.c.b16 %v1186, %v1185
    %vm1205 = vcmask 130048
    %v1207 = vsel %vm1205, %v1132, 0
    %1209 = vmatprep.subr.bf16.mxu0 0
    %1210 = vmatpush1.bf16.msra.mxu0 %v1194
    %1211 = vmatprep.subr.bf16.mxu0 0
    %1212 = vmatpush1.bf16.msra.mxu0 %v1193
    %1213 = vmatprep.subr.bf16.mxu0 0
    %1214 = vmatpush1.bf16.msra.mxu0 %v1192
    %1215 = vmatprep.subr.bf16.mxu0 0
    %1216 = vmatpush1.bf16.msra.mxu0 %v1191
    %1217 = vmatprep.subr.bf16.mxu0 0
    %1218 = vmatpush1.bf16.msra.mxu0 %v1190
    %1219 = vmatprep.subr.bf16.mxu0 0
    %1220 = vmatpush1.bf16.msra.mxu0 %v1189
    %1221 = vmatprep.subr.bf16.mxu0 0
    %1222 = vmatpush1.bf16.msra.mxu0 %v1188
    %1223 = vmatprep.subr.bf16.mxu0 0
    %1224 = vmatpush1.bf16.msra.mxu0 %v1187
    %1225 = vmatprep.subr.bf16.mxu0 0
    %1226 = vmatpush2.bf16.msra.mxu0 0
    %1227 = vmatprep.subr.bf16.mxu0 0
    %1228 = vmatpush2.bf16.msra.mxu0 0
    %1229 = vmatprep.subr.bf16.mxu0 0
    %1230 = vmatpush2.bf16.msra.mxu0 0
    %1231 = vmatprep.subr.bf16.mxu0 0
    %1232 = vmatpush2.bf16.msra.mxu0 0
    %1233 = vmatprep.subr.bf16.mxu0 0
    %1234 = vmatpush2.bf16.msra.mxu0 0
    %1235 = vmatprep.subr.bf16.mxu0 0
    %1236 = vmatpush2.bf16.msra.mxu0 0
    %1237 = vmatprep.subr.bf16.mxu0 0
    %1238 = vmatpush2.bf16.msra.mxu0 0
    %1239 = vmatprep.subr.bf16.mxu0 0
    %1240 = vmatpush2.bf16.msra.mxu0 %v1195
    %1241 = vmatprep.mubr.bf16.mxu0 %v1207
    %1242 = vmatmul.mubr.bf16.gmra.mxu0 %v1131
    %v1243 = vpop.f32.mrf.mxu0
    %v1244 = vadd.f32 0.0, %v1243
    %v1245 = vpop.f32.mrf.mxu0
    %v1246 = vpop.f32.mrf.mxu0
    %v1247 = vpop.f32.mrf.mxu0
    %1248 = vdwg.mxu0
    %s1249 = scalar_lea.vmem %s3, 72
    %v1250 = vld [vmem:[%s1249] sm:$0xf]
    %v1251 = vld [vmem:[%s1249 + $0x4] sm:$0xf]
    %v1252 = vld [vmem:[%s1249 + $0x8] sm:$0xf]
    %v1253 = vld [vmem:[%s1249 + $0xc] sm:$0xf]
    %v1254 = vld [vmem:[%s1249 + $0x10] sm:$0xf]
    %v1255 = vld [vmem:[%s1249 + $0x14] sm:$0xf]
    %v1256 = vld [vmem:[%s1249 + $0x18] sm:$0xf]
    %v1257 = vld [vmem:[%s1249 + $0x1c] sm:$0xf]
    %v1258 = vld [vmem:[%s1249 + $0x20] sm:$0xf]
    %v1259 = vld [vmem:[%s1249 + $0x24] sm:$0xf]
    %v1260 = vld [vmem:[%s1249 + $0x28] sm:$0xf]
    %v1261 = vld [vmem:[%s1249 + $0x2c] sm:$0xf]
    %v1262 = vld [vmem:[%s1249 + $0x30] sm:$0xf]
    %v1263 = vld [vmem:[%s1249 + $0x34] sm:$0xf]
    %v1264 = vld [vmem:[%s1249 + $0x38] sm:$0xf]
    %v1265 = vld [vmem:[%s1249 + $0x3c] sm:$0xf]
    %v1266 = vld [vmem:[%s1249 + $0x40] sm:$0xf]
    %v1267 = vld [vmem:[%s1249 + $0x44] sm:$0xf]
    %v1286 = vunpack.c.l.b16 %v1250
    %v1287 = vunpack.c.l.b16 %v1251
    %v1288 = vunpack.c.l.b16 %v1252
    %v1289 = vunpack.c.l.b16 %v1253
    %v1290 = vunpack.c.l.b16 %v1254
    %v1291 = vunpack.c.l.b16 %v1255
    %v1292 = vunpack.c.l.b16 %v1256
    %v1293 = vunpack.c.l.b16 %v1257
    %v1294 = vunpack.c.l.b16 %v1258
    %v1295 = vunpack.c.l.b16 %v1259
    %v1296 = vunpack.c.l.b16 %v1260
    %v1297 = vunpack.c.l.b16 %v1261
    %v1298 = vunpack.c.l.b16 %v1262
    %v1299 = vunpack.c.l.b16 %v1263
    %v1300 = vunpack.c.l.b16 %v1264
    %v1301 = vunpack.c.l.b16 %v1265
    %v1302 = vunpack.c.l.b16 %v1266
    %v1303 = vunpack.c.l.b16 %v1267
    %v1304 = vpack.c.b16 %v1287, %v1286
    %v1305 = vpack.c.b16 %v1289, %v1288
    %v1306 = vpack.c.b16 %v1291, %v1290
    %v1307 = vpack.c.b16 %v1293, %v1292
    %v1308 = vpack.c.b16 %v1295, %v1294
    %v1309 = vpack.c.b16 %v1297, %v1296
    %v1310 = vpack.c.b16 %v1299, %v1298
    %v1311 = vpack.c.b16 %v1301, %v1300
    %v1312 = vpack.c.b16 %v1303, %v1302
    %1322 = vmatprep.subr.bf16.mxu0 0
    %1323 = vmatpush1.bf16.msra.mxu0 %v1311
    %1324 = vmatprep.subr.bf16.mxu0 0
    %1325 = vmatpush1.bf16.msra.mxu0 %v1310
    %1326 = vmatprep.subr.bf16.mxu0 0
    %1327 = vmatpush1.bf16.msra.mxu0 %v1309
    %1328 = vmatprep.subr.bf16.mxu0 0
    %1329 = vmatpush1.bf16.msra.mxu0 %v1308
    %1330 = vmatprep.subr.bf16.mxu0 0
    %1331 = vmatpush1.bf16.msra.mxu0 %v1307
    %1332 = vmatprep.subr.bf16.mxu0 0
    %1333 = vmatpush1.bf16.msra.mxu0 %v1306
    %1334 = vmatprep.subr.bf16.mxu0 0
    %1335 = vmatpush1.bf16.msra.mxu0 %v1305
    %1336 = vmatprep.subr.bf16.mxu0 0
    %1337 = vmatpush1.bf16.msra.mxu0 %v1304
    %1338 = vmatprep.subr.bf16.mxu0 0
    %1339 = vmatpush2.bf16.msra.mxu0 0
    %1340 = vmatprep.subr.bf16.mxu0 0
    %1341 = vmatpush2.bf16.msra.mxu0 0
    %1342 = vmatprep.subr.bf16.mxu0 0
    %1343 = vmatpush2.bf16.msra.mxu0 0
    %1344 = vmatprep.subr.bf16.mxu0 0
    %1345 = vmatpush2.bf16.msra.mxu0 0
    %1346 = vmatprep.subr.bf16.mxu0 0
    %1347 = vmatpush2.bf16.msra.mxu0 0
    %1348 = vmatprep.subr.bf16.mxu0 0
    %1349 = vmatpush2.bf16.msra.mxu0 0
    %1350 = vmatprep.subr.bf16.mxu0 0
    %1351 = vmatpush2.bf16.msra.mxu0 0
    %1352 = vmatprep.subr.bf16.mxu0 0
    %1353 = vmatpush2.bf16.msra.mxu0 %v1312
    %1354 = vmatprep.mubr.bf16.mxu0 %v1207
    %1355 = vmatmul.mubr.bf16.gmra.mxu0 %v1131
    %v1356 = vpop.f32.mrf.mxu0
    %v1357 = vadd.f32 0.0, %v1356
    %v1358 = vpop.f32.mrf.mxu0
    %v1359 = vpop.f32.mrf.mxu0
    %v1360 = vpop.f32.mrf.mxu0
    %1361 = vdwg.mxu0
    %v1362 = vmax.f32 %v1244, %v1357
    %s1363 = scalar_lea.vmem %s3, 144
    %v1364 = vld [vmem:[%s1363] sm:$0xf]
    %v1365 = vld [vmem:[%s1363 + $0x4] sm:$0xf]
    %v1366 = vld [vmem:[%s1363 + $0x8] sm:$0xf]
    %v1367 = vld [vmem:[%s1363 + $0xc] sm:$0xf]
    %v1368 = vld [vmem:[%s1363 + $0x10] sm:$0xf]
    %v1369 = vld [vmem:[%s1363 + $0x14] sm:$0xf]
    %v1370 = vld [vmem:[%s1363 + $0x18] sm:$0xf]
    %v1371 = vld [vmem:[%s1363 + $0x1c] sm:$0xf]
    %v1372 = vld [vmem:[%s1363 + $0x20] sm:$0xf]
    %v1373 = vld [vmem:[%s1363 + $0x24] sm:$0xf]
    %v1374 = vld [vmem:[%s1363 + $0x28] sm:$0xf]
    %v1375 = vld [vmem:[%s1363 + $0x2c] sm:$0xf]
    %v1376 = vld [vmem:[%s1363 + $0x30] sm:$0xf]
    %v1377 = vld [vmem:[%s1363 + $0x34] sm:$0xf]
    %v1378 = vld [vmem:[%s1363 + $0x38] sm:$0xf]
    %v1379 = vld [vmem:[%s1363 + $0x3c] sm:$0xf]
    %v1380 = vld [vmem:[%s1363 + $0x40] sm:$0xf]
    %v1381 = vld [vmem:[%s1363 + $0x44] sm:$0xf]
    %v1400 = vunpack.c.l.b16 %v1364
    %v1401 = vunpack.c.l.b16 %v1365
    %v1402 = vunpack.c.l.b16 %v1366
    %v1403 = vunpack.c.l.b16 %v1367
    %v1404 = vunpack.c.l.b16 %v1368
    %v1405 = vunpack.c.l.b16 %v1369
    %v1406 = vunpack.c.l.b16 %v1370
    %v1407 = vunpack.c.l.b16 %v1371
    %v1408 = vunpack.c.l.b16 %v1372
    %v1409 = vunpack.c.l.b16 %v1373
    %v1410 = vunpack.c.l.b16 %v1374
    %v1411 = vunpack.c.l.b16 %v1375
    %v1412 = vunpack.c.l.b16 %v1376
    %v1413 = vunpack.c.l.b16 %v1377
    %v1414 = vunpack.c.l.b16 %v1378
    %v1415 = vunpack.c.l.b16 %v1379
    %v1416 = vunpack.c.l.b16 %v1380
    %v1417 = vunpack.c.l.b16 %v1381
    %v1418 = vpack.c.b16 %v1401, %v1400
    %v1419 = vpack.c.b16 %v1403, %v1402
    %v1420 = vpack.c.b16 %v1405, %v1404
    %v1421 = vpack.c.b16 %v1407, %v1406
    %v1422 = vpack.c.b16 %v1409, %v1408
    %v1423 = vpack.c.b16 %v1411, %v1410
    %v1424 = vpack.c.b16 %v1413, %v1412
    %v1425 = vpack.c.b16 %v1415, %v1414
    %v1426 = vpack.c.b16 %v1417, %v1416
    %1436 = vmatprep.subr.bf16.mxu0 0
    %1437 = vmatpush1.bf16.msra.mxu0 %v1425
    %1438 = vmatprep.subr.bf16.mxu0 0
    %1439 = vmatpush1.bf16.msra.mxu0 %v1424
    %1440 = vmatprep.subr.bf16.mxu0 0
    %1441 = vmatpush1.bf16.msra.mxu0 %v1423
    %1442 = vmatprep.subr.bf16.mxu0 0
    %1443 = vmatpush1.bf16.msra.mxu0 %v1422
    %1444 = vmatprep.subr.bf16.mxu0 0
    %1445 = vmatpush1.bf16.msra.mxu0 %v1421
    %1446 = vmatprep.subr.bf16.mxu0 0
    %1447 = vmatpush1.bf16.msra.mxu0 %v1420
    %1448 = vmatprep.subr.bf16.mxu0 0
    %1449 = vmatpush1.bf16.msra.mxu0 %v1419
    %1450 = vmatprep.subr.bf16.mxu0 0
    %1451 = vmatpush1.bf16.msra.mxu0 %v1418
    %1452 = vmatprep.subr.bf16.mxu0 0
    %1453 = vmatpush2.bf16.msra.mxu0 0
    %1454 = vmatprep.subr.bf16.mxu0 0
    %1455 = vmatpush2.bf16.msra.mxu0 0
    %1456 = vmatprep.subr.bf16.mxu0 0
    %1457 = vmatpush2.bf16.msra.mxu0 0
    %1458 = vmatprep.subr.bf16.mxu0 0
    %1459 = vmatpush2.bf16.msra.mxu0 0
    %1460 = vmatprep.subr.bf16.mxu0 0
    %1461 = vmatpush2.bf16.msra.mxu0 0
    %1462 = vmatprep.subr.bf16.mxu0 0
    %1463 = vmatpush2.bf16.msra.mxu0 0
    %1464 = vmatprep.subr.bf16.mxu0 0
    %1465 = vmatpush2.bf16.msra.mxu0 0
    %1466 = vmatprep.subr.bf16.mxu0 0
    %1467 = vmatpush2.bf16.msra.mxu0 %v1426
    %1468 = vmatprep.mubr.bf16.mxu0 %v1207
    %1469 = vmatmul.mubr.bf16.gmra.mxu0 %v1131
    %v1470 = vpop.f32.mrf.mxu0
    %v1471 = vadd.f32 0.0, %v1470
    %v1472 = vpop.f32.mrf.mxu0
    %v1473 = vpop.f32.mrf.mxu0
    %v1474 = vpop.f32.mrf.mxu0
    %1475 = vdwg.mxu0
    %v1476 = vmax.f32 %v1362, %v1471
    %v1477 = vpack.c.bf16 %v1476, %v1476
    %v1478 = vld [vmem:[#allocation2] sm:$0xf]
    %v1479 = vld [vmem:[#allocation2 + $0x4] sm:$0xf]
    %v1480 = vld [vmem:[#allocation2 + $0x8] sm:$0xf]
    %v1481 = vld [vmem:[#allocation2 + $0xc] sm:$0xf]
    %v1482 = vld [vmem:[#allocation2 + $0x10] sm:$0xf]
    %v1483 = vld [vmem:[#allocation2 + $0x14] sm:$0xf]
    %v1484 = vld [vmem:[#allocation2 + $0x18] sm:$0xf]
    %v1485 = vld [vmem:[#allocation2 + $0x1c] sm:$0xf]
    %v1494 = vunpack.c.l.b16 %v1478
    %v1495 = vunpack.c.l.b16 %v1479
    %v1496 = vunpack.c.l.b16 %v1480
    %v1497 = vunpack.c.l.b16 %v1481
    %v1498 = vunpack.c.l.b16 %v1482
    %v1499 = vunpack.c.l.b16 %v1483
    %v1500 = vunpack.c.l.b16 %v1484
    %v1501 = vunpack.c.l.b16 %v1485
    %v1502 = vpack.c.b16 %v1495, %v1494
    %v1503 = vpack.c.b16 %v1497, %v1496
    %v1504 = vpack.c.b16 %v1499, %v1498
    %v1505 = vpack.c.b16 %v1501, %v1500
    %vm1510 = vcmask 523264
    %v1512 = vsel %vm1510, %v1477, 0
    %1514 = vmatprep.subr.bf16.mxu0 0
    %1515 = vmatpush1.bf16.msra.mxu0 0
    %1516 = vmatprep.subr.bf16.mxu0 0
    %1517 = vmatpush1.bf16.msra.mxu0 0
    %1518 = vmatprep.subr.bf16.mxu0 0
    %1519 = vmatpush1.bf16.msra.mxu0 0
    %1520 = vmatprep.subr.bf16.mxu0 0
    %1521 = vmatpush1.bf16.msra.mxu0 0
    %1522 = vmatprep.subr.bf16.mxu0 0
    %1523 = vmatpush1.bf16.msra.mxu0 %v1505
    %1524 = vmatprep.subr.bf16.mxu0 0
    %1525 = vmatpush1.bf16.msra.mxu0 %v1504
    %1526 = vmatprep.subr.bf16.mxu0 0
    %1527 = vmatpush1.bf16.msra.mxu0 %v1503
    %1528 = vmatprep.subr.bf16.mxu0 0
    %1529 = vmatpush1.bf16.msra.mxu0 %v1502
    %1530 = vmatprep.subr.bf16.mxu0 0
    %1531 = vmatpush2.bf16.msra.mxu0 0
    %1532 = vmatprep.subr.bf16.mxu0 0
    %1533 = vmatpush2.bf16.msra.mxu0 0
    %1534 = vmatprep.subr.bf16.mxu0 0
    %1535 = vmatpush2.bf16.msra.mxu0 0
    %1536 = vmatprep.subr.bf16.mxu0 0
    %1537 = vmatpush2.bf16.msra.mxu0 0
    %1538 = vmatprep.subr.bf16.mxu0 0
    %1539 = vmatpush2.bf16.msra.mxu0 0
    %1540 = vmatprep.subr.bf16.mxu0 0
    %1541 = vmatpush2.bf16.msra.mxu0 0
    %1542 = vmatprep.subr.bf16.mxu0 0
    %1543 = vmatpush2.bf16.msra.mxu0 0
    %1544 = vmatprep.subr.bf16.mxu0 0
    %1545 = vmatpush2.bf16.msra.mxu0 0
    %1546 = vmatprep.mubr.bf16.mxu0 0
    %1547 = vmatmul.mubr.bf16.gmra.mxu0 %v1512
    %v1548 = vpop.f32.mrf.mxu0
    %v1549 = vadd.f32 0.0, %v1548
    %v1550 = vpop.f32.mrf.mxu0
    %v1551 = vpop.f32.mrf.mxu0
    %v1552 = vpop.f32.mrf.mxu0
    %1553 = vdwg.mxu0
    %v1554 = vld [vmem:[%s1] sm:$0xff]
    %v1555 = vld [vmem:[#allocation4] sm:$0xf]
    %v1556 = vld [vmem:[#allocation4 + $0x4] sm:$0xf]
    %v1557 = vld [vmem:[#allocation4 + $0x8] sm:$0xf]
    %v1558 = vld [vmem:[#allocation4 + $0xc] sm:$0xf]
    %v1559 = vld [vmem:[#allocation4 + $0x10] sm:$0xf]
    %v1560 = vld [vmem:[#allocation4 + $0x14] sm:$0xf]
    %v1561 = vld [vmem:[#allocation4 + $0x18] sm:$0xf]
    %v1562 = vld [vmem:[#allocation4 + $0x1c] sm:$0xf]
    %v1563 = vld [vmem:[#allocation4 + $0x20] sm:$0xf]
    %v1564 = vld [vmem:[#allocation4 + $0x24] sm:$0xf]
    %v1565 = vld [vmem:[#allocation4 + $0x28] sm:$0xf]
    %v1566 = vld [vmem:[#allocation4 + $0x2c] sm:$0xf]
    %v1567 = vld [vmem:[#allocation4 + $0x30] sm:$0xf]
    %v1568 = vld [vmem:[#allocation4 + $0x34] sm:$0xf]
    %v1569 = vld [vmem:[#allocation4 + $0x38] sm:$0xf]
    %v1570 = vld [vmem:[#allocation4 + $0x3c] sm:$0xf]
    %v1571 = vld [vmem:[#allocation4 + $0x40] sm:$0xf]
    %v1572 = vld [vmem:[#allocation4 + $0x44] sm:$0xf]
    %v1573 = vld [vmem:[#allocation4 + $0x48] sm:$0xf]
    %v1574 = vld [vmem:[#allocation4 + $0x4c] sm:$0xf]
    %v1575 = vld [vmem:[#allocation4 + $0x50] sm:$0xf]
    %v1576 = vld [vmem:[#allocation4 + $0x54] sm:$0xf]
    %v1577 = vld [vmem:[#allocation4 + $0x58] sm:$0xf]
    %v1578 = vld [vmem:[#allocation4 + $0x5c] sm:$0xf]
    %v1579 = vld [vmem:[#allocation4 + $0x60] sm:$0xf]
    %v1580 = vld [vmem:[#allocation4 + $0x64] sm:$0xf]
    %v1581 = vld [vmem:[#allocation4 + $0x68] sm:$0xf]
    %v1582 = vld [vmem:[#allocation4 + $0x6c] sm:$0xf]
    %v1583 = vld [vmem:[#allocation4 + $0x70] sm:$0xf]
    %v1584 = vld [vmem:[#allocation4 + $0x74] sm:$0xf]
    %v1585 = vld [vmem:[#allocation4 + $0x78] sm:$0xf]
    %v1586 = vld [vmem:[#allocation4 + $0x7c] sm:$0xf]
    %v1588 = vunpack.c.l.b16 %v1554
    %v1589 = vunpack.c.h.b16 %v1554
    %v1590 = vpack.c.b16 %v1588, %v1588
    %v1591 = vpack.c.b16 %v1589, %v1589
    %v1626 = vunpack.c.l.b16 %v1555
    %v1627 = vunpack.c.l.b16 %v1556
    %v1628 = vunpack.c.l.b16 %v1557
    %v1629 = vunpack.c.l.b16 %v1558
    %v1630 = vunpack.c.l.b16 %v1559
    %v1631 = vunpack.c.l.b16 %v1560
    %v1632 = vunpack.c.l.b16 %v1561
    %v1633 = vunpack.c.l.b16 %v1562
    %v1634 = vunpack.c.l.b16 %v1563
    %v1635 = vunpack.c.l.b16 %v1564
    %v1636 = vunpack.c.l.b16 %v1565
    %v1637 = vunpack.c.l.b16 %v1566
    %v1638 = vunpack.c.l.b16 %v1567
    %v1639 = vunpack.c.l.b16 %v1568
    %v1640 = vunpack.c.l.b16 %v1569
    %v1641 = vunpack.c.l.b16 %v1570
    %v1642 = vunpack.c.l.b16 %v1571
    %v1643 = vunpack.c.l.b16 %v1572
    %v1644 = vunpack.c.l.b16 %v1573
    %v1645 = vunpack.c.l.b16 %v1574
    %v1646 = vunpack.c.l.b16 %v1575
    %v1647 = vunpack.c.l.b16 %v1576
    %v1648 = vunpack.c.l.b16 %v1577
    %v1649 = vunpack.c.l.b16 %v1578
    %v1650 = vunpack.c.l.b16 %v1579
    %v1651 = vunpack.c.l.b16 %v1580
    %v1652 = vunpack.c.l.b16 %v1581
    %v1653 = vunpack.c.l.b16 %v1582
    %v1654 = vunpack.c.l.b16 %v1583
    %v1655 = vunpack.c.l.b16 %v1584
    %v1656 = vunpack.c.l.b16 %v1585
    %v1657 = vunpack.c.l.b16 %v1586
    %v1658 = vpack.c.b16 %v1627, %v1626
    %v1659 = vpack.c.b16 %v1629, %v1628
    %v1660 = vpack.c.b16 %v1631, %v1630
    %v1661 = vpack.c.b16 %v1633, %v1632
    %v1662 = vpack.c.b16 %v1635, %v1634
    %v1663 = vpack.c.b16 %v1637, %v1636
    %v1664 = vpack.c.b16 %v1639, %v1638
    %v1665 = vpack.c.b16 %v1641, %v1640
    %v1666 = vpack.c.b16 %v1643, %v1642
    %v1667 = vpack.c.b16 %v1645, %v1644
    %v1668 = vpack.c.b16 %v1647, %v1646
    %v1669 = vpack.c.b16 %v1649, %v1648
    %v1670 = vpack.c.b16 %v1651, %v1650
    %v1671 = vpack.c.b16 %v1653, %v1652
    %v1672 = vpack.c.b16 %v1655, %v1654
    %v1673 = vpack.c.b16 %v1657, %v1656
    %1690 = vmatprep.subr.bf16.mxu0 0
    %1691 = vmatpush1.bf16.msra.mxu0 %v1665
    %1692 = vmatprep.subr.bf16.mxu0 0
    %1693 = vmatpush1.bf16.msra.mxu0 %v1664
    %1694 = vmatprep.subr.bf16.mxu0 0
    %1695 = vmatpush1.bf16.msra.mxu0 %v1663
    %1696 = vmatprep.subr.bf16.mxu0 0
    %1697 = vmatpush1.bf16.msra.mxu0 %v1662
    %1698 = vmatprep.subr.bf16.mxu0 0
    %1699 = vmatpush1.bf16.msra.mxu0 %v1661
    %1700 = vmatprep.subr.bf16.mxu0 0
    %1701 = vmatpush1.bf16.msra.mxu0 %v1660
    %1702 = vmatprep.subr.bf16.mxu0 0
    %1703 = vmatpush1.bf16.msra.mxu0 %v1659
    %1704 = vmatprep.subr.bf16.mxu0 0
    %1705 = vmatpush1.bf16.msra.mxu0 %v1658
    %1706 = vmatprep.subr.bf16.mxu0 0
    %1707 = vmatpush2.bf16.msra.mxu0 %v1673
    %1708 = vmatprep.subr.bf16.mxu0 0
    %1709 = vmatpush2.bf16.msra.mxu0 %v1672
    %1710 = vmatprep.subr.bf16.mxu0 0
    %1711 = vmatpush2.bf16.msra.mxu0 %v1671
    %1712 = vmatprep.subr.bf16.mxu0 0
    %1713 = vmatpush2.bf16.msra.mxu0 %v1670
    %1714 = vmatprep.subr.bf16.mxu0 0
    %1715 = vmatpush2.bf16.msra.mxu0 %v1669
    %1716 = vmatprep.subr.bf16.mxu0 0
    %1717 = vmatpush2.bf16.msra.mxu0 %v1668
    %1718 = vmatprep.subr.bf16.mxu0 0
    %1719 = vmatpush2.bf16.msra.mxu0 %v1667
    %1720 = vmatprep.subr.bf16.mxu0 0
    %1721 = vmatpush2.bf16.msra.mxu0 %v1666
    %1722 = vmatprep.mubr.bf16.mxu0 %v1591
    %1723 = vmatmul.mubr.bf16.gmra.mxu0 %v1590
    %v1724 = vpop.f32.mrf.mxu0
    %v1725 = vadd.f32 0.0, %v1724
    %v1726 = vpop.f32.mrf.mxu0
    %v1727 = vpop.f32.mrf.mxu0
    %v1728 = vpop.f32.mrf.mxu0
    %1729 = vdwg.mxu0
    %s1730 = scalar_lea.vmem [#allocation4], 128
    %v1731 = vld [vmem:[%s1730] sm:$0xf]
    %v1732 = vld [vmem:[%s1730 + $0x4] sm:$0xf]
    %v1733 = vld [vmem:[%s1730 + $0x8] sm:$0xf]
    %v1734 = vld [vmem:[%s1730 + $0xc] sm:$0xf]
    %v1735 = vld [vmem:[%s1730 + $0x10] sm:$0xf]
    %v1736 = vld [vmem:[%s1730 + $0x14] sm:$0xf]
    %v1737 = vld [vmem:[%s1730 + $0x18] sm:$0xf]
    %v1738 = vld [vmem:[%s1730 + $0x1c] sm:$0xf]
    %v1739 = vld [vmem:[%s1730 + $0x20] sm:$0xf]
    %v1740 = vld [vmem:[%s1730 + $0x24] sm:$0xf]
    %v1741 = vld [vmem:[%s1730 + $0x28] sm:$0xf]
    %v1742 = vld [vmem:[%s1730 + $0x2c] sm:$0xf]
    %v1743 = vld [vmem:[%s1730 + $0x30] sm:$0xf]
    %v1744 = vld [vmem:[%s1730 + $0x34] sm:$0xf]
    %v1745 = vld [vmem:[%s1730 + $0x38] sm:$0xf]
    %v1746 = vld [vmem:[%s1730 + $0x3c] sm:$0xf]
    %v1747 = vld [vmem:[%s1730 + $0x40] sm:$0xf]
    %v1748 = vld [vmem:[%s1730 + $0x44] sm:$0xf]
    %v1749 = vld [vmem:[%s1730 + $0x48] sm:$0xf]
    %v1750 = vld [vmem:[%s1730 + $0x4c] sm:$0xf]
    %v1751 = vld [vmem:[%s1730 + $0x50] sm:$0xf]
    %v1752 = vld [vmem:[%s1730 + $0x54] sm:$0xf]
    %v1753 = vld [vmem:[%s1730 + $0x58] sm:$0xf]
    %v1754 = vld [vmem:[%s1730 + $0x5c] sm:$0xf]
    %v1755 = vld [vmem:[%s1730 + $0x60] sm:$0xf]
    %v1756 = vld [vmem:[%s1730 + $0x64] sm:$0xf]
    %v1757 = vld [vmem:[%s1730 + $0x68] sm:$0xf]
    %v1758 = vld [vmem:[%s1730 + $0x6c] sm:$0xf]
    %v1759 = vld [vmem:[%s1730 + $0x70] sm:$0xf]
    %v1760 = vld [vmem:[%s1730 + $0x74] sm:$0xf]
    %v1761 = vld [vmem:[%s1730 + $0x78] sm:$0xf]
    %v1762 = vld [vmem:[%s1730 + $0x7c] sm:$0xf]
    %v1795 = vunpack.c.l.b16 %v1731
    %v1796 = vunpack.c.l.b16 %v1732
    %v1797 = vunpack.c.l.b16 %v1733
    %v1798 = vunpack.c.l.b16 %v1734
    %v1799 = vunpack.c.l.b16 %v1735
    %v1800 = vunpack.c.l.b16 %v1736
    %v1801 = vunpack.c.l.b16 %v1737
    %v1802 = vunpack.c.l.b16 %v1738
    %v1803 = vunpack.c.l.b16 %v1739
    %v1804 = vunpack.c.l.b16 %v1740
    %v1805 = vunpack.c.l.b16 %v1741
    %v1806 = vunpack.c.l.b16 %v1742
    %v1807 = vunpack.c.l.b16 %v1743
    %v1808 = vunpack.c.l.b16 %v1744
    %v1809 = vunpack.c.l.b16 %v1745
    %v1810 = vunpack.c.l.b16 %v1746
    %v1811 = vunpack.c.l.b16 %v1747
    %v1812 = vunpack.c.l.b16 %v1748
    %v1813 = vunpack.c.l.b16 %v1749
    %v1814 = vunpack.c.l.b16 %v1750
    %v1815 = vunpack.c.l.b16 %v1751
    %v1816 = vunpack.c.l.b16 %v1752
    %v1817 = vunpack.c.l.b16 %v1753
    %v1818 = vunpack.c.l.b16 %v1754
    %v1819 = vunpack.c.l.b16 %v1755
    %v1820 = vunpack.c.l.b16 %v1756
    %v1821 = vunpack.c.l.b16 %v1757
    %v1822 = vunpack.c.l.b16 %v1758
    %v1823 = vunpack.c.l.b16 %v1759
    %v1824 = vunpack.c.l.b16 %v1760
    %v1825 = vunpack.c.l.b16 %v1761
    %v1826 = vunpack.c.l.b16 %v1762
    %v1827 = vpack.c.b16 %v1796, %v1795
    %v1828 = vpack.c.b16 %v1798, %v1797
    %v1829 = vpack.c.b16 %v1800, %v1799
    %v1830 = vpack.c.b16 %v1802, %v1801
    %v1831 = vpack.c.b16 %v1804, %v1803
    %v1832 = vpack.c.b16 %v1806, %v1805
    %v1833 = vpack.c.b16 %v1808, %v1807
    %v1834 = vpack.c.b16 %v1810, %v1809
    %v1835 = vpack.c.b16 %v1812, %v1811
    %v1836 = vpack.c.b16 %v1814, %v1813
    %v1837 = vpack.c.b16 %v1816, %v1815
    %v1838 = vpack.c.b16 %v1818, %v1817
    %v1839 = vpack.c.b16 %v1820, %v1819
    %v1840 = vpack.c.b16 %v1822, %v1821
    %v1841 = vpack.c.b16 %v1824, %v1823
    %v1842 = vpack.c.b16 %v1826, %v1825
    %1859 = vmatprep.subr.bf16.mxu0 0
    %1860 = vmatpush1.bf16.msra.mxu0 %v1834
    %1861 = vmatprep.subr.bf16.mxu0 0
    %1862 = vmatpush1.bf16.msra.mxu0 %v1833
    %1863 = vmatprep.subr.bf16.mxu0 0
    %1864 = vmatpush1.bf16.msra.mxu0 %v1832
    %1865 = vmatprep.subr.bf16.mxu0 0
    %1866 = vmatpush1.bf16.msra.mxu0 %v1831
    %1867 = vmatprep.subr.bf16.mxu0 0
    %1868 = vmatpush1.bf16.msra.mxu0 %v1830
    %1869 = vmatprep.subr.bf16.mxu0 0
    %1870 = vmatpush1.bf16.msra.mxu0 %v1829
    %1871 = vmatprep.subr.bf16.mxu0 0
    %1872 = vmatpush1.bf16.msra.mxu0 %v1828
    %1873 = vmatprep.subr.bf16.mxu0 0
    %1874 = vmatpush1.bf16.msra.mxu0 %v1827
    %1875 = vmatprep.subr.bf16.mxu0 0
    %1876 = vmatpush2.bf16.msra.mxu0 %v1842
    %1877 = vmatprep.subr.bf16.mxu0 0
    %1878 = vmatpush2.bf16.msra.mxu0 %v1841
    %1879 = vmatprep.subr.bf16.mxu0 0
    %1880 = vmatpush2.bf16.msra.mxu0 %v1840
    %1881 = vmatprep.subr.bf16.mxu0 0
    %1882 = vmatpush2.bf16.msra.mxu0 %v1839
    %1883 = vmatprep.subr.bf16.mxu0 0
    %1884 = vmatpush2.bf16.msra.mxu0 %v1838
    %1885 = vmatprep.subr.bf16.mxu0 0
    %1886 = vmatpush2.bf16.msra.mxu0 %v1837
    %1887 = vmatprep.subr.bf16.mxu0 0
    %1888 = vmatpush2.bf16.msra.mxu0 %v1836
    %1889 = vmatprep.subr.bf16.mxu0 0
    %1890 = vmatpush2.bf16.msra.mxu0 %v1835
    %1891 = vmatprep.mubr.bf16.mxu0 %v1591
    %1892 = vmatmul.mubr.bf16.gmra.mxu0 %v1590
    %v1893 = vpop.f32.mrf.mxu0
    %v1894 = vadd.f32 0.0, %v1893
    %v1895 = vpop.f32.mrf.mxu0
    %v1896 = vpop.f32.mrf.mxu0
    %v1897 = vpop.f32.mrf.mxu0
    %1898 = vdwg.mxu0
    %v1899 = vmax.f32 %v1725, %v1894
    %s1900 = scalar_lea.vmem [#allocation4], 256
    %v1901 = vld [vmem:[%s1900] sm:$0xf]
    %v1902 = vld [vmem:[%s1900 + $0x4] sm:$0xf]
    %v1903 = vld [vmem:[%s1900 + $0x8] sm:$0xf]
    %v1904 = vld [vmem:[%s1900 + $0xc] sm:$0xf]
    %v1905 = vld [vmem:[%s1900 + $0x10] sm:$0xf]
    %v1906 = vld [vmem:[%s1900 + $0x14] sm:$0xf]
    %v1907 = vld [vmem:[%s1900 + $0x18] sm:$0xf]
    %v1908 = vld [vmem:[%s1900 + $0x1c] sm:$0xf]
    %v1909 = vld [vmem:[%s1900 + $0x20] sm:$0xf]
    %v1910 = vld [vmem:[%s1900 + $0x24] sm:$0xf]
    %v1911 = vld [vmem:[%s1900 + $0x28] sm:$0xf]
    %v1912 = vld [vmem:[%s1900 + $0x2c] sm:$0xf]
    %v1913 = vld [vmem:[%s1900 + $0x30] sm:$0xf]
    %v1914 = vld [vmem:[%s1900 + $0x34] sm:$0xf]
    %v1915 = vld [vmem:[%s1900 + $0x38] sm:$0xf]
    %v1916 = vld [vmem:[%s1900 + $0x3c] sm:$0xf]
    %v1917 = vld [vmem:[%s1900 + $0x40] sm:$0xf]
    %v1918 = vld [vmem:[%s1900 + $0x44] sm:$0xf]
    %v1919 = vld [vmem:[%s1900 + $0x48] sm:$0xf]
    %v1920 = vld [vmem:[%s1900 + $0x4c] sm:$0xf]
    %v1921 = vld [vmem:[%s1900 + $0x50] sm:$0xf]
    %v1922 = vld [vmem:[%s1900 + $0x54] sm:$0xf]
    %v1923 = vld [vmem:[%s1900 + $0x58] sm:$0xf]
    %v1924 = vld [vmem:[%s1900 + $0x5c] sm:$0xf]
    %v1925 = vld [vmem:[%s1900 + $0x60] sm:$0xf]
    %v1926 = vld [vmem:[%s1900 + $0x64] sm:$0xf]
    %v1927 = vld [vmem:[%s1900 + $0x68] sm:$0xf]
    %v1928 = vld [vmem:[%s1900 + $0x6c] sm:$0xf]
    %v1929 = vld [vmem:[%s1900 + $0x70] sm:$0xf]
    %v1930 = vld [vmem:[%s1900 + $0x74] sm:$0xf]
    %v1931 = vld [vmem:[%s1900 + $0x78] sm:$0xf]
    %v1932 = vld [vmem:[%s1900 + $0x7c] sm:$0xf]
    %v1965 = vunpack.c.l.b16 %v1901
    %v1966 = vunpack.c.l.b16 %v1902
    %v1967 = vunpack.c.l.b16 %v1903
    %v1968 = vunpack.c.l.b16 %v1904
    %v1969 = vunpack.c.l.b16 %v1905
    %v1970 = vunpack.c.l.b16 %v1906
    %v1971 = vunpack.c.l.b16 %v1907
    %v1972 = vunpack.c.l.b16 %v1908
    %v1973 = vunpack.c.l.b16 %v1909
    %v1974 = vunpack.c.l.b16 %v1910
    %v1975 = vunpack.c.l.b16 %v1911
    %v1976 = vunpack.c.l.b16 %v1912
    %v1977 = vunpack.c.l.b16 %v1913
    %v1978 = vunpack.c.l.b16 %v1914
    %v1979 = vunpack.c.l.b16 %v1915
    %v1980 = vunpack.c.l.b16 %v1916
    %v1981 = vunpack.c.l.b16 %v1917
    %v1982 = vunpack.c.l.b16 %v1918
    %v1983 = vunpack.c.l.b16 %v1919
    %v1984 = vunpack.c.l.b16 %v1920
    %v1985 = vunpack.c.l.b16 %v1921
    %v1986 = vunpack.c.l.b16 %v1922
    %v1987 = vunpack.c.l.b16 %v1923
    %v1988 = vunpack.c.l.b16 %v1924
    %v1989 = vunpack.c.l.b16 %v1925
    %v1990 = vunpack.c.l.b16 %v1926
    %v1991 = vunpack.c.l.b16 %v1927
    %v1992 = vunpack.c.l.b16 %v1928
    %v1993 = vunpack.c.l.b16 %v1929
    %v1994 = vunpack.c.l.b16 %v1930
    %v1995 = vunpack.c.l.b16 %v1931
    %v1996 = vunpack.c.l.b16 %v1932
    %v1997 = vpack.c.b16 %v1966, %v1965
    %v1998 = vpack.c.b16 %v1968, %v1967
    %v1999 = vpack.c.b16 %v1970, %v1969
    %v2000 = vpack.c.b16 %v1972, %v1971
    %v2001 = vpack.c.b16 %v1974, %v1973
    %v2002 = vpack.c.b16 %v1976, %v1975
    %v2003 = vpack.c.b16 %v1978, %v1977
    %v2004 = vpack.c.b16 %v1980, %v1979
    %v2005 = vpack.c.b16 %v1982, %v1981
    %v2006 = vpack.c.b16 %v1984, %v1983
    %v2007 = vpack.c.b16 %v1986, %v1985
    %v2008 = vpack.c.b16 %v1988, %v1987
    %v2009 = vpack.c.b16 %v1990, %v1989
    %v2010 = vpack.c.b16 %v1992, %v1991
    %v2011 = vpack.c.b16 %v1994, %v1993
    %v2012 = vpack.c.b16 %v1996, %v1995
    %2029 = vmatprep.subr.bf16.mxu0 0
    %2030 = vmatpush1.bf16.msra.mxu0 %v2004
    %2031 = vmatprep.subr.bf16.mxu0 0
    %2032 = vmatpush1.bf16.msra.mxu0 %v2003
    %2033 = vmatprep.subr.bf16.mxu0 0
    %2034 = vmatpush1.bf16.msra.mxu0 %v2002
    %2035 = vmatprep.subr.bf16.mxu0 0
    %2036 = vmatpush1.bf16.msra.mxu0 %v2001
    %2037 = vmatprep.subr.bf16.mxu0 0
    %2038 = vmatpush1.bf16.msra.mxu0 %v2000
    %2039 = vmatprep.subr.bf16.mxu0 0
    %2040 = vmatpush1.bf16.msra.mxu0 %v1999
    %2041 = vmatprep.subr.bf16.mxu0 0
    %2042 = vmatpush1.bf16.msra.mxu0 %v1998
    %2043 = vmatprep.subr.bf16.mxu0 0
    %2044 = vmatpush1.bf16.msra.mxu0 %v1997
    %2045 = vmatprep.subr.bf16.mxu0 0
    %2046 = vmatpush2.bf16.msra.mxu0 %v2012
    %2047 = vmatprep.subr.bf16.mxu0 0
    %2048 = vmatpush2.bf16.msra.mxu0 %v2011
    %2049 = vmatprep.subr.bf16.mxu0 0
    %2050 = vmatpush2.bf16.msra.mxu0 %v2010
    %2051 = vmatprep.subr.bf16.mxu0 0
    %2052 = vmatpush2.bf16.msra.mxu0 %v2009
    %2053 = vmatprep.subr.bf16.mxu0 0
    %2054 = vmatpush2.bf16.msra.mxu0 %v2008
    %2055 = vmatprep.subr.bf16.mxu0 0
    %2056 = vmatpush2.bf16.msra.mxu0 %v2007
    %2057 = vmatprep.subr.bf16.mxu0 0
    %2058 = vmatpush2.bf16.msra.mxu0 %v2006
    %2059 = vmatprep.subr.bf16.mxu0 0
    %2060 = vmatpush2.bf16.msra.mxu0 %v2005
    %2061 = vmatprep.mubr.bf16.mxu0 %v1591
    %2062 = vmatmul.mubr.bf16.gmra.mxu0 %v1590
    %v2063 = vpop.f32.mrf.mxu0
    %v2064 = vadd.f32 0.0, %v2063
    %v2065 = vpop.f32.mrf.mxu0
    %v2066 = vpop.f32.mrf.mxu0
    %v2067 = vpop.f32.mrf.mxu0
    %2068 = vdwg.mxu0
    %v2069 = vmax.f32 %v1899, %v2064
    %s2070 = scalar_lea.vmem [#allocation4], 384
    %v2071 = vld [vmem:[%s2070] sm:$0xf]
    %v2072 = vld [vmem:[%s2070 + $0x4] sm:$0xf]
    %v2073 = vld [vmem:[%s2070 + $0x8] sm:$0xf]
    %v2074 = vld [vmem:[%s2070 + $0xc] sm:$0xf]
    %v2075 = vld [vmem:[%s2070 + $0x10] sm:$0xf]
    %v2076 = vld [vmem:[%s2070 + $0x14] sm:$0xf]
    %v2077 = vld [vmem:[%s2070 + $0x18] sm:$0xf]
    %v2078 = vld [vmem:[%s2070 + $0x1c] sm:$0xf]
    %v2079 = vld [vmem:[%s2070 + $0x20] sm:$0xf]
    %v2080 = vld [vmem:[%s2070 + $0x24] sm:$0xf]
    %v2081 = vld [vmem:[%s2070 + $0x28] sm:$0xf]
    %v2082 = vld [vmem:[%s2070 + $0x2c] sm:$0xf]
    %v2083 = vld [vmem:[%s2070 + $0x30] sm:$0xf]
    %v2084 = vld [vmem:[%s2070 + $0x34] sm:$0xf]
    %v2085 = vld [vmem:[%s2070 + $0x38] sm:$0xf]
    %v2086 = vld [vmem:[%s2070 + $0x3c] sm:$0xf]
    %v2087 = vld [vmem:[%s2070 + $0x40] sm:$0xf]
    %v2088 = vld [vmem:[%s2070 + $0x44] sm:$0xf]
    %v2089 = vld [vmem:[%s2070 + $0x48] sm:$0xf]
    %v2090 = vld [vmem:[%s2070 + $0x4c] sm:$0xf]
    %v2091 = vld [vmem:[%s2070 + $0x50] sm:$0xf]
    %v2092 = vld [vmem:[%s2070 + $0x54] sm:$0xf]
    %v2093 = vld [vmem:[%s2070 + $0x58] sm:$0xf]
    %v2094 = vld [vmem:[%s2070 + $0x5c] sm:$0xf]
    %v2095 = vld [vmem:[%s2070 + $0x60] sm:$0xf]
    %v2096 = vld [vmem:[%s2070 + $0x64] sm:$0xf]
    %v2097 = vld [vmem:[%s2070 + $0x68] sm:$0xf]
    %v2098 = vld [vmem:[%s2070 + $0x6c] sm:$0xf]
    %v2099 = vld [vmem:[%s2070 + $0x70] sm:$0xf]
    %v2100 = vld [vmem:[%s2070 + $0x74] sm:$0xf]
    %v2101 = vld [vmem:[%s2070 + $0x78] sm:$0xf]
    %v2102 = vld [vmem:[%s2070 + $0x7c] sm:$0xf]
    %v2135 = vunpack.c.l.b16 %v2071
    %v2136 = vunpack.c.l.b16 %v2072
    %v2137 = vunpack.c.l.b16 %v2073
    %v2138 = vunpack.c.l.b16 %v2074
    %v2139 = vunpack.c.l.b16 %v2075
    %v2140 = vunpack.c.l.b16 %v2076
    %v2141 = vunpack.c.l.b16 %v2077
    %v2142 = vunpack.c.l.b16 %v2078
    %v2143 = vunpack.c.l.b16 %v2079
    %v2144 = vunpack.c.l.b16 %v2080
    %v2145 = vunpack.c.l.b16 %v2081
    %v2146 = vunpack.c.l.b16 %v2082
    %v2147 = vunpack.c.l.b16 %v2083
    %v2148 = vunpack.c.l.b16 %v2084
    %v2149 = vunpack.c.l.b16 %v2085
    %v2150 = vunpack.c.l.b16 %v2086
    %v2151 = vunpack.c.l.b16 %v2087
    %v2152 = vunpack.c.l.b16 %v2088
    %v2153 = vunpack.c.l.b16 %v2089
    %v2154 = vunpack.c.l.b16 %v2090
    %v2155 = vunpack.c.l.b16 %v2091
    %v2156 = vunpack.c.l.b16 %v2092
    %v2157 = vunpack.c.l.b16 %v2093
    %v2158 = vunpack.c.l.b16 %v2094
    %v2159 = vunpack.c.l.b16 %v2095
    %v2160 = vunpack.c.l.b16 %v2096
    %v2161 = vunpack.c.l.b16 %v2097
    %v2162 = vunpack.c.l.b16 %v2098
    %v2163 = vunpack.c.l.b16 %v2099
    %v2164 = vunpack.c.l.b16 %v2100
    %v2165 = vunpack.c.l.b16 %v2101
    %v2166 = vunpack.c.l.b16 %v2102
    %v2167 = vpack.c.b16 %v2136, %v2135
    %v2168 = vpack.c.b16 %v2138, %v2137
    %v2169 = vpack.c.b16 %v2140, %v2139
    %v2170 = vpack.c.b16 %v2142, %v2141
    %v2171 = vpack.c.b16 %v2144, %v2143
    %v2172 = vpack.c.b16 %v2146, %v2145
    %v2173 = vpack.c.b16 %v2148, %v2147
    %v2174 = vpack.c.b16 %v2150, %v2149
    %v2175 = vpack.c.b16 %v2152, %v2151
    %v2176 = vpack.c.b16 %v2154, %v2153
    %v2177 = vpack.c.b16 %v2156, %v2155
    %v2178 = vpack.c.b16 %v2158, %v2157
    %v2179 = vpack.c.b16 %v2160, %v2159
    %v2180 = vpack.c.b16 %v2162, %v2161
    %v2181 = vpack.c.b16 %v2164, %v2163
    %v2182 = vpack.c.b16 %v2166, %v2165
    %2199 = vmatprep.subr.bf16.mxu0 0
    %2200 = vmatpush1.bf16.msra.mxu0 %v2174
    %2201 = vmatprep.subr.bf16.mxu0 0
    %2202 = vmatpush1.bf16.msra.mxu0 %v2173
    %2203 = vmatprep.subr.bf16.mxu0 0
    %2204 = vmatpush1.bf16.msra.mxu0 %v2172
    %2205 = vmatprep.subr.bf16.mxu0 0
    %2206 = vmatpush1.bf16.msra.mxu0 %v2171
    %2207 = vmatprep.subr.bf16.mxu0 0
    %2208 = vmatpush1.bf16.msra.mxu0 %v2170
    %2209 = vmatprep.subr.bf16.mxu0 0
    %2210 = vmatpush1.bf16.msra.mxu0 %v2169
    %2211 = vmatprep.subr.bf16.mxu0 0
    %2212 = vmatpush1.bf16.msra.mxu0 %v2168
    %2213 = vmatprep.subr.bf16.mxu0 0
    %2214 = vmatpush1.bf16.msra.mxu0 %v2167
    %2215 = vmatprep.subr.bf16.mxu0 0
    %2216 = vmatpush2.bf16.msra.mxu0 %v2182
    %2217 = vmatprep.subr.bf16.mxu0 0
    %2218 = vmatpush2.bf16.msra.mxu0 %v2181
    %2219 = vmatprep.subr.bf16.mxu0 0
    %2220 = vmatpush2.bf16.msra.mxu0 %v2180
    %2221 = vmatprep.subr.bf16.mxu0 0
    %2222 = vmatpush2.bf16.msra.mxu0 %v2179
    %2223 = vmatprep.subr.bf16.mxu0 0
    %2224 = vmatpush2.bf16.msra.mxu0 %v2178
    %2225 = vmatprep.subr.bf16.mxu0 0
    %2226 = vmatpush2.bf16.msra.mxu0 %v2177
    %2227 = vmatprep.subr.bf16.mxu0 0
    %2228 = vmatpush2.bf16.msra.mxu0 %v2176
    %2229 = vmatprep.subr.bf16.mxu0 0
    %2230 = vmatpush2.bf16.msra.mxu0 %v2175
    %2231 = vmatprep.mubr.bf16.mxu0 %v1591
    %2232 = vmatmul.mubr.bf16.gmra.mxu0 %v1590
    %v2233 = vpop.f32.mrf.mxu0
    %v2234 = vadd.f32 0.0, %v2233
    %v2235 = vpop.f32.mrf.mxu0
    %v2236 = vpop.f32.mrf.mxu0
    %v2237 = vpop.f32.mrf.mxu0
    %2238 = vdwg.mxu0
    %v2239 = vmax.f32 %v2069, %v2234
    %v2240 = vpack.c.bf16 %v2239, %v2239
    %v2241 = vld [vmem:[%s6] sm:$0xf]
    %v2242 = vld [vmem:[%s6 + $0x4] sm:$0xf]
    %v2243 = vld [vmem:[%s6 + $0x8] sm:$0xf]
    %v2244 = vld [vmem:[%s6 + $0xc] sm:$0xf]
    %v2245 = vld [vmem:[%s6 + $0x10] sm:$0xf]
    %v2246 = vld [vmem:[%s6 + $0x14] sm:$0xf]
    %v2247 = vld [vmem:[%s6 + $0x18] sm:$0xf]
    %v2248 = vld [vmem:[%s6 + $0x1c] sm:$0xf]
    %v2249 = vld [vmem:[%s6 + $0x20] sm:$0xf]
    %v2250 = vld [vmem:[%s6 + $0x24] sm:$0xf]
    %v2261 = vunpack.c.l.b16 %v2241
    %v2262 = vunpack.c.l.b16 %v2242
    %v2263 = vunpack.c.l.b16 %v2243
    %v2264 = vunpack.c.l.b16 %v2244
    %v2265 = vunpack.c.l.b16 %v2245
    %v2266 = vunpack.c.l.b16 %v2246
    %v2267 = vunpack.c.l.b16 %v2247
    %v2268 = vunpack.c.l.b16 %v2248
    %v2269 = vunpack.c.l.b16 %v2249
    %v2270 = vunpack.c.l.b16 %v2250
    %v2271 = vpack.c.b16 %v2262, %v2261
    %v2272 = vpack.c.b16 %v2264, %v2263
    %v2273 = vpack.c.b16 %v2266, %v2265
    %v2274 = vpack.c.b16 %v2268, %v2267
    %v2275 = vpack.c.b16 %v2270, %v2269
    %vm2281 = vcmask 654336
    %v2283 = vsel %vm2281, %v2240, 0
    %2285 = vmatprep.subr.bf16.mxu0 0
    %2286 = vmatpush1.bf16.msra.mxu0 0
    %2287 = vmatprep.subr.bf16.mxu0 0
    %2288 = vmatpush1.bf16.msra.mxu0 0
    %2289 = vmatprep.subr.bf16.mxu0 0
    %2290 = vmatpush1.bf16.msra.mxu0 0
    %2291 = vmatprep.subr.bf16.mxu0 0
    %2292 = vmatpush1.bf16.msra.mxu0 %v2275
    %2293 = vmatprep.subr.bf16.mxu0 0
    %2294 = vmatpush1.bf16.msra.mxu0 %v2274
    %2295 = vmatprep.subr.bf16.mxu0 0
    %2296 = vmatpush1.bf16.msra.mxu0 %v2273
    %2297 = vmatprep.subr.bf16.mxu0 0
    %2298 = vmatpush1.bf16.msra.mxu0 %v2272
    %2299 = vmatprep.subr.bf16.mxu0 0
    %2300 = vmatpush1.bf16.msra.mxu0 %v2271
    %2301 = vmatprep.subr.bf16.mxu0 0
    %2302 = vmatpush2.bf16.msra.mxu0 0
    %2303 = vmatprep.subr.bf16.mxu0 0
    %2304 = vmatpush2.bf16.msra.mxu0 0
    %2305 = vmatprep.subr.bf16.mxu0 0
    %2306 = vmatpush2.bf16.msra.mxu0 0
    %2307 = vmatprep.subr.bf16.mxu0 0
    %2308 = vmatpush2.bf16.msra.mxu0 0
    %2309 = vmatprep.subr.bf16.mxu0 0
    %2310 = vmatpush2.bf16.msra.mxu0 0
    %2311 = vmatprep.subr.bf16.mxu0 0
    %2312 = vmatpush2.bf16.msra.mxu0 0
    %2313 = vmatprep.subr.bf16.mxu0 0
    %2314 = vmatpush2.bf16.msra.mxu0 0
    %2315 = vmatprep.subr.bf16.mxu0 0
    %2316 = vmatpush2.bf16.msra.mxu0 0
    %2317 = vmatprep.mubr.bf16.mxu0 0
    %2318 = vmatmul.mubr.bf16.gmra.mxu0 %v2283
    %v2319 = vpop.f32.mrf.mxu0
    %v2320 = vadd.f32 0.0, %v2319
    %v2321 = vpop.f32.mrf.mxu0
    %v2322 = vpop.f32.mrf.mxu0
    %v2323 = vpop.f32.mrf.mxu0
    %2324 = vdwg.mxu0
    %s2325 = scalar_lea.vmem %s6, 40
    %v2326 = vld [vmem:[%s2325] sm:$0xf]
    %v2327 = vld [vmem:[%s2325 + $0x4] sm:$0xf]
    %v2328 = vld [vmem:[%s2325 + $0x8] sm:$0xf]
    %v2329 = vld [vmem:[%s2325 + $0xc] sm:$0xf]
    %v2330 = vld [vmem:[%s2325 + $0x10] sm:$0xf]
    %v2331 = vld [vmem:[%s2325 + $0x14] sm:$0xf]
    %v2332 = vld [vmem:[%s2325 + $0x18] sm:$0xf]
    %v2333 = vld [vmem:[%s2325 + $0x1c] sm:$0xf]
    %v2334 = vld [vmem:[%s2325 + $0x20] sm:$0xf]
    %v2335 = vld [vmem:[%s2325 + $0x24] sm:$0xf]
    %v2346 = vunpack.c.l.b16 %v2326
    %v2347 = vunpack.c.l.b16 %v2327
    %v2348 = vunpack.c.l.b16 %v2328
    %v2349 = vunpack.c.l.b16 %v2329
    %v2350 = vunpack.c.l.b16 %v2330
    %v2351 = vunpack.c.l.b16 %v2331
    %v2352 = vunpack.c.l.b16 %v2332
    %v2353 = vunpack.c.l.b16 %v2333
    %v2354 = vunpack.c.l.b16 %v2334
    %v2355 = vunpack.c.l.b16 %v2335
    %v2356 = vpack.c.b16 %v2347, %v2346
    %v2357 = vpack.c.b16 %v2349, %v2348
    %v2358 = vpack.c.b16 %v2351, %v2350
    %v2359 = vpack.c.b16 %v2353, %v2352
    %v2360 = vpack.c.b16 %v2355, %v2354
    %2366 = vmatprep.subr.bf16.mxu0 0
    %2367 = vmatpush1.bf16.msra.mxu0 0
    %2368 = vmatprep.subr.bf16.mxu0 0
    %2369 = vmatpush1.bf16.msra.mxu0 0
    %2370 = vmatprep.subr.bf16.mxu0 0
    %2371 = vmatpush1.bf16.msra.mxu0 0
    %2372 = vmatprep.subr.bf16.mxu0 0
    %2373 = vmatpush1.bf16.msra.mxu0 %v2360
    %2374 = vmatprep.subr.bf16.mxu0 0
    %2375 = vmatpush1.bf16.msra.mxu0 %v2359
    %2376 = vmatprep.subr.bf16.mxu0 0
    %2377 = vmatpush1.bf16.msra.mxu0 %v2358
    %2378 = vmatprep.subr.bf16.mxu0 0
    %2379 = vmatpush1.bf16.msra.mxu0 %v2357
    %2380 = vmatprep.subr.bf16.mxu0 0
    %2381 = vmatpush1.bf16.msra.mxu0 %v2356
    %2382 = vmatprep.subr.bf16.mxu0 0
    %2383 = vmatpush2.bf16.msra.mxu0 0
    %2384 = vmatprep.subr.bf16.mxu0 0
    %2385 = vmatpush2.bf16.msra.mxu0 0
    %2386 = vmatprep.subr.bf16.mxu0 0
    %2387 = vmatpush2.bf16.msra.mxu0 0
    %2388 = vmatprep.subr.bf16.mxu0 0
    %2389 = vmatpush2.bf16.msra.mxu0 0
    %2390 = vmatprep.subr.bf16.mxu0 0
    %2391 = vmatpush2.bf16.msra.mxu0 0
    %2392 = vmatprep.subr.bf16.mxu0 0
    %2393 = vmatpush2.bf16.msra.mxu0 0
    %2394 = vmatprep.subr.bf16.mxu0 0
    %2395 = vmatpush2.bf16.msra.mxu0 0
    %2396 = vmatprep.subr.bf16.mxu0 0
    %2397 = vmatpush2.bf16.msra.mxu0 0
    %2398 = vmatprep.mubr.bf16.mxu0 0
    %2399 = vmatmul.mubr.bf16.gmra.mxu0 %v2283
    %v2400 = vpop.f32.mrf.mxu0
    %v2401 = vadd.f32 0.0, %v2400
    %v2402 = vpop.f32.mrf.mxu0
    %v2403 = vpop.f32.mrf.mxu0
    %v2404 = vpop.f32.mrf.mxu0
    %2405 = vdwg.mxu0
    %v2406 = vmax.f32 %v2320, %v2401
    %s2407 = scalar_lea.vmem %s6, 80
    %v2408 = vld [vmem:[%s2407] sm:$0xf]
    %v2409 = vld [vmem:[%s2407 + $0x4] sm:$0xf]
    %v2410 = vld [vmem:[%s2407 + $0x8] sm:$0xf]
    %v2411 = vld [vmem:[%s2407 + $0xc] sm:$0xf]
    %v2412 = vld [vmem:[%s2407 + $0x10] sm:$0xf]
    %v2413 = vld [vmem:[%s2407 + $0x14] sm:$0xf]
    %v2414 = vld [vmem:[%s2407 + $0x18] sm:$0xf]
    %v2415 = vld [vmem:[%s2407 + $0x1c] sm:$0xf]
    %v2416 = vld [vmem:[%s2407 + $0x20] sm:$0xf]
    %v2417 = vld [vmem:[%s2407 + $0x24] sm:$0xf]
    %v2428 = vunpack.c.l.b16 %v2408
    %v2429 = vunpack.c.l.b16 %v2409
    %v2430 = vunpack.c.l.b16 %v2410
    %v2431 = vunpack.c.l.b16 %v2411
    %v2432 = vunpack.c.l.b16 %v2412
    %v2433 = vunpack.c.l.b16 %v2413
    %v2434 = vunpack.c.l.b16 %v2414
    %v2435 = vunpack.c.l.b16 %v2415
    %v2436 = vunpack.c.l.b16 %v2416
    %v2437 = vunpack.c.l.b16 %v2417
    %v2438 = vpack.c.b16 %v2429, %v2428
    %v2439 = vpack.c.b16 %v2431, %v2430
    %v2440 = vpack.c.b16 %v2433, %v2432
    %v2441 = vpack.c.b16 %v2435, %v2434
    %v2442 = vpack.c.b16 %v2437, %v2436
    %2448 = vmatprep.subr.bf16.mxu0 0
    %2449 = vmatpush1.bf16.msra.mxu0 0
    %2450 = vmatprep.subr.bf16.mxu0 0
    %2451 = vmatpush1.bf16.msra.mxu0 0
    %2452 = vmatprep.subr.bf16.mxu0 0
    %2453 = vmatpush1.bf16.msra.mxu0 0
    %2454 = vmatprep.subr.bf16.mxu0 0
    %2455 = vmatpush1.bf16.msra.mxu0 %v2442
    %2456 = vmatprep.subr.bf16.mxu0 0
    %2457 = vmatpush1.bf16.msra.mxu0 %v2441
    %2458 = vmatprep.subr.bf16.mxu0 0
    %2459 = vmatpush1.bf16.msra.mxu0 %v2440
    %2460 = vmatprep.subr.bf16.mxu0 0
    %2461 = vmatpush1.bf16.msra.mxu0 %v2439
    %2462 = vmatprep.subr.bf16.mxu0 0
    %2463 = vmatpush1.bf16.msra.mxu0 %v2438
    %2464 = vmatprep.subr.bf16.mxu0 0
    %2465 = vmatpush2.bf16.msra.mxu0 0
    %2466 = vmatprep.subr.bf16.mxu0 0
    %2467 = vmatpush2.bf16.msra.mxu0 0
    %2468 = vmatprep.subr.bf16.mxu0 0
    %2469 = vmatpush2.bf16.msra.mxu0 0
    %2470 = vmatprep.subr.bf16.mxu0 0
    %2471 = vmatpush2.bf16.msra.mxu0 0
    %2472 = vmatprep.subr.bf16.mxu0 0
    %2473 = vmatpush2.bf16.msra.mxu0 0
    %2474 = vmatprep.subr.bf16.mxu0 0
    %2475 = vmatpush2.bf16.msra.mxu0 0
    %2476 = vmatprep.subr.bf16.mxu0 0
    %2477 = vmatpush2.bf16.msra.mxu0 0
    %2478 = vmatprep.subr.bf16.mxu0 0
    %2479 = vmatpush2.bf16.msra.mxu0 0
    %2480 = vmatprep.mubr.bf16.mxu0 0
    %2481 = vmatmul.mubr.bf16.gmra.mxu0 %v2283
    %v2482 = vpop.f32.mrf.mxu0
    %v2483 = vadd.f32 0.0, %v2482
    %v2484 = vpop.f32.mrf.mxu0
    %v2485 = vpop.f32.mrf.mxu0
    %v2486 = vpop.f32.mrf.mxu0
    %2487 = vdwg.mxu0
    %v2488 = vmax.f32 %v2406, %v2483
    %s2489 = scalar_lea.vmem %s6, 120
    %v2490 = vld [vmem:[%s2489] sm:$0xf]
    %v2491 = vld [vmem:[%s2489 + $0x4] sm:$0xf]
    %v2492 = vld [vmem:[%s2489 + $0x8] sm:$0xf]
    %v2493 = vld [vmem:[%s2489 + $0xc] sm:$0xf]
    %v2494 = vld [vmem:[%s2489 + $0x10] sm:$0xf]
    %v2495 = vld [vmem:[%s2489 + $0x14] sm:$0xf]
    %v2496 = vld [vmem:[%s2489 + $0x18] sm:$0xf]
    %v2497 = vld [vmem:[%s2489 + $0x1c] sm:$0xf]
    %v2498 = vld [vmem:[%s2489 + $0x20] sm:$0xf]
    %v2499 = vld [vmem:[%s2489 + $0x24] sm:$0xf]
    %v2510 = vunpack.c.l.b16 %v2490
    %v2511 = vunpack.c.l.b16 %v2491
    %v2512 = vunpack.c.l.b16 %v2492
    %v2513 = vunpack.c.l.b16 %v2493
    %v2514 = vunpack.c.l.b16 %v2494
    %v2515 = vunpack.c.l.b16 %v2495
    %v2516 = vunpack.c.l.b16 %v2496
    %v2517 = vunpack.c.l.b16 %v2497
    %v2518 = vunpack.c.l.b16 %v2498
    %v2519 = vunpack.c.l.b16 %v2499
    %v2520 = vpack.c.b16 %v2511, %v2510
    %v2521 = vpack.c.b16 %v2513, %v2512
    %v2522 = vpack.c.b16 %v2515, %v2514
    %v2523 = vpack.c.b16 %v2517, %v2516
    %v2524 = vpack.c.b16 %v2519, %v2518
    %2530 = vmatprep.subr.bf16.mxu0 0
    %2531 = vmatpush1.bf16.msra.mxu0 0
    %2532 = vmatprep.subr.bf16.mxu0 0
    %2533 = vmatpush1.bf16.msra.mxu0 0
    %2534 = vmatprep.subr.bf16.mxu0 0
    %2535 = vmatpush1.bf16.msra.mxu0 0
    %2536 = vmatprep.subr.bf16.mxu0 0
    %2537 = vmatpush1.bf16.msra.mxu0 %v2524
    %2538 = vmatprep.subr.bf16.mxu0 0
    %2539 = vmatpush1.bf16.msra.mxu0 %v2523
    %2540 = vmatprep.subr.bf16.mxu0 0
    %2541 = vmatpush1.bf16.msra.mxu0 %v2522
    %2542 = vmatprep.subr.bf16.mxu0 0
    %2543 = vmatpush1.bf16.msra.mxu0 %v2521
    %2544 = vmatprep.subr.bf16.mxu0 0
    %2545 = vmatpush1.bf16.msra.mxu0 %v2520
    %2546 = vmatprep.subr.bf16.mxu0 0
    %2547 = vmatpush2.bf16.msra.mxu0 0
    %2548 = vmatprep.subr.bf16.mxu0 0
    %2549 = vmatpush2.bf16.msra.mxu0 0
    %2550 = vmatprep.subr.bf16.mxu0 0
    %2551 = vmatpush2.bf16.msra.mxu0 0
    %2552 = vmatprep.subr.bf16.mxu0 0
    %2553 = vmatpush2.bf16.msra.mxu0 0
    %2554 = vmatprep.subr.bf16.mxu0 0
    %2555 = vmatpush2.bf16.msra.mxu0 0
    %2556 = vmatprep.subr.bf16.mxu0 0
    %2557 = vmatpush2.bf16.msra.mxu0 0
    %2558 = vmatprep.subr.bf16.mxu0 0
    %2559 = vmatpush2.bf16.msra.mxu0 0
    %2560 = vmatprep.subr.bf16.mxu0 0
    %2561 = vmatpush2.bf16.msra.mxu0 0
    %2562 = vmatprep.mubr.bf16.mxu0 0
    %2563 = vmatmul.mubr.bf16.gmra.mxu0 %v2283
    %v2564 = vpop.f32.mrf.mxu0
    %v2565 = vadd.f32 0.0, %v2564
    %v2566 = vpop.f32.mrf.mxu0
    %v2567 = vpop.f32.mrf.mxu0
    %v2568 = vpop.f32.mrf.mxu0
    %2569 = vdwg.mxu0
    %v2570 = vmax.f32 %v2488, %v2565
    %v2571 = vpack.c.bf16 %v2570, %v2570
    %v2572 = vld [vmem:[#allocation6] sm:$0xf]
    %v2573 = vld [vmem:[#allocation6 + $0x4] sm:$0xf]
    %v2574 = vld [vmem:[#allocation6 + $0x8] sm:$0xf]
    %v2575 = vld [vmem:[#allocation6 + $0xc] sm:$0x1]
    %v2580 = vunpack.c.l.b16 %v2572
    %v2581 = vunpack.c.l.b16 %v2573
    %v2582 = vunpack.c.l.b16 %v2574
    %v2583 = vunpack.c.l.b16 %v2575
    %v2584 = vpack.c.b16 %v2581, %v2580
    %v2585 = vpack.c.b16 %v2583, %v2582
    %vm2587 = vcmask 203776
    %v2589 = vsel %vm2587, %v2571, 0
    %vm2591 = vcmask 1043456
    %vm2592 = vcmask 1044480
    %v2593 = vsel %vm2591, 4294967295, 65535
    %v2594 = vsel %vm2592, %v2593, 0
    %v2596 = vand.u32 %v2585, %v2594
    %2598 = vmatprep.subr.bf16.mxu0 0
    %2599 = vmatpush1.bf16.msra.mxu0 0
    %2600 = vmatprep.subr.bf16.mxu0 0
    %2601 = vmatpush1.bf16.msra.mxu0 0
    %2602 = vmatprep.subr.bf16.mxu0 0
    %2603 = vmatpush1.bf16.msra.mxu0 0
    %2604 = vmatprep.subr.bf16.mxu0 0
    %2605 = vmatpush1.bf16.msra.mxu0 0
    %2606 = vmatprep.subr.bf16.mxu0 0
    %2607 = vmatpush1.bf16.msra.mxu0 0
    %2608 = vmatprep.subr.bf16.mxu0 0
    %2609 = vmatpush1.bf16.msra.mxu0 0
    %2610 = vmatprep.subr.bf16.mxu0 0
    %2611 = vmatpush1.bf16.msra.mxu0 %v2596
    %2612 = vmatprep.subr.bf16.mxu0 0
    %2613 = vmatpush1.bf16.msra.mxu0 %v2584
    %2614 = vmatprep.subr.bf16.mxu0 0
    %2615 = vmatpush2.bf16.msra.mxu0 0
    %2616 = vmatprep.subr.bf16.mxu0 0
    %2617 = vmatpush2.bf16.msra.mxu0 0
    %2618 = vmatprep.subr.bf16.mxu0 0
    %2619 = vmatpush2.bf16.msra.mxu0 0
    %2620 = vmatprep.subr.bf16.mxu0 0
    %2621 = vmatpush2.bf16.msra.mxu0 0
    %2622 = vmatprep.subr.bf16.mxu0 0
    %2623 = vmatpush2.bf16.msra.mxu0 0
    %2624 = vmatprep.subr.bf16.mxu0 0
    %2625 = vmatpush2.bf16.msra.mxu0 0
    %2626 = vmatprep.subr.bf16.mxu0 0
    %2627 = vmatpush2.bf16.msra.mxu0 0
    %2628 = vmatprep.subr.bf16.mxu0 0
    %2629 = vmatpush2.bf16.msra.mxu0 0
    %2630 = vmatprep.mubr.bf16.mxu0 0
    %2631 = vmatmul.mubr.bf16.gmra.mxu0 %v2589
    %v2632 = vpop.f32.mrf.mxu0
    %v2633 = vadd.f32 0.0, %v2632
    %v2634 = vpop.f32.mrf.mxu0
    %v2635 = vpop.f32.mrf.mxu0
    %v2636 = vpop.f32.mrf.mxu0
    %2637 = vdwg.mxu0
    %v2638 = vld [vmem:[%s9] sm:$0xf]
    %v2639 = vld [vmem:[%s10] sm:$0xff]
    %v2640 = vld [vmem:[%s11] sm:$0xf]
    %v2641 = vld [vmem:[%s11 + $0x4] sm:$0xf]
    %v2642 = vld [vmem:[%s11 + $0x8] sm:$0xf]
    %v2643 = vld [vmem:[%s11 + $0xc] sm:$0xf]
    %v2644 = vld [vmem:[%s11 + $0x10] sm:$0xf]
    %v2645 = vld [vmem:[%s11 + $0x14] sm:$0xf]
    %v2646 = vld [vmem:[%s11 + $0x18] sm:$0xf]
    %v2647 = vld [vmem:[%s11 + $0x1c] sm:$0xf]
    %v2648 = vld [vmem:[%s11 + $0x20] sm:$0xf]
    %v2649 = vld [vmem:[%s12] sm:$0xff]
    %v2650 = vld [vmem:[%s13] sm:$0xff]
    %v2651 = vld [vmem:[%s14] sm:$0xff]
    %v2652 = vpack.c.bf16 %v1549, %v1549
    %2654 = vset.pattern.permute.xlu0 0
    %2655 = vperm.xlu0 %2654, %v2639
    %v2656 = vpop.permute.xlu0 %2655
    %vm2658 = vcmask 64512
    %v2660 = vsel %vm2658, %v2638, 0
    %v2663 = vsel %vm2591, %v2652, 0
    %2665 = vmatprep.subr.bf16.mxu0 0
    %2666 = vmatpush1.bf16.msra.mxu0 0
    %2667 = vmatprep.subr.bf16.mxu0 0
    %2668 = vmatpush1.bf16.msra.mxu0 0
    %2669 = vmatprep.subr.bf16.mxu0 0
    %2670 = vmatpush1.bf16.msra.mxu0 0
    %2671 = vmatprep.subr.bf16.mxu0 0
    %2672 = vmatpush1.bf16.msra.mxu0 0
    %2673 = vmatprep.subr.bf16.mxu0 0
    %2674 = vmatpush1.bf16.msra.mxu0 0
    %2675 = vmatprep.subr.bf16.mxu0 0
    %2676 = vmatpush1.bf16.msra.mxu0 0
    %2677 = vmatprep.subr.bf16.mxu0 0
    %2678 = vmatpush1.bf16.msra.mxu0 0
    %2679 = vmatprep.subr.bf16.mxu0 0
    %2680 = vmatpush1.bf16.msra.mxu0 %v2663
    %2681 = vmatprep.subr.bf16.mxu0 0
    %2682 = vmatpush2.bf16.msra.mxu0 0
    %2683 = vmatprep.subr.bf16.mxu0 0
    %2684 = vmatpush2.bf16.msra.mxu0 0
    %2685 = vmatprep.subr.bf16.mxu0 0
    %2686 = vmatpush2.bf16.msra.mxu0 0
    %2687 = vmatprep.subr.bf16.mxu0 0
    %2688 = vmatpush2.bf16.msra.mxu0 0
    %2689 = vmatprep.subr.bf16.mxu0 0
    %2690 = vmatpush2.bf16.msra.mxu0 0
    %2691 = vmatprep.subr.bf16.mxu0 0
    %2692 = vmatpush2.bf16.msra.mxu0 0
    %2693 = vmatprep.subr.bf16.mxu0 0
    %2694 = vmatpush2.bf16.msra.mxu0 0
    %2695 = vmatprep.subr.bf16.mxu0 0
    %2696 = vmatpush2.bf16.msra.mxu0 0
    %2697 = vmatprep.mubr.bf16.mxu0 0
    %2698 = vmatmul.mubr.bf16.gmra.mxu0 %v2660
    %v2699 = vpop.f32.mrf.mxu0
    %v2700 = vadd.f32 %v2656, %v2699
    %v2701 = vpop.f32.mrf.mxu0
    %v2702 = vpop.f32.mrf.mxu0
    %v2703 = vpop.f32.mrf.mxu0
    %2704 = vdwg.mxu0
    %v2705 = vmax.f32 %v2700, 0.0
    %v2706 = vpack.c.bf16 %v2705, %v2705
    %v2716 = vunpack.c.l.b16 %v2640
    %v2717 = vunpack.c.l.b16 %v2641
    %v2718 = vunpack.c.l.b16 %v2642
    %v2719 = vunpack.c.l.b16 %v2643
    %v2720 = vunpack.c.l.b16 %v2644
    %v2721 = vunpack.c.l.b16 %v2645
    %v2722 = vunpack.c.l.b16 %v2646
    %v2723 = vunpack.c.l.b16 %v2647
    %v2724 = vunpack.c.l.b16 %v2648
    %v2725 = vpack.c.b16 %v2717, %v2716
    %v2726 = vpack.c.b16 %v2719, %v2718
    %v2727 = vpack.c.b16 %v2721, %v2720
    %v2728 = vpack.c.b16 %v2723, %v2722
    %v2729 = vpack.c.b16 %v2724, %v2724
    %v2731 = vsel %vm2658, %v2725, 0
    %v2734 = vsel %vm2658, %v2726, 0
    %v2737 = vsel %vm2658, %v2727, 0
    %v2740 = vsel %vm2658, %v2728, 0
    %v2743 = vsel %vm2658, %v2729, 0
    %v2746 = vsel %vm2591, %v2706, 0
    %2748 = vmatprep.subr.bf16.mxu0 0
    %2749 = vmatpush1.bf16.msra.mxu0 0
    %2750 = vmatprep.subr.bf16.mxu0 0
    %2751 = vmatpush1.bf16.msra.mxu0 0
    %2752 = vmatprep.subr.bf16.mxu0 0
    %2753 = vmatpush1.bf16.msra.mxu0 0
    %2754 = vmatprep.subr.bf16.mxu0 0
    %2755 = vmatpush1.bf16.msra.mxu0 0
    %2756 = vmatprep.subr.bf16.mxu0 0
    %2757 = vmatpush1.bf16.msra.mxu0 0
    %2758 = vmatprep.subr.bf16.mxu0 0
    %2759 = vmatpush1.bf16.msra.mxu0 0
    %2760 = vmatprep.subr.bf16.mxu0 0
    %2761 = vmatpush1.bf16.msra.mxu0 0
    %2762 = vmatprep.subr.bf16.mxu0 0
    %2763 = vmatpush1.bf16.msra.mxu0 %v2746
    %2764 = vmatprep.subr.bf16.mxu0 0
    %2765 = vmatpush2.bf16.msra.mxu0 0
    %2766 = vmatprep.subr.bf16.mxu0 0
    %2767 = vmatpush2.bf16.msra.mxu0 0
    %2768 = vmatprep.subr.bf16.mxu0 0
    %2769 = vmatpush2.bf16.msra.mxu0 0
    %2770 = vmatprep.subr.bf16.mxu0 0
    %2771 = vmatpush2.bf16.msra.mxu0 0
    %2772 = vmatprep.subr.bf16.mxu0 0
    %2773 = vmatpush2.bf16.msra.mxu0 0
    %2774 = vmatprep.subr.bf16.mxu0 0
    %2775 = vmatpush2.bf16.msra.mxu0 0
    %2776 = vmatprep.subr.bf16.mxu0 0
    %2777 = vmatpush2.bf16.msra.mxu0 0
    %2778 = vmatprep.subr.bf16.mxu0 0
    %2779 = vmatpush2.bf16.msra.mxu0 0
    %2780 = vmatprep.mubr.bf16.mxu0 0
    %2781 = vmatmul.mubr.bf16.gmra.mxu0 %v2731
    %v2782 = vpop.f32.mrf.mxu0
    %v2783 = vadd.f32 0.0, %v2782
    %v2784 = vpop.f32.mrf.mxu0
    %v2785 = vpop.f32.mrf.mxu0
    %v2786 = vadd.f32 0.0, %v2785
    %v2787 = vpop.f32.mrf.mxu0
    %2788 = vmatprep.mubr.bf16.mxu0 0
    %2789 = vmatmul.mubr.bf16.gmra.mxu0 %v2734
    %v2790 = vpop.f32.mrf.mxu0
    %v2791 = vadd.f32 0.0, %v2790
    %v2792 = vpop.f32.mrf.mxu0
    %v2793 = vpop.f32.mrf.mxu0
    %v2794 = vadd.f32 0.0, %v2793
    %v2795 = vpop.f32.mrf.mxu0
    %2796 = vmatprep.mubr.bf16.mxu0 0
    %2797 = vmatmul.mubr.bf16.gmra.mxu0 %v2737
    %v2798 = vpop.f32.mrf.mxu0
    %v2799 = vadd.f32 0.0, %v2798
    %v2800 = vpop.f32.mrf.mxu0
    %v2801 = vpop.f32.mrf.mxu0
    %v2802 = vadd.f32 0.0, %v2801
    %v2803 = vpop.f32.mrf.mxu0
    %2804 = vmatprep.mubr.bf16.mxu0 0
    %2805 = vmatmul.mubr.bf16.gmra.mxu0 %v2740
    %v2806 = vpop.f32.mrf.mxu0
    %v2807 = vadd.f32 0.0, %v2806
    %v2808 = vpop.f32.mrf.mxu0
    %v2809 = vpop.f32.mrf.mxu0
    %v2810 = vadd.f32 0.0, %v2809
    %v2811 = vpop.f32.mrf.mxu0
    %2812 = vmatprep.mubr.bf16.mxu0 0
    %2813 = vmatmul.mubr.bf16.gmra.mxu0 %v2743
    %v2814 = vpop.f32.mrf.mxu0
    %v2815 = vadd.f32 0.0, %v2814
    %v2816 = vpop.f32.mrf.mxu0
    %v2817 = vpop.f32.mrf.mxu0
    %v2818 = vpop.f32.mrf.mxu0
    %2819 = vdwg.mxu0
    %v2820 = vpack.c.bf16 %v2786, %v2783
    %v2821 = vpack.c.bf16 %v2794, %v2791
    %v2822 = vpack.c.bf16 %v2802, %v2799
    %v2823 = vpack.c.bf16 %v2810, %v2807
    %v2824 = vpack.c.bf16 %v2815, %v2815
    %v2825 = vld [vmem:[#allocation7] sm:$0xf]
    %v2826 = vld [vmem:[#allocation7 + $0x4] sm:$0xf]
    %v2827 = vld [vmem:[#allocation7 + $0x8] sm:$0xf]
    %v2828 = vld [vmem:[#allocation7 + $0xc] sm:$0x1]
    %v2833 = vunpack.c.l.b16 %v2825
    %v2834 = vunpack.c.l.b16 %v2826
    %v2835 = vunpack.c.l.b16 %v2827
    %v2836 = vunpack.c.l.b16 %v2828
    %v2837 = vpack.c.b16 %v2834, %v2833
    %v2838 = vpack.c.b16 %v2836, %v2835
    %v2841 = vsel %vm2587, %v2820, 0
    %v2844 = vand.u32 %v2838, %v2594
    %2846 = vmatprep.subr.bf16.mxu0 0
    %2847 = vmatpush1.bf16.msra.mxu0 0
    %2848 = vmatprep.subr.bf16.mxu0 0
    %2849 = vmatpush1.bf16.msra.mxu0 0
    %2850 = vmatprep.subr.bf16.mxu0 0
    %2851 = vmatpush1.bf16.msra.mxu0 0
    %2852 = vmatprep.subr.bf16.mxu0 0
    %2853 = vmatpush1.bf16.msra.mxu0 0
    %2854 = vmatprep.subr.bf16.mxu0 0
    %2855 = vmatpush1.bf16.msra.mxu0 0
    %2856 = vmatprep.subr.bf16.mxu0 0
    %2857 = vmatpush1.bf16.msra.mxu0 0
    %2858 = vmatprep.subr.bf16.mxu0 0
    %2859 = vmatpush1.bf16.msra.mxu0 %v2844
    %2860 = vmatprep.subr.bf16.mxu0 0
    %2861 = vmatpush1.bf16.msra.mxu0 %v2837
    %2862 = vmatprep.subr.bf16.mxu0 0
    %2863 = vmatpush2.bf16.msra.mxu0 0
    %2864 = vmatprep.subr.bf16.mxu0 0
    %2865 = vmatpush2.bf16.msra.mxu0 0
    %2866 = vmatprep.subr.bf16.mxu0 0
    %2867 = vmatpush2.bf16.msra.mxu0 0
    %2868 = vmatprep.subr.bf16.mxu0 0
    %2869 = vmatpush2.bf16.msra.mxu0 0
    %2870 = vmatprep.subr.bf16.mxu0 0
    %2871 = vmatpush2.bf16.msra.mxu0 0
    %2872 = vmatprep.subr.bf16.mxu0 0
    %2873 = vmatpush2.bf16.msra.mxu0 0
    %2874 = vmatprep.subr.bf16.mxu0 0
    %2875 = vmatpush2.bf16.msra.mxu0 0
    %2876 = vmatprep.subr.bf16.mxu0 0
    %2877 = vmatpush2.bf16.msra.mxu0 0
    %2878 = vmatprep.mubr.bf16.mxu0 0
    %2879 = vmatmul.mubr.bf16.gmra.mxu0 %v2841
    %v2880 = vpop.f32.mrf.mxu0
    %v2881 = vadd.f32 0.0, %v2880
    %v2882 = vpop.f32.mrf.mxu0
    %v2883 = vpop.f32.mrf.mxu0
    %v2884 = vpop.f32.mrf.mxu0
    %2885 = vdwg.mxu0
    %v2886 = vadd.f32 %v2649, %v2881
    %s2887 = scalar_lea.vmem [#allocation7], 16
    %v2888 = vld [vmem:[%s2887] sm:$0xf]
    %v2889 = vld [vmem:[%s2887 + $0x4] sm:$0xf]
    %v2890 = vld [vmem:[%s2887 + $0x8] sm:$0xf]
    %v2891 = vld [vmem:[%s2887 + $0xc] sm:$0x1]
    %v2893 = vrot.slane %v2820, 4
    %v2898 = vunpack.c.l.b16 %v2888
    %v2899 = vunpack.c.l.b16 %v2889
    %v2900 = vunpack.c.l.b16 %v2890
    %v2901 = vunpack.c.l.b16 %v2891
    %v2902 = vpack.c.b16 %v2899, %v2898
    %v2903 = vpack.c.b16 %v2901, %v2900
    %v2906 = vsel %vm2587, %v2893, 0
    %v2909 = vand.u32 %v2903, %v2594
    %2911 = vmatprep.subr.bf16.mxu0 0
    %2912 = vmatpush1.bf16.msra.mxu0 0
    %2913 = vmatprep.subr.bf16.mxu0 0
    %2914 = vmatpush1.bf16.msra.mxu0 0
    %2915 = vmatprep.subr.bf16.mxu0 0
    %2916 = vmatpush1.bf16.msra.mxu0 0
    %2917 = vmatprep.subr.bf16.mxu0 0
    %2918 = vmatpush1.bf16.msra.mxu0 0
    %2919 = vmatprep.subr.bf16.mxu0 0
    %2920 = vmatpush1.bf16.msra.mxu0 0
    %2921 = vmatprep.subr.bf16.mxu0 0
    %2922 = vmatpush1.bf16.msra.mxu0 0
    %2923 = vmatprep.subr.bf16.mxu0 0
    %2924 = vmatpush1.bf16.msra.mxu0 %v2909
    %2925 = vmatprep.subr.bf16.mxu0 0
    %2926 = vmatpush1.bf16.msra.mxu0 %v2902
    %2927 = vmatprep.subr.bf16.mxu0 0
    %2928 = vmatpush2.bf16.msra.mxu0 0
    %2929 = vmatprep.subr.bf16.mxu0 0
    %2930 = vmatpush2.bf16.msra.mxu0 0
    %2931 = vmatprep.subr.bf16.mxu0 0
    %2932 = vmatpush2.bf16.msra.mxu0 0
    %2933 = vmatprep.subr.bf16.mxu0 0
    %2934 = vmatpush2.bf16.msra.mxu0 0
    %2935 = vmatprep.subr.bf16.mxu0 0
    %2936 = vmatpush2.bf16.msra.mxu0 0
    %2937 = vmatprep.subr.bf16.mxu0 0
    %2938 = vmatpush2.bf16.msra.mxu0 0
    %2939 = vmatprep.subr.bf16.mxu0 0
    %2940 = vmatpush2.bf16.msra.mxu0 0
    %2941 = vmatprep.subr.bf16.mxu0 0
    %2942 = vmatpush2.bf16.msra.mxu0 0
    %2943 = vmatprep.mubr.bf16.mxu0 0
    %2944 = vmatmul.mubr.bf16.gmra.mxu0 %v2906
    %v2945 = vpop.f32.mrf.mxu0
    %v2946 = vadd.f32 0.0, %v2945
    %v2947 = vpop.f32.mrf.mxu0
    %v2948 = vpop.f32.mrf.mxu0
    %v2949 = vpop.f32.mrf.mxu0
    %2950 = vdwg.mxu0
    %v2951 = vadd.f32 %v2886, %v2946
    %s2952 = scalar_lea.vmem [#allocation7], 32
    %v2953 = vld [vmem:[%s2952] sm:$0xf]
    %v2954 = vld [vmem:[%s2952 + $0x4] sm:$0xf]
    %v2955 = vld [vmem:[%s2952 + $0x8] sm:$0xf]
    %v2956 = vld [vmem:[%s2952 + $0xc] sm:$0x1]
    %v2961 = vunpack.c.l.b16 %v2953
    %v2962 = vunpack.c.l.b16 %v2954
    %v2963 = vunpack.c.l.b16 %v2955
    %v2964 = vunpack.c.l.b16 %v2956
    %v2965 = vpack.c.b16 %v2962, %v2961
    %v2966 = vpack.c.b16 %v2964, %v2963
    %v2969 = vsel %vm2587, %v2821, 0
    %v2972 = vand.u32 %v2966, %v2594
    %2974 = vmatprep.subr.bf16.mxu0 0
    %2975 = vmatpush1.bf16.msra.mxu0 0
    %2976 = vmatprep.subr.bf16.mxu0 0
    %2977 = vmatpush1.bf16.msra.mxu0 0
    %2978 = vmatprep.subr.bf16.mxu0 0
    %2979 = vmatpush1.bf16.msra.mxu0 0
    %2980 = vmatprep.subr.bf16.mxu0 0
    %2981 = vmatpush1.bf16.msra.mxu0 0
    %2982 = vmatprep.subr.bf16.mxu0 0
    %2983 = vmatpush1.bf16.msra.mxu0 0
    %2984 = vmatprep.subr.bf16.mxu0 0
    %2985 = vmatpush1.bf16.msra.mxu0 0
    %2986 = vmatprep.subr.bf16.mxu0 0
    %2987 = vmatpush1.bf16.msra.mxu0 %v2972
    %2988 = vmatprep.subr.bf16.mxu0 0
    %2989 = vmatpush1.bf16.msra.mxu0 %v2965
    %2990 = vmatprep.subr.bf16.mxu0 0
    %2991 = vmatpush2.bf16.msra.mxu0 0
    %2992 = vmatprep.subr.bf16.mxu0 0
    %2993 = vmatpush2.bf16.msra.mxu0 0
    %2994 = vmatprep.subr.bf16.mxu0 0
    %2995 = vmatpush2.bf16.msra.mxu0 0
    %2996 = vmatprep.subr.bf16.mxu0 0
    %2997 = vmatpush2.bf16.msra.mxu0 0
    %2998 = vmatprep.subr.bf16.mxu0 0
    %2999 = vmatpush2.bf16.msra.mxu0 0
    %3000 = vmatprep.subr.bf16.mxu0 0
    %3001 = vmatpush2.bf16.msra.mxu0 0
    %3002 = vmatprep.subr.bf16.mxu0 0
    %3003 = vmatpush2.bf16.msra.mxu0 0
    %3004 = vmatprep.subr.bf16.mxu0 0
    %3005 = vmatpush2.bf16.msra.mxu0 0
    %3006 = vmatprep.mubr.bf16.mxu0 0
    %3007 = vmatmul.mubr.bf16.gmra.mxu0 %v2969
    %v3008 = vpop.f32.mrf.mxu0
    %v3009 = vadd.f32 0.0, %v3008
    %v3010 = vpop.f32.mrf.mxu0
    %v3011 = vpop.f32.mrf.mxu0
    %v3012 = vpop.f32.mrf.mxu0
    %3013 = vdwg.mxu0
    %v3014 = vadd.f32 %v2951, %v3009
    %s3015 = scalar_lea.vmem [#allocation7], 48
    %v3016 = vld [vmem:[%s3015] sm:$0xf]
    %v3017 = vld [vmem:[%s3015 + $0x4] sm:$0xf]
    %v3018 = vld [vmem:[%s3015 + $0x8] sm:$0xf]
    %v3019 = vld [vmem:[%s3015 + $0xc] sm:$0x1]
    %v3021 = vrot.slane %v2821, 4
    %v3026 = vunpack.c.l.b16 %v3016
    %v3027 = vunpack.c.l.b16 %v3017
    %v3028 = vunpack.c.l.b16 %v3018
    %v3029 = vunpack.c.l.b16 %v3019
    %v3030 = vpack.c.b16 %v3027, %v3026
    %v3031 = vpack.c.b16 %v3029, %v3028
    %v3034 = vsel %vm2587, %v3021, 0
    %v3037 = vand.u32 %v3031, %v2594
    %3039 = vmatprep.subr.bf16.mxu0 0
    %3040 = vmatpush1.bf16.msra.mxu0 0
    %3041 = vmatprep.subr.bf16.mxu0 0
    %3042 = vmatpush1.bf16.msra.mxu0 0
    %3043 = vmatprep.subr.bf16.mxu0 0
    %3044 = vmatpush1.bf16.msra.mxu0 0
    %3045 = vmatprep.subr.bf16.mxu0 0
    %3046 = vmatpush1.bf16.msra.mxu0 0
    %3047 = vmatprep.subr.bf16.mxu0 0
    %3048 = vmatpush1.bf16.msra.mxu0 0
    %3049 = vmatprep.subr.bf16.mxu0 0
    %3050 = vmatpush1.bf16.msra.mxu0 0
    %3051 = vmatprep.subr.bf16.mxu0 0
    %3052 = vmatpush1.bf16.msra.mxu0 %v3037
    %3053 = vmatprep.subr.bf16.mxu0 0
    %3054 = vmatpush1.bf16.msra.mxu0 %v3030
    %3055 = vmatprep.subr.bf16.mxu0 0
    %3056 = vmatpush2.bf16.msra.mxu0 0
    %3057 = vmatprep.subr.bf16.mxu0 0
    %3058 = vmatpush2.bf16.msra.mxu0 0
    %3059 = vmatprep.subr.bf16.mxu0 0
    %3060 = vmatpush2.bf16.msra.mxu0 0
    %3061 = vmatprep.subr.bf16.mxu0 0
    %3062 = vmatpush2.bf16.msra.mxu0 0
    %3063 = vmatprep.subr.bf16.mxu0 0
    %3064 = vmatpush2.bf16.msra.mxu0 0
    %3065 = vmatprep.subr.bf16.mxu0 0
    %3066 = vmatpush2.bf16.msra.mxu0 0
    %3067 = vmatprep.subr.bf16.mxu0 0
    %3068 = vmatpush2.bf16.msra.mxu0 0
    %3069 = vmatprep.subr.bf16.mxu0 0
    %3070 = vmatpush2.bf16.msra.mxu0 0
    %3071 = vmatprep.mubr.bf16.mxu0 0
    %3072 = vmatmul.mubr.bf16.gmra.mxu0 %v3034
    %v3073 = vpop.f32.mrf.mxu0
    %v3074 = vadd.f32 0.0, %v3073
    %v3075 = vpop.f32.mrf.mxu0
    %v3076 = vpop.f32.mrf.mxu0
    %v3077 = vpop.f32.mrf.mxu0
    %3078 = vdwg.mxu0
    %v3079 = vadd.f32 %v3014, %v3074
    %s3080 = scalar_lea.vmem [#allocation7], 64
    %v3081 = vld [vmem:[%s3080] sm:$0xf]
    %v3082 = vld [vmem:[%s3080 + $0x4] sm:$0xf]
    %v3083 = vld [vmem:[%s3080 + $0x8] sm:$0xf]
    %v3084 = vld [vmem:[%s3080 + $0xc] sm:$0x1]
    %v3089 = vunpack.c.l.b16 %v3081
    %v3090 = vunpack.c.l.b16 %v3082
    %v3091 = vunpack.c.l.b16 %v3083
    %v3092 = vunpack.c.l.b16 %v3084
    %v3093 = vpack.c.b16 %v3090, %v3089
    %v3094 = vpack.c.b16 %v3092, %v3091
    %v3097 = vsel %vm2587, %v2822, 0
    %v3100 = vand.u32 %v3094, %v2594
    %3102 = vmatprep.subr.bf16.mxu0 0
    %3103 = vmatpush1.bf16.msra.mxu0 0
    %3104 = vmatprep.subr.bf16.mxu0 0
    %3105 = vmatpush1.bf16.msra.mxu0 0
    %3106 = vmatprep.subr.bf16.mxu0 0
    %3107 = vmatpush1.bf16.msra.mxu0 0
    %3108 = vmatprep.subr.bf16.mxu0 0
    %3109 = vmatpush1.bf16.msra.mxu0 0
    %3110 = vmatprep.subr.bf16.mxu0 0
    %3111 = vmatpush1.bf16.msra.mxu0 0
    %3112 = vmatprep.subr.bf16.mxu0 0
    %3113 = vmatpush1.bf16.msra.mxu0 0
    %3114 = vmatprep.subr.bf16.mxu0 0
    %3115 = vmatpush1.bf16.msra.mxu0 %v3100
    %3116 = vmatprep.subr.bf16.mxu0 0
    %3117 = vmatpush1.bf16.msra.mxu0 %v3093
    %3118 = vmatprep.subr.bf16.mxu0 0
    %3119 = vmatpush2.bf16.msra.mxu0 0
    %3120 = vmatprep.subr.bf16.mxu0 0
    %3121 = vmatpush2.bf16.msra.mxu0 0
    %3122 = vmatprep.subr.bf16.mxu0 0
    %3123 = vmatpush2.bf16.msra.mxu0 0
    %3124 = vmatprep.subr.bf16.mxu0 0
    %3125 = vmatpush2.bf16.msra.mxu0 0
    %3126 = vmatprep.subr.bf16.mxu0 0
    %3127 = vmatpush2.bf16.msra.mxu0 0
    %3128 = vmatprep.subr.bf16.mxu0 0
    %3129 = vmatpush2.bf16.msra.mxu0 0
    %3130 = vmatprep.subr.bf16.mxu0 0
    %3131 = vmatpush2.bf16.msra.mxu0 0
    %3132 = vmatprep.subr.bf16.mxu0 0
    %3133 = vmatpush2.bf16.msra.mxu0 0
    %3134 = vmatprep.mubr.bf16.mxu0 0
    %3135 = vmatmul.mubr.bf16.gmra.mxu0 %v3097
    %v3136 = vpop.f32.mrf.mxu0
    %v3137 = vadd.f32 0.0, %v3136
    %v3138 = vpop.f32.mrf.mxu0
    %v3139 = vpop.f32.mrf.mxu0
    %v3140 = vpop.f32.mrf.mxu0
    %3141 = vdwg.mxu0
    %v3142 = vadd.f32 %v3079, %v3137
    %s3143 = scalar_lea.vmem [#allocation7], 80
    %v3144 = vld [vmem:[%s3143] sm:$0xf]
    %v3145 = vld [vmem:[%s3143 + $0x4] sm:$0xf]
    %v3146 = vld [vmem:[%s3143 + $0x8] sm:$0xf]
    %v3147 = vld [vmem:[%s3143 + $0xc] sm:$0x1]
    %v3149 = vrot.slane %v2822, 4
    %v3154 = vunpack.c.l.b16 %v3144
    %v3155 = vunpack.c.l.b16 %v3145
    %v3156 = vunpack.c.l.b16 %v3146
    %v3157 = vunpack.c.l.b16 %v3147
    %v3158 = vpack.c.b16 %v3155, %v3154
    %v3159 = vpack.c.b16 %v3157, %v3156
    %v3162 = vsel %vm2587, %v3149, 0
    %v3165 = vand.u32 %v3159, %v2594
    %3167 = vmatprep.subr.bf16.mxu0 0
    %3168 = vmatpush1.bf16.msra.mxu0 0
    %3169 = vmatprep.subr.bf16.mxu0 0
    %3170 = vmatpush1.bf16.msra.mxu0 0
    %3171 = vmatprep.subr.bf16.mxu0 0
    %3172 = vmatpush1.bf16.msra.mxu0 0
    %3173 = vmatprep.subr.bf16.mxu0 0
    %3174 = vmatpush1.bf16.msra.mxu0 0
    %3175 = vmatprep.subr.bf16.mxu0 0
    %3176 = vmatpush1.bf16.msra.mxu0 0
    %3177 = vmatprep.subr.bf16.mxu0 0
    %3178 = vmatpush1.bf16.msra.mxu0 0
    %3179 = vmatprep.subr.bf16.mxu0 0
    %3180 = vmatpush1.bf16.msra.mxu0 %v3165
    %3181 = vmatprep.subr.bf16.mxu0 0
    %3182 = vmatpush1.bf16.msra.mxu0 %v3158
    %3183 = vmatprep.subr.bf16.mxu0 0
    %3184 = vmatpush2.bf16.msra.mxu0 0
    %3185 = vmatprep.subr.bf16.mxu0 0
    %3186 = vmatpush2.bf16.msra.mxu0 0
    %3187 = vmatprep.subr.bf16.mxu0 0
    %3188 = vmatpush2.bf16.msra.mxu0 0
    %3189 = vmatprep.subr.bf16.mxu0 0
    %3190 = vmatpush2.bf16.msra.mxu0 0
    %3191 = vmatprep.subr.bf16.mxu0 0
    %3192 = vmatpush2.bf16.msra.mxu0 0
    %3193 = vmatprep.subr.bf16.mxu0 0
    %3194 = vmatpush2.bf16.msra.mxu0 0
    %3195 = vmatprep.subr.bf16.mxu0 0
    %3196 = vmatpush2.bf16.msra.mxu0 0
    %3197 = vmatprep.subr.bf16.mxu0 0
    %3198 = vmatpush2.bf16.msra.mxu0 0
    %3199 = vmatprep.mubr.bf16.mxu0 0
    %3200 = vmatmul.mubr.bf16.gmra.mxu0 %v3162
    %v3201 = vpop.f32.mrf.mxu0
    %v3202 = vadd.f32 0.0, %v3201
    %v3203 = vpop.f32.mrf.mxu0
    %v3204 = vpop.f32.mrf.mxu0
    %v3205 = vpop.f32.mrf.mxu0
    %3206 = vdwg.mxu0
    %v3207 = vadd.f32 %v3142, %v3202
    %s3208 = scalar_lea.vmem [#allocation7], 96
    %v3209 = vld [vmem:[%s3208] sm:$0xf]
    %v3210 = vld [vmem:[%s3208 + $0x4] sm:$0xf]
    %v3211 = vld [vmem:[%s3208 + $0x8] sm:$0xf]
    %v3212 = vld [vmem:[%s3208 + $0xc] sm:$0x1]
    %v3217 = vunpack.c.l.b16 %v3209
    %v3218 = vunpack.c.l.b16 %v3210
    %v3219 = vunpack.c.l.b16 %v3211
    %v3220 = vunpack.c.l.b16 %v3212
    %v3221 = vpack.c.b16 %v3218, %v3217
    %v3222 = vpack.c.b16 %v3220, %v3219
    %v3225 = vsel %vm2587, %v2823, 0
    %v3228 = vand.u32 %v3222, %v2594
    %3230 = vmatprep.subr.bf16.mxu0 0
    %3231 = vmatpush1.bf16.msra.mxu0 0
    %3232 = vmatprep.subr.bf16.mxu0 0
    %3233 = vmatpush1.bf16.msra.mxu0 0
    %3234 = vmatprep.subr.bf16.mxu0 0
    %3235 = vmatpush1.bf16.msra.mxu0 0
    %3236 = vmatprep.subr.bf16.mxu0 0
    %3237 = vmatpush1.bf16.msra.mxu0 0
    %3238 = vmatprep.subr.bf16.mxu0 0
    %3239 = vmatpush1.bf16.msra.mxu0 0
    %3240 = vmatprep.subr.bf16.mxu0 0
    %3241 = vmatpush1.bf16.msra.mxu0 0
    %3242 = vmatprep.subr.bf16.mxu0 0
    %3243 = vmatpush1.bf16.msra.mxu0 %v3228
    %3244 = vmatprep.subr.bf16.mxu0 0
    %3245 = vmatpush1.bf16.msra.mxu0 %v3221
    %3246 = vmatprep.subr.bf16.mxu0 0
    %3247 = vmatpush2.bf16.msra.mxu0 0
    %3248 = vmatprep.subr.bf16.mxu0 0
    %3249 = vmatpush2.bf16.msra.mxu0 0
    %3250 = vmatprep.subr.bf16.mxu0 0
    %3251 = vmatpush2.bf16.msra.mxu0 0
    %3252 = vmatprep.subr.bf16.mxu0 0
    %3253 = vmatpush2.bf16.msra.mxu0 0
    %3254 = vmatprep.subr.bf16.mxu0 0
    %3255 = vmatpush2.bf16.msra.mxu0 0
    %3256 = vmatprep.subr.bf16.mxu0 0
    %3257 = vmatpush2.bf16.msra.mxu0 0
    %3258 = vmatprep.subr.bf16.mxu0 0
    %3259 = vmatpush2.bf16.msra.mxu0 0
    %3260 = vmatprep.subr.bf16.mxu0 0
    %3261 = vmatpush2.bf16.msra.mxu0 0
    %3262 = vmatprep.mubr.bf16.mxu0 0
    %3263 = vmatmul.mubr.bf16.gmra.mxu0 %v3225
    %v3264 = vpop.f32.mrf.mxu0
    %v3265 = vadd.f32 0.0, %v3264
    %v3266 = vpop.f32.mrf.mxu0
    %v3267 = vpop.f32.mrf.mxu0
    %v3268 = vpop.f32.mrf.mxu0
    %3269 = vdwg.mxu0
    %v3270 = vadd.f32 %v3207, %v3265
    %s3271 = scalar_lea.vmem [#allocation7], 112
    %v3272 = vld [vmem:[%s3271] sm:$0xf]
    %v3273 = vld [vmem:[%s3271 + $0x4] sm:$0xf]
    %v3274 = vld [vmem:[%s3271 + $0x8] sm:$0xf]
    %v3275 = vld [vmem:[%s3271 + $0xc] sm:$0x1]
    %v3277 = vrot.slane %v2823, 4
    %v3282 = vunpack.c.l.b16 %v3272
    %v3283 = vunpack.c.l.b16 %v3273
    %v3284 = vunpack.c.l.b16 %v3274
    %v3285 = vunpack.c.l.b16 %v3275
    %v3286 = vpack.c.b16 %v3283, %v3282
    %v3287 = vpack.c.b16 %v3285, %v3284
    %v3290 = vsel %vm2587, %v3277, 0
    %v3293 = vand.u32 %v3287, %v2594
    %3295 = vmatprep.subr.bf16.mxu0 0
    %3296 = vmatpush1.bf16.msra.mxu0 0
    %3297 = vmatprep.subr.bf16.mxu0 0
    %3298 = vmatpush1.bf16.msra.mxu0 0
    %3299 = vmatprep.subr.bf16.mxu0 0
    %3300 = vmatpush1.bf16.msra.mxu0 0
    %3301 = vmatprep.subr.bf16.mxu0 0
    %3302 = vmatpush1.bf16.msra.mxu0 0
    %3303 = vmatprep.subr.bf16.mxu0 0
    %3304 = vmatpush1.bf16.msra.mxu0 0
    %3305 = vmatprep.subr.bf16.mxu0 0
    %3306 = vmatpush1.bf16.msra.mxu0 0
    %3307 = vmatprep.subr.bf16.mxu0 0
    %3308 = vmatpush1.bf16.msra.mxu0 %v3293
    %3309 = vmatprep.subr.bf16.mxu0 0
    %3310 = vmatpush1.bf16.msra.mxu0 %v3286
    %3311 = vmatprep.subr.bf16.mxu0 0
    %3312 = vmatpush2.bf16.msra.mxu0 0
    %3313 = vmatprep.subr.bf16.mxu0 0
    %3314 = vmatpush2.bf16.msra.mxu0 0
    %3315 = vmatprep.subr.bf16.mxu0 0
    %3316 = vmatpush2.bf16.msra.mxu0 0
    %3317 = vmatprep.subr.bf16.mxu0 0
    %3318 = vmatpush2.bf16.msra.mxu0 0
    %3319 = vmatprep.subr.bf16.mxu0 0
    %3320 = vmatpush2.bf16.msra.mxu0 0
    %3321 = vmatprep.subr.bf16.mxu0 0
    %3322 = vmatpush2.bf16.msra.mxu0 0
    %3323 = vmatprep.subr.bf16.mxu0 0
    %3324 = vmatpush2.bf16.msra.mxu0 0
    %3325 = vmatprep.subr.bf16.mxu0 0
    %3326 = vmatpush2.bf16.msra.mxu0 0
    %3327 = vmatprep.mubr.bf16.mxu0 0
    %3328 = vmatmul.mubr.bf16.gmra.mxu0 %v3290
    %v3329 = vpop.f32.mrf.mxu0
    %v3330 = vadd.f32 0.0, %v3329
    %v3331 = vpop.f32.mrf.mxu0
    %v3332 = vpop.f32.mrf.mxu0
    %v3333 = vpop.f32.mrf.mxu0
    %3334 = vdwg.mxu0
    %v3335 = vadd.f32 %v3270, %v3330
    %s3336 = scalar_lea.vmem [#allocation7], 128
    %v3337 = vld [vmem:[%s3336] sm:$0xf]
    %v3338 = vld [vmem:[%s3336 + $0x4] sm:$0xf]
    %v3339 = vld [vmem:[%s3336 + $0x8] sm:$0xf]
    %v3340 = vld [vmem:[%s3336 + $0xc] sm:$0x1]
    %v3345 = vunpack.c.l.b16 %v3337
    %v3346 = vunpack.c.l.b16 %v3338
    %v3347 = vunpack.c.l.b16 %v3339
    %v3348 = vunpack.c.l.b16 %v3340
    %v3349 = vpack.c.b16 %v3346, %v3345
    %v3350 = vpack.c.b16 %v3348, %v3347
    %v3353 = vsel %vm2587, %v2824, 0
    %v3356 = vand.u32 %v3350, %v2594
    %3358 = vmatprep.subr.bf16.mxu0 0
    %3359 = vmatpush1.bf16.msra.mxu0 0
    %3360 = vmatprep.subr.bf16.mxu0 0
    %3361 = vmatpush1.bf16.msra.mxu0 0
    %3362 = vmatprep.subr.bf16.mxu0 0
    %3363 = vmatpush1.bf16.msra.mxu0 0
    %3364 = vmatprep.subr.bf16.mxu0 0
    %3365 = vmatpush1.bf16.msra.mxu0 0
    %3366 = vmatprep.subr.bf16.mxu0 0
    %3367 = vmatpush1.bf16.msra.mxu0 0
    %3368 = vmatprep.subr.bf16.mxu0 0
    %3369 = vmatpush1.bf16.msra.mxu0 0
    %3370 = vmatprep.subr.bf16.mxu0 0
    %3371 = vmatpush1.bf16.msra.mxu0 %v3356
    %3372 = vmatprep.subr.bf16.mxu0 0
    %3373 = vmatpush1.bf16.msra.mxu0 %v3349
    %3374 = vmatprep.subr.bf16.mxu0 0
    %3375 = vmatpush2.bf16.msra.mxu0 0
    %3376 = vmatprep.subr.bf16.mxu0 0
    %3377 = vmatpush2.bf16.msra.mxu0 0
    %3378 = vmatprep.subr.bf16.mxu0 0
    %3379 = vmatpush2.bf16.msra.mxu0 0
    %3380 = vmatprep.subr.bf16.mxu0 0
    %3381 = vmatpush2.bf16.msra.mxu0 0
    %3382 = vmatprep.subr.bf16.mxu0 0
    %3383 = vmatpush2.bf16.msra.mxu0 0
    %3384 = vmatprep.subr.bf16.mxu0 0
    %3385 = vmatpush2.bf16.msra.mxu0 0
    %3386 = vmatprep.subr.bf16.mxu0 0
    %3387 = vmatpush2.bf16.msra.mxu0 0
    %3388 = vmatprep.subr.bf16.mxu0 0
    %3389 = vmatpush2.bf16.msra.mxu0 0
    %3390 = vmatprep.mubr.bf16.mxu0 0
    %3391 = vmatmul.mubr.bf16.gmra.mxu0 %v3353
    %v3392 = vpop.f32.mrf.mxu0
    %v3393 = vadd.f32 0.0, %v3392
    %v3394 = vpop.f32.mrf.mxu0
    %v3395 = vpop.f32.mrf.mxu0
    %v3396 = vpop.f32.mrf.mxu0
    %3397 = vdwg.mxu0
    %v3398 = vadd.f32 %v3335, %v3393
    %3400 = vset.pattern.permute.xlu0 0
    %3401 = vperm.xlu0 %3400, %v2650
    %v3402 = vpop.permute.xlu0 %3401
    %v3404 = vmul.f32 %v3398, %v3402
    %3405 = vadd.xlane.f32.xlu0 %v3404
    %v3406 = vpop.xlane.xlu0 %3405
    %v3408 = vsel %vm2658, %v2651, 0
    %3410 = vmatprep.subr.mxu0 0.0
    %3411 = vmatpush1.msra.mxu0 0.0
    %3412 = vmatprep.subr.mxu0 0.0
    %3413 = vmatpush1.msra.mxu0 0.0
    %3414 = vmatprep.subr.mxu0 0.0
    %3415 = vmatpush1.msra.mxu0 0.0
    %3416 = vmatprep.subr.mxu0 0.0
    %3417 = vmatpush1.msra.mxu0 0.0
    %3418 = vmatprep.subr.mxu0 0.0
    %3419 = vmatpush1.msra.mxu0 0.0
    %3420 = vmatprep.subr.mxu0 0.0
    %3421 = vmatpush1.msra.mxu0 0.0
    %3422 = vmatprep.subr.mxu0 0.0
    %3423 = vmatpush1.msra.mxu0 0.0
    %3424 = vmatprep.subr.mxu0 0.0
    %3425 = vmatpush1.msra.mxu0 0.0
    %3426 = vmatprep.subr.mxu0 0.0
    %3427 = vmatpush1.msra.mxu0 0.0
    %3428 = vmatprep.subr.mxu0 0.0
    %3429 = vmatpush1.msra.mxu0 0.0
    %3430 = vmatprep.subr.mxu0 0.0
    %3431 = vmatpush1.msra.mxu0 0.0
    %3432 = vmatprep.subr.mxu0 0.0
    %3433 = vmatpush1.msra.mxu0 0.0
    %3434 = vmatprep.subr.mxu0 0.0
    %3435 = vmatpush1.msra.mxu0 0.0
    %3436 = vmatprep.subr.mxu0 0.0
    %3437 = vmatpush1.msra.mxu0 0.0
    %3438 = vmatprep.subr.mxu0 0.0
    %3439 = vmatpush1.msra.mxu0 0.0
    %3440 = vmatprep.subr.mxu0 0.0
    %3441 = vmatpush1.msra.mxu0 %v3406
    %3442 = vmatprep.subr.mxu0 0.0
    %3443 = vmatpush2.msra.mxu0 0.0
    %3444 = vmatprep.subr.mxu0 0.0
    %3445 = vmatpush2.msra.mxu0 0.0
    %3446 = vmatprep.subr.mxu0 0.0
    %3447 = vmatpush2.msra.mxu0 0.0
    %3448 = vmatprep.subr.mxu0 0.0
    %3449 = vmatpush2.msra.mxu0 0.0
    %3450 = vmatprep.subr.mxu0 0.0
    %3451 = vmatpush2.msra.mxu0 0.0
    %3452 = vmatprep.subr.mxu0 0.0
    %3453 = vmatpush2.msra.mxu0 0.0
    %3454 = vmatprep.subr.mxu0 0.0
    %3455 = vmatpush2.msra.mxu0 0.0
    %3456 = vmatprep.subr.mxu0 0.0
    %3457 = vmatpush2.msra.mxu0 0.0
    %3458 = vmatprep.subr.mxu0 0.0
    %3459 = vmatpush2.msra.mxu0 0.0
    %3460 = vmatprep.subr.mxu0 0.0
    %3461 = vmatpush2.msra.mxu0 0.0
    %3462 = vmatprep.subr.mxu0 0.0
    %3463 = vmatpush2.msra.mxu0 0.0
    %3464 = vmatprep.subr.mxu0 0.0
    %3465 = vmatpush2.msra.mxu0 0.0
    %3466 = vmatprep.subr.mxu0 0.0
    %3467 = vmatpush2.msra.mxu0 0.0
    %3468 = vmatprep.subr.mxu0 0.0
    %3469 = vmatpush2.msra.mxu0 0.0
    %3470 = vmatprep.subr.mxu0 0.0
    %3471 = vmatpush2.msra.mxu0 0.0
    %3472 = vmatprep.subr.mxu0 0.0
    %3473 = vmatpush2.msra.mxu0 0.0
    %3474 = vmatprep.mubr.f32.mxu0 0.0
    %3475 = vmatmul.mubr.f32.gmra.mxu0 %v3408
    %v3476 = vpop.f32.mrf.mxu0
    %v3477 = vadd.f32 0.0, %v3476
    %v3478 = vpop.f32.mrf.mxu0
    %3479 = vdwg.mxu0
    %v3480 = vpack.c.bf16 %v2633, %v2633
    %v3482 = vsel %vm2591, %v3480, 0
    %3484 = vmatprep.subr.bf16.mxu0 0
    %3485 = vmatpush1.bf16.msra.mxu0 0
    %3486 = vmatprep.subr.bf16.mxu0 0
    %3487 = vmatpush1.bf16.msra.mxu0 0
    %3488 = vmatprep.subr.bf16.mxu0 0
    %3489 = vmatpush1.bf16.msra.mxu0 0
    %3490 = vmatprep.subr.bf16.mxu0 0
    %3491 = vmatpush1.bf16.msra.mxu0 0
    %3492 = vmatprep.subr.bf16.mxu0 0
    %3493 = vmatpush1.bf16.msra.mxu0 0
    %3494 = vmatprep.subr.bf16.mxu0 0
    %3495 = vmatpush1.bf16.msra.mxu0 0
    %3496 = vmatprep.subr.bf16.mxu0 0
    %3497 = vmatpush1.bf16.msra.mxu0 0
    %3498 = vmatprep.subr.bf16.mxu0 0
    %3499 = vmatpush1.bf16.msra.mxu0 %v3482
    %3500 = vmatprep.subr.bf16.mxu0 0
    %3501 = vmatpush2.bf16.msra.mxu0 0
    %3502 = vmatprep.subr.bf16.mxu0 0
    %3503 = vmatpush2.bf16.msra.mxu0 0
    %3504 = vmatprep.subr.bf16.mxu0 0
    %3505 = vmatpush2.bf16.msra.mxu0 0
    %3506 = vmatprep.subr.bf16.mxu0 0
    %3507 = vmatpush2.bf16.msra.mxu0 0
    %3508 = vmatprep.subr.bf16.mxu0 0
    %3509 = vmatpush2.bf16.msra.mxu0 0
    %3510 = vmatprep.subr.bf16.mxu0 0
    %3511 = vmatpush2.bf16.msra.mxu0 0
    %3512 = vmatprep.subr.bf16.mxu0 0
    %3513 = vmatpush2.bf16.msra.mxu0 0
    %3514 = vmatprep.subr.bf16.mxu0 0
    %3515 = vmatpush2.bf16.msra.mxu0 0
    %3516 = vmatprep.mubr.bf16.mxu0 0
    %3517 = vmatmul.mubr.bf16.gmra.mxu0 %v2660
    %v3518 = vpop.f32.mrf.mxu0
    %v3519 = vadd.f32 %v2656, %v3518
    %v3520 = vpop.f32.mrf.mxu0
    %v3521 = vpop.f32.mrf.mxu0
    %v3522 = vpop.f32.mrf.mxu0
    %3523 = vdwg.mxu0
    %v3524 = vmax.f32 %v3519, 0.0
    %v3525 = vpack.c.bf16 %v3524, %v3524
    %v3527 = vsel %vm2591, %v3525, 0
    %3529 = vmatprep.subr.bf16.mxu0 0
    %3530 = vmatpush1.bf16.msra.mxu0 0
    %3531 = vmatprep.subr.bf16.mxu0 0
    %3532 = vmatpush1.bf16.msra.mxu0 0
    %3533 = vmatprep.subr.bf16.mxu0 0
    %3534 = vmatpush1.bf16.msra.mxu0 0
    %3535 = vmatprep.subr.bf16.mxu0 0
    %3536 = vmatpush1.bf16.msra.mxu0 0
    %3537 = vmatprep.subr.bf16.mxu0 0
    %3538 = vmatpush1.bf16.msra.mxu0 0
    %3539 = vmatprep.subr.bf16.mxu0 0
    %3540 = vmatpush1.bf16.msra.mxu0 0
    %3541 = vmatprep.subr.bf16.mxu0 0
    %3542 = vmatpush1.bf16.msra.mxu0 0
    %3543 = vmatprep.subr.bf16.mxu0 0
    %3544 = vmatpush1.bf16.msra.mxu0 %v3527
    %3545 = vmatprep.subr.bf16.mxu0 0
    %3546 = vmatpush2.bf16.msra.mxu0 0
    %3547 = vmatprep.subr.bf16.mxu0 0
    %3548 = vmatpush2.bf16.msra.mxu0 0
    %3549 = vmatprep.subr.bf16.mxu0 0
    %3550 = vmatpush2.bf16.msra.mxu0 0
    %3551 = vmatprep.subr.bf16.mxu0 0
    %3552 = vmatpush2.bf16.msra.mxu0 0
    %3553 = vmatprep.subr.bf16.mxu0 0
    %3554 = vmatpush2.bf16.msra.mxu0 0
    %3555 = vmatprep.subr.bf16.mxu0 0
    %3556 = vmatpush2.bf16.msra.mxu0 0
    %3557 = vmatprep.subr.bf16.mxu0 0
    %3558 = vmatpush2.bf16.msra.mxu0 0
    %3559 = vmatprep.subr.bf16.mxu0 0
    %3560 = vmatpush2.bf16.msra.mxu0 0
    %3561 = vmatprep.mubr.bf16.mxu0 0
    %3562 = vmatmul.mubr.bf16.gmra.mxu0 %v2731
    %v3563 = vpop.f32.mrf.mxu0
    %v3564 = vadd.f32 0.0, %v3563
    %v3565 = vpop.f32.mrf.mxu0
    %v3566 = vpop.f32.mrf.mxu0
    %v3567 = vadd.f32 0.0, %v3566
    %v3568 = vpop.f32.mrf.mxu0
    %3569 = vmatprep.mubr.bf16.mxu0 0
    %3570 = vmatmul.mubr.bf16.gmra.mxu0 %v2734
    %v3571 = vpop.f32.mrf.mxu0
    %v3572 = vadd.f32 0.0, %v3571
    %v3573 = vpop.f32.mrf.mxu0
    %v3574 = vpop.f32.mrf.mxu0
    %v3575 = vadd.f32 0.0, %v3574
    %v3576 = vpop.f32.mrf.mxu0
    %3577 = vmatprep.mubr.bf16.mxu0 0
    %3578 = vmatmul.mubr.bf16.gmra.mxu0 %v2737
    %v3579 = vpop.f32.mrf.mxu0
    %v3580 = vadd.f32 0.0, %v3579
    %v3581 = vpop.f32.mrf.mxu0
    %v3582 = vpop.f32.mrf.mxu0
    %v3583 = vadd.f32 0.0, %v3582
    %v3584 = vpop.f32.mrf.mxu0
    %3585 = vmatprep.mubr.bf16.mxu0 0
    %3586 = vmatmul.mubr.bf16.gmra.mxu0 %v2740
    %v3587 = vpop.f32.mrf.mxu0
    %v3588 = vadd.f32 0.0, %v3587
    %v3589 = vpop.f32.mrf.mxu0
    %v3590 = vpop.f32.mrf.mxu0
    %v3591 = vadd.f32 0.0, %v3590
    %v3592 = vpop.f32.mrf.mxu0
    %3593 = vmatprep.mubr.bf16.mxu0 0
    %3594 = vmatmul.mubr.bf16.gmra.mxu0 %v2743
    %v3595 = vpop.f32.mrf.mxu0
    %v3596 = vadd.f32 0.0, %v3595
    %v3597 = vpop.f32.mrf.mxu0
    %v3598 = vpop.f32.mrf.mxu0
    %v3599 = vpop.f32.mrf.mxu0
    %3600 = vdwg.mxu0
    %v3601 = vpack.c.bf16 %v3567, %v3564
    %v3602 = vpack.c.bf16 %v3575, %v3572
    %v3603 = vpack.c.bf16 %v3583, %v3580
    %v3604 = vpack.c.bf16 %v3591, %v3588
    %v3605 = vpack.c.bf16 %v3596, %v3596
    %v3607 = vsel %vm2587, %v3601, 0
    %3609 = vmatprep.subr.bf16.mxu0 0
    %3610 = vmatpush1.bf16.msra.mxu0 0
    %3611 = vmatprep.subr.bf16.mxu0 0
    %3612 = vmatpush1.bf16.msra.mxu0 0
    %3613 = vmatprep.subr.bf16.mxu0 0
    %3614 = vmatpush1.bf16.msra.mxu0 0
    %3615 = vmatprep.subr.bf16.mxu0 0
    %3616 = vmatpush1.bf16.msra.mxu0 0
    %3617 = vmatprep.subr.bf16.mxu0 0
    %3618 = vmatpush1.bf16.msra.mxu0 0
    %3619 = vmatprep.subr.bf16.mxu0 0
    %3620 = vmatpush1.bf16.msra.mxu0 0
    %3621 = vmatprep.subr.bf16.mxu0 0
    %3622 = vmatpush1.bf16.msra.mxu0 %v2844
    %3623 = vmatprep.subr.bf16.mxu0 0
    %3624 = vmatpush1.bf16.msra.mxu0 %v2837
    %3625 = vmatprep.subr.bf16.mxu0 0
    %3626 = vmatpush2.bf16.msra.mxu0 0
    %3627 = vmatprep.subr.bf16.mxu0 0
    %3628 = vmatpush2.bf16.msra.mxu0 0
    %3629 = vmatprep.subr.bf16.mxu0 0
    %3630 = vmatpush2.bf16.msra.mxu0 0
    %3631 = vmatprep.subr.bf16.mxu0 0
    %3632 = vmatpush2.bf16.msra.mxu0 0
    %3633 = vmatprep.subr.bf16.mxu0 0
    %3634 = vmatpush2.bf16.msra.mxu0 0
    %3635 = vmatprep.subr.bf16.mxu0 0
    %3636 = vmatpush2.bf16.msra.mxu0 0
    %3637 = vmatprep.subr.bf16.mxu0 0
    %3638 = vmatpush2.bf16.msra.mxu0 0
    %3639 = vmatprep.subr.bf16.mxu0 0
    %3640 = vmatpush2.bf16.msra.mxu0 0
    %3641 = vmatprep.mubr.bf16.mxu0 0
    %3642 = vmatmul.mubr.bf16.gmra.mxu0 %v3607
    %v3643 = vpop.f32.mrf.mxu0
    %v3644 = vadd.f32 0.0, %v3643
    %v3645 = vpop.f32.mrf.mxu0
    %v3646 = vpop.f32.mrf.mxu0
    %v3647 = vpop.f32.mrf.mxu0
    %3648 = vdwg.mxu0
    %v3649 = vadd.f32 %v2649, %v3644
    %v3651 = vrot.slane %v3601, 4
    %v3653 = vsel %vm2587, %v3651, 0
    %3655 = vmatprep.subr.bf16.mxu0 0
    %3656 = vmatpush1.bf16.msra.mxu0 0
    %3657 = vmatprep.subr.bf16.mxu0 0
    %3658 = vmatpush1.bf16.msra.mxu0 0
    %3659 = vmatprep.subr.bf16.mxu0 0
    %3660 = vmatpush1.bf16.msra.mxu0 0
    %3661 = vmatprep.subr.bf16.mxu0 0
    %3662 = vmatpush1.bf16.msra.mxu0 0
    %3663 = vmatprep.subr.bf16.mxu0 0
    %3664 = vmatpush1.bf16.msra.mxu0 0
    %3665 = vmatprep.subr.bf16.mxu0 0
    %3666 = vmatpush1.bf16.msra.mxu0 0
    %3667 = vmatprep.subr.bf16.mxu0 0
    %3668 = vmatpush1.bf16.msra.mxu0 %v2909
    %3669 = vmatprep.subr.bf16.mxu0 0
    %3670 = vmatpush1.bf16.msra.mxu0 %v2902
    %3671 = vmatprep.subr.bf16.mxu0 0
    %3672 = vmatpush2.bf16.msra.mxu0 0
    %3673 = vmatprep.subr.bf16.mxu0 0
    %3674 = vmatpush2.bf16.msra.mxu0 0
    %3675 = vmatprep.subr.bf16.mxu0 0
    %3676 = vmatpush2.bf16.msra.mxu0 0
    %3677 = vmatprep.subr.bf16.mxu0 0
    %3678 = vmatpush2.bf16.msra.mxu0 0
    %3679 = vmatprep.subr.bf16.mxu0 0
    %3680 = vmatpush2.bf16.msra.mxu0 0
    %3681 = vmatprep.subr.bf16.mxu0 0
    %3682 = vmatpush2.bf16.msra.mxu0 0
    %3683 = vmatprep.subr.bf16.mxu0 0
    %3684 = vmatpush2.bf16.msra.mxu0 0
    %3685 = vmatprep.subr.bf16.mxu0 0
    %3686 = vmatpush2.bf16.msra.mxu0 0
    %3687 = vmatprep.mubr.bf16.mxu0 0
    %3688 = vmatmul.mubr.bf16.gmra.mxu0 %v3653
    %v3689 = vpop.f32.mrf.mxu0
    %v3690 = vadd.f32 0.0, %v3689
    %v3691 = vpop.f32.mrf.mxu0
    %v3692 = vpop.f32.mrf.mxu0
    %v3693 = vpop.f32.mrf.mxu0
    %3694 = vdwg.mxu0
    %v3695 = vadd.f32 %v3649, %v3690
    %v3697 = vsel %vm2587, %v3602, 0
    %3699 = vmatprep.subr.bf16.mxu0 0
    %3700 = vmatpush1.bf16.msra.mxu0 0
    %3701 = vmatprep.subr.bf16.mxu0 0
    %3702 = vmatpush1.bf16.msra.mxu0 0
    %3703 = vmatprep.subr.bf16.mxu0 0
    %3704 = vmatpush1.bf16.msra.mxu0 0
    %3705 = vmatprep.subr.bf16.mxu0 0
    %3706 = vmatpush1.bf16.msra.mxu0 0
    %3707 = vmatprep.subr.bf16.mxu0 0
    %3708 = vmatpush1.bf16.msra.mxu0 0
    %3709 = vmatprep.subr.bf16.mxu0 0
    %3710 = vmatpush1.bf16.msra.mxu0 0
    %3711 = vmatprep.subr.bf16.mxu0 0
    %3712 = vmatpush1.bf16.msra.mxu0 %v2972
    %3713 = vmatprep.subr.bf16.mxu0 0
    %3714 = vmatpush1.bf16.msra.mxu0 %v2965
    %3715 = vmatprep.subr.bf16.mxu0 0
    %3716 = vmatpush2.bf16.msra.mxu0 0
    %3717 = vmatprep.subr.bf16.mxu0 0
    %3718 = vmatpush2.bf16.msra.mxu0 0
    %3719 = vmatprep.subr.bf16.mxu0 0
    %3720 = vmatpush2.bf16.msra.mxu0 0
    %3721 = vmatprep.subr.bf16.mxu0 0
    %3722 = vmatpush2.bf16.msra.mxu0 0
    %3723 = vmatprep.subr.bf16.mxu0 0
    %3724 = vmatpush2.bf16.msra.mxu0 0
    %3725 = vmatprep.subr.bf16.mxu0 0
    %3726 = vmatpush2.bf16.msra.mxu0 0
    %3727 = vmatprep.subr.bf16.mxu0 0
    %3728 = vmatpush2.bf16.msra.mxu0 0
    %3729 = vmatprep.subr.bf16.mxu0 0
    %3730 = vmatpush2.bf16.msra.mxu0 0
    %3731 = vmatprep.mubr.bf16.mxu0 0
    %3732 = vmatmul.mubr.bf16.gmra.mxu0 %v3697
    %v3733 = vpop.f32.mrf.mxu0
    %v3734 = vadd.f32 0.0, %v3733
    %v3735 = vpop.f32.mrf.mxu0
    %v3736 = vpop.f32.mrf.mxu0
    %v3737 = vpop.f32.mrf.mxu0
    %3738 = vdwg.mxu0
    %v3739 = vadd.f32 %v3695, %v3734
    %v3741 = vrot.slane %v3602, 4
    %v3743 = vsel %vm2587, %v3741, 0
    %3745 = vmatprep.subr.bf16.mxu0 0
    %3746 = vmatpush1.bf16.msra.mxu0 0
    %3747 = vmatprep.subr.bf16.mxu0 0
    %3748 = vmatpush1.bf16.msra.mxu0 0
    %3749 = vmatprep.subr.bf16.mxu0 0
    %3750 = vmatpush1.bf16.msra.mxu0 0
    %3751 = vmatprep.subr.bf16.mxu0 0
    %3752 = vmatpush1.bf16.msra.mxu0 0
    %3753 = vmatprep.subr.bf16.mxu0 0
    %3754 = vmatpush1.bf16.msra.mxu0 0
    %3755 = vmatprep.subr.bf16.mxu0 0
    %3756 = vmatpush1.bf16.msra.mxu0 0
    %3757 = vmatprep.subr.bf16.mxu0 0
    %3758 = vmatpush1.bf16.msra.mxu0 %v3037
    %3759 = vmatprep.subr.bf16.mxu0 0
    %3760 = vmatpush1.bf16.msra.mxu0 %v3030
    %3761 = vmatprep.subr.bf16.mxu0 0
    %3762 = vmatpush2.bf16.msra.mxu0 0
    %3763 = vmatprep.subr.bf16.mxu0 0
    %3764 = vmatpush2.bf16.msra.mxu0 0
    %3765 = vmatprep.subr.bf16.mxu0 0
    %3766 = vmatpush2.bf16.msra.mxu0 0
    %3767 = vmatprep.subr.bf16.mxu0 0
    %3768 = vmatpush2.bf16.msra.mxu0 0
    %3769 = vmatprep.subr.bf16.mxu0 0
    %3770 = vmatpush2.bf16.msra.mxu0 0
    %3771 = vmatprep.subr.bf16.mxu0 0
    %3772 = vmatpush2.bf16.msra.mxu0 0
    %3773 = vmatprep.subr.bf16.mxu0 0
    %3774 = vmatpush2.bf16.msra.mxu0 0
    %3775 = vmatprep.subr.bf16.mxu0 0
    %3776 = vmatpush2.bf16.msra.mxu0 0
    %3777 = vmatprep.mubr.bf16.mxu0 0
    %3778 = vmatmul.mubr.bf16.gmra.mxu0 %v3743
    %v3779 = vpop.f32.mrf.mxu0
    %v3780 = vadd.f32 0.0, %v3779
    %v3781 = vpop.f32.mrf.mxu0
    %v3782 = vpop.f32.mrf.mxu0
    %v3783 = vpop.f32.mrf.mxu0
    %3784 = vdwg.mxu0
    %v3785 = vadd.f32 %v3739, %v3780
    %v3787 = vsel %vm2587, %v3603, 0
    %3789 = vmatprep.subr.bf16.mxu0 0
    %3790 = vmatpush1.bf16.msra.mxu0 0
    %3791 = vmatprep.subr.bf16.mxu0 0
    %3792 = vmatpush1.bf16.msra.mxu0 0
    %3793 = vmatprep.subr.bf16.mxu0 0
    %3794 = vmatpush1.bf16.msra.mxu0 0
    %3795 = vmatprep.subr.bf16.mxu0 0
    %3796 = vmatpush1.bf16.msra.mxu0 0
    %3797 = vmatprep.subr.bf16.mxu0 0
    %3798 = vmatpush1.bf16.msra.mxu0 0
    %3799 = vmatprep.subr.bf16.mxu0 0
    %3800 = vmatpush1.bf16.msra.mxu0 0
    %3801 = vmatprep.subr.bf16.mxu0 0
    %3802 = vmatpush1.bf16.msra.mxu0 %v3100
    %3803 = vmatprep.subr.bf16.mxu0 0
    %3804 = vmatpush1.bf16.msra.mxu0 %v3093
    %3805 = vmatprep.subr.bf16.mxu0 0
    %3806 = vmatpush2.bf16.msra.mxu0 0
    %3807 = vmatprep.subr.bf16.mxu0 0
    %3808 = vmatpush2.bf16.msra.mxu0 0
    %3809 = vmatprep.subr.bf16.mxu0 0
    %3810 = vmatpush2.bf16.msra.mxu0 0
    %3811 = vmatprep.subr.bf16.mxu0 0
    %3812 = vmatpush2.bf16.msra.mxu0 0
    %3813 = vmatprep.subr.bf16.mxu0 0
    %3814 = vmatpush2.bf16.msra.mxu0 0
    %3815 = vmatprep.subr.bf16.mxu0 0
    %3816 = vmatpush2.bf16.msra.mxu0 0
    %3817 = vmatprep.subr.bf16.mxu0 0
    %3818 = vmatpush2.bf16.msra.mxu0 0
    %3819 = vmatprep.subr.bf16.mxu0 0
    %3820 = vmatpush2.bf16.msra.mxu0 0
    %3821 = vmatprep.mubr.bf16.mxu0 0
    %3822 = vmatmul.mubr.bf16.gmra.mxu0 %v3787
    %v3823 = vpop.f32.mrf.mxu0
    %v3824 = vadd.f32 0.0, %v3823
    %v3825 = vpop.f32.mrf.mxu0
    %v3826 = vpop.f32.mrf.mxu0
    %v3827 = vpop.f32.mrf.mxu0
    %3828 = vdwg.mxu0
    %v3829 = vadd.f32 %v3785, %v3824
    %v3831 = vrot.slane %v3603, 4
    %v3833 = vsel %vm2587, %v3831, 0
    %3835 = vmatprep.subr.bf16.mxu0 0
    %3836 = vmatpush1.bf16.msra.mxu0 0
    %3837 = vmatprep.subr.bf16.mxu0 0
    %3838 = vmatpush1.bf16.msra.mxu0 0
    %3839 = vmatprep.subr.bf16.mxu0 0
    %3840 = vmatpush1.bf16.msra.mxu0 0
    %3841 = vmatprep.subr.bf16.mxu0 0
    %3842 = vmatpush1.bf16.msra.mxu0 0
    %3843 = vmatprep.subr.bf16.mxu0 0
    %3844 = vmatpush1.bf16.msra.mxu0 0
    %3845 = vmatprep.subr.bf16.mxu0 0
    %3846 = vmatpush1.bf16.msra.mxu0 0
    %3847 = vmatprep.subr.bf16.mxu0 0
    %3848 = vmatpush1.bf16.msra.mxu0 %v3165
    %3849 = vmatprep.subr.bf16.mxu0 0
    %3850 = vmatpush1.bf16.msra.mxu0 %v3158
    %3851 = vmatprep.subr.bf16.mxu0 0
    %3852 = vmatpush2.bf16.msra.mxu0 0
    %3853 = vmatprep.subr.bf16.mxu0 0
    %3854 = vmatpush2.bf16.msra.mxu0 0
    %3855 = vmatprep.subr.bf16.mxu0 0
    %3856 = vmatpush2.bf16.msra.mxu0 0
    %3857 = vmatprep.subr.bf16.mxu0 0
    %3858 = vmatpush2.bf16.msra.mxu0 0
    %3859 = vmatprep.subr.bf16.mxu0 0
    %3860 = vmatpush2.bf16.msra.mxu0 0
    %3861 = vmatprep.subr.bf16.mxu0 0
    %3862 = vmatpush2.bf16.msra.mxu0 0
    %3863 = vmatprep.subr.bf16.mxu0 0
    %3864 = vmatpush2.bf16.msra.mxu0 0
    %3865 = vmatprep.subr.bf16.mxu0 0
    %3866 = vmatpush2.bf16.msra.mxu0 0
    %3867 = vmatprep.mubr.bf16.mxu0 0
    %3868 = vmatmul.mubr.bf16.gmra.mxu0 %v3833
    %v3869 = vpop.f32.mrf.mxu0
    %v3870 = vadd.f32 0.0, %v3869
    %v3871 = vpop.f32.mrf.mxu0
    %v3872 = vpop.f32.mrf.mxu0
    %v3873 = vpop.f32.mrf.mxu0
    %3874 = vdwg.mxu0
    %v3875 = vadd.f32 %v3829, %v3870
    %v3877 = vsel %vm2587, %v3604, 0
    %3879 = vmatprep.subr.bf16.mxu0 0
    %3880 = vmatpush1.bf16.msra.mxu0 0
    %3881 = vmatprep.subr.bf16.mxu0 0
    %3882 = vmatpush1.bf16.msra.mxu0 0
    %3883 = vmatprep.subr.bf16.mxu0 0
    %3884 = vmatpush1.bf16.msra.mxu0 0
    %3885 = vmatprep.subr.bf16.mxu0 0
    %3886 = vmatpush1.bf16.msra.mxu0 0
    %3887 = vmatprep.subr.bf16.mxu0 0
    %3888 = vmatpush1.bf16.msra.mxu0 0
    %3889 = vmatprep.subr.bf16.mxu0 0
    %3890 = vmatpush1.bf16.msra.mxu0 0
    %3891 = vmatprep.subr.bf16.mxu0 0
    %3892 = vmatpush1.bf16.msra.mxu0 %v3228
    %3893 = vmatprep.subr.bf16.mxu0 0
    %3894 = vmatpush1.bf16.msra.mxu0 %v3221
    %3895 = vmatprep.subr.bf16.mxu0 0
    %3896 = vmatpush2.bf16.msra.mxu0 0
    %3897 = vmatprep.subr.bf16.mxu0 0
    %3898 = vmatpush2.bf16.msra.mxu0 0
    %3899 = vmatprep.subr.bf16.mxu0 0
    %3900 = vmatpush2.bf16.msra.mxu0 0
    %3901 = vmatprep.subr.bf16.mxu0 0
    %3902 = vmatpush2.bf16.msra.mxu0 0
    %3903 = vmatprep.subr.bf16.mxu0 0
    %3904 = vmatpush2.bf16.msra.mxu0 0
    %3905 = vmatprep.subr.bf16.mxu0 0
    %3906 = vmatpush2.bf16.msra.mxu0 0
    %3907 = vmatprep.subr.bf16.mxu0 0
    %3908 = vmatpush2.bf16.msra.mxu0 0
    %3909 = vmatprep.subr.bf16.mxu0 0
    %3910 = vmatpush2.bf16.msra.mxu0 0
    %3911 = vmatprep.mubr.bf16.mxu0 0
    %3912 = vmatmul.mubr.bf16.gmra.mxu0 %v3877
    %v3913 = vpop.f32.mrf.mxu0
    %v3914 = vadd.f32 0.0, %v3913
    %v3915 = vpop.f32.mrf.mxu0
    %v3916 = vpop.f32.mrf.mxu0
    %v3917 = vpop.f32.mrf.mxu0
    %3918 = vdwg.mxu0
    %v3919 = vadd.f32 %v3875, %v3914
    %v3921 = vrot.slane %v3604, 4
    %v3923 = vsel %vm2587, %v3921, 0
    %3925 = vmatprep.subr.bf16.mxu0 0
    %3926 = vmatpush1.bf16.msra.mxu0 0
    %3927 = vmatprep.subr.bf16.mxu0 0
    %3928 = vmatpush1.bf16.msra.mxu0 0
    %3929 = vmatprep.subr.bf16.mxu0 0
    %3930 = vmatpush1.bf16.msra.mxu0 0
    %3931 = vmatprep.subr.bf16.mxu0 0
    %3932 = vmatpush1.bf16.msra.mxu0 0
    %3933 = vmatprep.subr.bf16.mxu0 0
    %3934 = vmatpush1.bf16.msra.mxu0 0
    %3935 = vmatprep.subr.bf16.mxu0 0
    %3936 = vmatpush1.bf16.msra.mxu0 0
    %3937 = vmatprep.subr.bf16.mxu0 0
    %3938 = vmatpush1.bf16.msra.mxu0 %v3293
    %3939 = vmatprep.subr.bf16.mxu0 0
    %3940 = vmatpush1.bf16.msra.mxu0 %v3286
    %3941 = vmatprep.subr.bf16.mxu0 0
    %3942 = vmatpush2.bf16.msra.mxu0 0
    %3943 = vmatprep.subr.bf16.mxu0 0
    %3944 = vmatpush2.bf16.msra.mxu0 0
    %3945 = vmatprep.subr.bf16.mxu0 0
    %3946 = vmatpush2.bf16.msra.mxu0 0
    %3947 = vmatprep.subr.bf16.mxu0 0
    %3948 = vmatpush2.bf16.msra.mxu0 0
    %3949 = vmatprep.subr.bf16.mxu0 0
    %3950 = vmatpush2.bf16.msra.mxu0 0
    %3951 = vmatprep.subr.bf16.mxu0 0
    %3952 = vmatpush2.bf16.msra.mxu0 0
    %3953 = vmatprep.subr.bf16.mxu0 0
    %3954 = vmatpush2.bf16.msra.mxu0 0
    %3955 = vmatprep.subr.bf16.mxu0 0
    %3956 = vmatpush2.bf16.msra.mxu0 0
    %3957 = vmatprep.mubr.bf16.mxu0 0
    %3958 = vmatmul.mubr.bf16.gmra.mxu0 %v3923
    %v3959 = vpop.f32.mrf.mxu0
    %v3960 = vadd.f32 0.0, %v3959
    %v3961 = vpop.f32.mrf.mxu0
    %v3962 = vpop.f32.mrf.mxu0
    %v3963 = vpop.f32.mrf.mxu0
    %3964 = vdwg.mxu0
    %v3965 = vadd.f32 %v3919, %v3960
    %v3967 = vsel %vm2587, %v3605, 0
    %3969 = vmatprep.subr.bf16.mxu0 0
    %3970 = vmatpush1.bf16.msra.mxu0 0
    %3971 = vmatprep.subr.bf16.mxu0 0
    %3972 = vmatpush1.bf16.msra.mxu0 0
    %3973 = vmatprep.subr.bf16.mxu0 0
    %3974 = vmatpush1.bf16.msra.mxu0 0
    %3975 = vmatprep.subr.bf16.mxu0 0
    %3976 = vmatpush1.bf16.msra.mxu0 0
    %3977 = vmatprep.subr.bf16.mxu0 0
    %3978 = vmatpush1.bf16.msra.mxu0 0
    %3979 = vmatprep.subr.bf16.mxu0 0
    %3980 = vmatpush1.bf16.msra.mxu0 0
    %3981 = vmatprep.subr.bf16.mxu0 0
    %3982 = vmatpush1.bf16.msra.mxu0 %v3356
    %3983 = vmatprep.subr.bf16.mxu0 0
    %3984 = vmatpush1.bf16.msra.mxu0 %v3349
    %3985 = vmatprep.subr.bf16.mxu0 0
    %3986 = vmatpush2.bf16.msra.mxu0 0
    %3987 = vmatprep.subr.bf16.mxu0 0
    %3988 = vmatpush2.bf16.msra.mxu0 0
    %3989 = vmatprep.subr.bf16.mxu0 0
    %3990 = vmatpush2.bf16.msra.mxu0 0
    %3991 = vmatprep.subr.bf16.mxu0 0
    %3992 = vmatpush2.bf16.msra.mxu0 0
    %3993 = vmatprep.subr.bf16.mxu0 0
    %3994 = vmatpush2.bf16.msra.mxu0 0
    %3995 = vmatprep.subr.bf16.mxu0 0
    %3996 = vmatpush2.bf16.msra.mxu0 0
    %3997 = vmatprep.subr.bf16.mxu0 0
    %3998 = vmatpush2.bf16.msra.mxu0 0
    %3999 = vmatprep.subr.bf16.mxu0 0
    %4000 = vmatpush2.bf16.msra.mxu0 0
    %4001 = vmatprep.mubr.bf16.mxu0 0
    %4002 = vmatmul.mubr.bf16.gmra.mxu0 %v3967
    %v4003 = vpop.f32.mrf.mxu0
    %v4004 = vadd.f32 0.0, %v4003
    %v4005 = vpop.f32.mrf.mxu0
    %v4006 = vpop.f32.mrf.mxu0
    %v4007 = vpop.f32.mrf.mxu0
    %4008 = vdwg.mxu0
    %v4009 = vadd.f32 %v3965, %v4004
    %v4010 = vmul.f32 %v4009, %v3402
    %4011 = vadd.xlane.f32.xlu0 %v4010
    %v4012 = vpop.xlane.xlu0 %4011
    %4013 = vmatprep.subr.mxu0 0.0
    %4014 = vmatpush1.msra.mxu0 0.0
    %4015 = vmatprep.subr.mxu0 0.0
    %4016 = vmatpush1.msra.mxu0 0.0
    %4017 = vmatprep.subr.mxu0 0.0
    %4018 = vmatpush1.msra.mxu0 0.0
    %4019 = vmatprep.subr.mxu0 0.0
    %4020 = vmatpush1.msra.mxu0 0.0
    %4021 = vmatprep.subr.mxu0 0.0
    %4022 = vmatpush1.msra.mxu0 0.0
    %4023 = vmatprep.subr.mxu0 0.0
    %4024 = vmatpush1.msra.mxu0 0.0
    %4025 = vmatprep.subr.mxu0 0.0
    %4026 = vmatpush1.msra.mxu0 0.0
    %4027 = vmatprep.subr.mxu0 0.0
    %4028 = vmatpush1.msra.mxu0 0.0
    %4029 = vmatprep.subr.mxu0 0.0
    %4030 = vmatpush1.msra.mxu0 0.0
    %4031 = vmatprep.subr.mxu0 0.0
    %4032 = vmatpush1.msra.mxu0 0.0
    %4033 = vmatprep.subr.mxu0 0.0
    %4034 = vmatpush1.msra.mxu0 0.0
    %4035 = vmatprep.subr.mxu0 0.0
    %4036 = vmatpush1.msra.mxu0 0.0
    %4037 = vmatprep.subr.mxu0 0.0
    %4038 = vmatpush1.msra.mxu0 0.0
    %4039 = vmatprep.subr.mxu0 0.0
    %4040 = vmatpush1.msra.mxu0 0.0
    %4041 = vmatprep.subr.mxu0 0.0
    %4042 = vmatpush1.msra.mxu0 0.0
    %4043 = vmatprep.subr.mxu0 0.0
    %4044 = vmatpush1.msra.mxu0 %v4012
    %4045 = vmatprep.subr.mxu0 0.0
    %4046 = vmatpush2.msra.mxu0 0.0
    %4047 = vmatprep.subr.mxu0 0.0
    %4048 = vmatpush2.msra.mxu0 0.0
    %4049 = vmatprep.subr.mxu0 0.0
    %4050 = vmatpush2.msra.mxu0 0.0
    %4051 = vmatprep.subr.mxu0 0.0
    %4052 = vmatpush2.msra.mxu0 0.0
    %4053 = vmatprep.subr.mxu0 0.0
    %4054 = vmatpush2.msra.mxu0 0.0
    %4055 = vmatprep.subr.mxu0 0.0
    %4056 = vmatpush2.msra.mxu0 0.0
    %4057 = vmatprep.subr.mxu0 0.0
    %4058 = vmatpush2.msra.mxu0 0.0
    %4059 = vmatprep.subr.mxu0 0.0
    %4060 = vmatpush2.msra.mxu0 0.0
    %4061 = vmatprep.subr.mxu0 0.0
    %4062 = vmatpush2.msra.mxu0 0.0
    %4063 = vmatprep.subr.mxu0 0.0
    %4064 = vmatpush2.msra.mxu0 0.0
    %4065 = vmatprep.subr.mxu0 0.0
    %4066 = vmatpush2.msra.mxu0 0.0
    %4067 = vmatprep.subr.mxu0 0.0
    %4068 = vmatpush2.msra.mxu0 0.0
    %4069 = vmatprep.subr.mxu0 0.0
    %4070 = vmatpush2.msra.mxu0 0.0
    %4071 = vmatprep.subr.mxu0 0.0
    %4072 = vmatpush2.msra.mxu0 0.0
    %4073 = vmatprep.subr.mxu0 0.0
    %4074 = vmatpush2.msra.mxu0 0.0
    %4075 = vmatprep.subr.mxu0 0.0
    %4076 = vmatpush2.msra.mxu0 0.0
    %4077 = vmatprep.mubr.f32.mxu0 0.0
    %4078 = vmatmul.mubr.f32.gmra.mxu0 %v3408
    %v4079 = vpop.f32.mrf.mxu0
    %v4080 = vadd.f32 0.0, %v4079
    %v4081 = vpop.f32.mrf.mxu0
    %4082 = vdwg.mxu0
    %v4083 = vsub.f32 %v4080, %v3477
    %v4084 = vmul.f32 %v4083, 0.020408163
    %v4085 = vmul.f32 %v4084, 1.442695
    %v4086 = vpow.pop %v4085
    %v4087 = vadd.f32 %v4086, 1.0
    %v4088 = vrcp.pop %v4087
    %4090 = vset.pattern.permute.xlu0 0
    %4091 = vperm.xlu0 %4090, %v4088
    %v4092 = vpop.permute.xlu0 %4091
    %v4094 = vmul.f32 %v4092, %v3398
    %v4095 = vsub.f32 1.0, %v4088
    %4097 = vset.pattern.permute.xlu0 0
    %4098 = vperm.xlu0 %4097, %v4095
    %v4099 = vpop.permute.xlu0 %4098
    %v4101 = vmul.f32 %v4099, %v4009
    %v4102 = vadd.f32 %v4094, %v4101
    %4103 = vst [vmem:[%s15] sm:$0xff] %v4102
    // Predicated region
    $region78: #{fwd.1} parent=1 // pred_check
      _
    $region79: #{fwd.1} parent=1 // pred_check_branch
      %4105 = sbr.rel (0) target = $region81
    $region80: #{fwd.1} parent=1 // pred_region
      _
    $region81: #{fwd.1} parent=1 // pred_fallthru
      _
    // Predicated region
    $region82: #{fwd.1} parent=1 // pred_check
      _
    $region83: #{fwd.1} parent=1 // pred_check_branch
      %4107 = sbr.rel (0) target = $region85
    $region84: #{fwd.1} parent=1 // pred_region
      _
    $region85: #{fwd.1} parent=1 // pred_fallthru
      _
    %4108 = vsyncpa [#allocation3], 1
    %4109 = vsyncpa [#allocation5], 1
    %4110 = vsyncpa [#allocation8], 1

</llo_original>
